<compile_context>
chip_gen: v5e
topology: v5e:2x2
jax: 0.10.0
libtpu: 0.0.40
codegen_flags: <defaults>
</compile_context>

<pallas_src>
import jax
import jax.numpy as jnp
import numpy as np
from jax.experimental import pallas as pl
from jax.experimental.pallas import tpu as pltpu

KSIZE = 7
STRIDE = 3
BN_EPS = 1e-5
CHANNELS = (1, 4, 8, 16, 16)          # Conv1d chain 1 -> 4 -> 8 -> 16 -> 16


# ------------------------------ Pallas kernel ------------------------------ #
def _conv_bn_relu_block(h, sel, wk, bnp, avg, batch):
    """One Conv1d(K=7, stride=3) + BatchNorm1d(train) + ReLU, fully in-register.

    h:    (batch*Cin, L_in)           activation, rows ordered (batch, channel),
                                      time on the lane axis.
    sel:  (Lw, L_out)                 one-hot stride-3 selection, sel[3t, t]=1,
                                      Lw = 3*(L_out-1)+1.
    wk:   (K, batch*Cout, batch*Cin)  per-tap channel-mix weights,
                                      block-diagonal over the batch.
    bnp:  (batch*Cout, 3)             columns = [conv bias, BN gamma, BN beta].
    avg:  (batch*Cout, batch*Cout)    block-identity: sums a per-row statistic
                                      over the batch and broadcasts it back.
    """
    lw, l_out = sel.shape
    # Conv: channel-mix per tap on a k-shifted slice, then one stride-3
    # time-selection matmul (exact -- S is one-hot).
    acc = jnp.dot(wk[0], h[:, 0:lw], preferred_element_type=jnp.float32)
    for k in range(1, KSIZE):
        acc = acc + jnp.dot(wk[k], h[:, k:k + lw],
                            preferred_element_type=jnp.float32)
    z = jnp.dot(acc, sel, preferred_element_type=jnp.float32) + bnp[:, 0:1]

    # BatchNorm1d, training-mode stats per channel over (batch, time).
    inv_n = 1.0 / (batch * l_out)
    row_sum = jnp.sum(z, axis=1, keepdims=True)                      # (B*Co, 1)
    mu = jnp.dot(avg, row_sum, preferred_element_type=jnp.float32) * inv_n
    d = z - mu
    row_ss = jnp.sum(d * d, axis=1, keepdims=True)
    var = jnp.dot(avg, row_ss, preferred_element_type=jnp.float32) * inv_n
    y = bnp[:, 1:2] * d * jax.lax.rsqrt(var + BN_EPS) + bnp[:, 2:3]
    return jnp.maximum(y, 0.0)


def _make_pcconvnet_kernel(batch):
    def kernel(x_ref, *refs):
        o_ref = refs[-1]
        layer_refs = refs[:-1]
        h = x_ref[0]                                     # (batch, L) ; Cin0 == 1
        for l in range(len(layer_refs) // 4):
            s_ref, wk_ref, bnp_ref, avg_ref = layer_refs[4 * l: 4 * l + 4]
            h = _conv_bn_relu_block(h, s_ref[...], wk_ref[0], bnp_ref[0],
                                    avg_ref[...], batch)
        # torch.mean(conv_out, 2): temporal mean fused as the kernel epilogue.
        o_ref[0] = jnp.mean(h, axis=1, keepdims=True)    # (batch*C_last, 1)
    return kernel


# ------------------------------ JAX glue ----------------------------------- #
def _selection_matrix(l_out):
    lw = STRIDE * (l_out - 1) + 1
    s = np.zeros((lw, l_out), dtype=np.float32)
    s[np.arange(l_out) * STRIDE, np.arange(l_out)] = 1.0
    return jnp.asarray(s)


def _bn_avg_matrix(cout, batch):
    return jnp.asarray(np.tile(np.eye(cout, dtype=np.float32), (batch, batch)))


def _prep_tower(params, batch):
    """Per-tower weights -> block-diagonal per-tap matrices + BN columns."""
    eye_b = jnp.eye(batch, dtype=jnp.float32)
    wks, bnps = [], []
    for layer in params["conv_layers"]:
        w = layer["w"].astype(jnp.float32)               # (Cout, Cin, K)
        cout, cin, _ = w.shape
        wk = jnp.einsum("bB,oik->kboBi", eye_b, w)       # (K, B, Cout, B, Cin)
        wks.append(wk.reshape(KSIZE, batch * cout, batch * cin))
        cols = [layer["b"], layer["gamma"], layer["beta"]]
        bnp = jnp.stack([c.astype(jnp.float32) for c in cols], axis=1)  # (Cout,3)
        bnps.append(jnp.tile(bnp, (batch, 1)))                          # (B*Cout,3)
    return wks, bnps


def pcconvnet_forward_stacked(x, tower_params):
    """Run T independent PCConvNet ('CNN') towers fused in one pallas_call.

    x:            (T, B, sig_len) float32
    tower_params: list of T parameter dicts (see _init_pcconvnet)
    returns:      (T, B, 16) float32
    """
    n_towers, batch, sig_len = x.shape
    x = x.astype(jnp.float32)

    # Static layer geometry.
    l_in, l_outs = sig_len, []
    for _ in range(len(CHANNELS) - 1):
        l_out = (l_in - KSIZE) // STRIDE + 1
        l_outs.append(l_out)
        l_in = l_out
    couts = CHANNELS[1:]
    c_last = couts[-1]

    prepped = [_prep_tower(p, batch) for p in tower_params]

    in_args = [x]
    in_specs = [pl.BlockSpec((1, batch, sig_len), lambda t: (t, 0, 0))]
    for l in range(len(couts)):
        sel = _selection_matrix(l_outs[l])               # shared across towers
        wk = jnp.stack([pt[0][l] for pt in prepped])     # (T, K, B*Co, B*Ci)
        bnp = jnp.stack([pt[1][l] for pt in prepped])    # (T, B*Co, 3)
        avg = _bn_avg_matrix(couts[l], batch)            # (B*Co, B*Co), shared
        in_args += [sel, wk, bnp, avg]
        in_specs += [
            pl.BlockSpec(sel.shape, lambda t: (0, 0)),
            pl.BlockSpec((1,) + wk.shape[1:], lambda t: (t, 0, 0, 0)),
            pl.BlockSpec((1,) + bnp.shape[1:], lambda t: (t, 0, 0)),
            pl.BlockSpec(avg.shape, lambda t: (0, 0)),
        ]

    # Advisory cost estimate for the XLA scheduler.
    flops = 0
    for l, (cin, cout) in enumerate(zip(CHANNELS[:-1], couts)):
        lw = STRIDE * (l_outs[l] - 1) + 1
        flops += 2 * KSIZE * (batch * cout) * (batch * cin) * lw  # tap channel-mix
        flops += 2 * (batch * cout) * lw * l_outs[l]              # stride-3 select
        flops += 12 * (batch * cout) * l_outs[l]                  # bias/BN/ReLU
    flops *= n_towers
    bytes_accessed = sum(int(np.prod(a.shape)) * 4 for a in in_args)
    bytes_accessed += n_towers * batch * c_last * 4

    out = pl.pallas_call(
        _make_pcconvnet_kernel(batch),
        out_shape=jax.ShapeDtypeStruct((n_towers, batch * c_last, 1), jnp.float32),
        grid=(n_towers,),
        in_specs=in_specs,
        out_specs=pl.BlockSpec((1, batch * c_last, 1), lambda t: (t, 0, 0)),
        compiler_params=pltpu.CompilerParams(
            dimension_semantics=("parallel",)),  # one tower per TC on v7x
        cost_estimate=pl.CostEstimate(
            flops=int(flops),
            transcendentals=int(n_towers * sum(couts)),
            bytes_accessed=int(bytes_accessed)),
    )(*in_args)
    # Rows are ordered (batch, channel); the final tiny reshape is glue.
    return out.reshape(n_towers, batch, c_last)


@jax.jit
def pcconvnet_forward(x, params):
    """PCConvNet.forward (model_choose='CNN'): (B, sig_len) -> (B, 16)."""
    return pcconvnet_forward_stacked(x[None], [params])[0]


@jax.jit
def joint_embed_net_forward(pitch, score, pc_params, sc_params):
    """Two PCConvNet towers (pitch & score) fused into one kernel launch."""
    out = pcconvnet_forward_stacked(jnp.stack([pitch, score]),
                                    [pc_params, sc_params])
    return out[0], out[1]


# --------------------------- Parameter creation ----------------------------- #
def _init_pcconvnet(key):
    """Deterministic params matching PyTorch default Conv1d / BatchNorm1d init."""
    layers = []
    for cin, cout in zip(CHANNELS[:-1], CHANNELS[1:]):
        key, kw, kb = jax.random.split(key, 3)
        bound = 1.0 / (cin * KSIZE) ** 0.5       # kaiming_uniform(a=sqrt(5)) fan-in
        w = jax.random.uniform(kw, (cout, cin, KSIZE), jnp.float32, -bound, bound)
        b = jax.random.uniform(kb, (cout,), jnp.float32, -bound, bound)
        layers.append(dict(w=w, b=b,
                           gamma=jnp.ones((cout,), jnp.float32),   # BN defaults
                           beta=jnp.zeros((cout,), jnp.float32)))
    return {"conv_layers": layers}


if __name__ == "__main__":
    key = jax.random.PRNGKey(0)
    k_pc, k_sc, k_pitch, k_score = jax.random.split(key, 4)

    pc_params = _init_pcconvnet(k_pc)        # pitch-contour tower
    sc_params = _init_pcconvnet(k_sc)        # score tower

    B, SIG = 2, 1000                         # mode=0: minimum input size 1000
    pitch = jax.random.normal(k_pitch, (B, SIG), jnp.float32)
    score = jax.random.normal(k_score, (B, SIG), jnp.float32)

    # Single-module forward (the PCConvNet spec) ...
    single = pcconvnet_forward(pitch, pc_params)
    # ... and the fused two-tower forward (both towers in one pallas_call).
    pitch_v, score_v = joint_embed_net_forward(pitch, score, pc_params, sc_params)
    jax.block_until_ready((single, pitch_v, score_v))

    assert single.shape == (B, 16)
    assert pitch_v.shape == (B, 16) and score_v.shape == (B, 16)
    assert jnp.all(jnp.isfinite(single))
    assert jnp.all(jnp.isfinite(pitch_v)) and jnp.all(jnp.isfinite(score_v))
    # The T=1 and T=2 paths must agree on the shared tower.
    assert jnp.allclose(single, pitch_v, atol=1e-5, rtol=1e-5)
    print("KERNEL_OK")
</pallas_src>

<mosaic_0001>
module attributes {stable_mosaic.version = 11 : i64} {
  func.func @kernel(%arg0: i32, %arg1: memref<1x2x1000xf32, #tpu.memory_space<vmem>>, %arg2: memref<994x332xf32, #tpu.memory_space<vmem>>, %arg3: memref<1x7x8x2xf32, #tpu.memory_space<vmem>>, %arg4: memref<1x8x3xf32, #tpu.memory_space<vmem>>, %arg5: memref<8x8xf32, #tpu.memory_space<vmem>>, %arg6: memref<325x109xf32, #tpu.memory_space<vmem>>, %arg7: memref<1x7x16x8xf32, #tpu.memory_space<vmem>>, %arg8: memref<1x16x3xf32, #tpu.memory_space<vmem>>, %arg9: memref<16x16xf32, #tpu.memory_space<vmem>>, %arg10: memref<103x35xf32, #tpu.memory_space<vmem>>, %arg11: memref<1x7x32x16xf32, #tpu.memory_space<vmem>>, %arg12: memref<1x32x3xf32, #tpu.memory_space<vmem>>, %arg13: memref<32x32xf32, #tpu.memory_space<vmem>>, %arg14: memref<28x10xf32, #tpu.memory_space<vmem>>, %arg15: memref<1x7x32x32xf32, #tpu.memory_space<vmem>>, %arg16: memref<1x32x3xf32, #tpu.memory_space<vmem>>, %arg17: memref<32x32xf32, #tpu.memory_space<vmem>>, %arg18: memref<1x32x1xf32, #tpu.memory_space<vmem>>) attributes {dimension_semantics = [#tpu.dimension_semantics<parallel>], iteration_bounds = array<i64: 1>, scalar_prefetch = 0 : i64, scratch_operands = 0 : i64, tpu.core_type = #tpu.core_type<tc>, window_params = [{transform_indices = @transform_0, window_bounds = array<i64: 1, 2, 1000>}, {pipeline_mode = #tpu.pipeline_mode<synchronous>, transform_indices = @transform_1, window_bounds = array<i64: 994, 332>}, {transform_indices = @transform_2, window_bounds = array<i64: 1, 7, 8, 2>}, {transform_indices = @transform_3, window_bounds = array<i64: 1, 8, 3>}, {pipeline_mode = #tpu.pipeline_mode<synchronous>, transform_indices = @transform_4, window_bounds = array<i64: 8, 8>}, {pipeline_mode = #tpu.pipeline_mode<synchronous>, transform_indices = @transform_5, window_bounds = array<i64: 325, 109>}, {transform_indices = @transform_6, window_bounds = array<i64: 1, 7, 16, 8>}, {transform_indices = @transform_7, window_bounds = array<i64: 1, 16, 3>}, {pipeline_mode = #tpu.pipeline_mode<synchronous>, transform_indices = @transform_8, window_bounds = array<i64: 16, 16>}, {pipeline_mode = #tpu.pipeline_mode<synchronous>, transform_indices = @transform_9, window_bounds = array<i64: 103, 35>}, {transform_indices = @transform_10, window_bounds = array<i64: 1, 7, 32, 16>}, {transform_indices = @transform_11, window_bounds = array<i64: 1, 32, 3>}, {pipeline_mode = #tpu.pipeline_mode<synchronous>, transform_indices = @transform_12, window_bounds = array<i64: 32, 32>}, {pipeline_mode = #tpu.pipeline_mode<synchronous>, transform_indices = @transform_13, window_bounds = array<i64: 28, 10>}, {transform_indices = @transform_14, window_bounds = array<i64: 1, 7, 32, 32>}, {transform_indices = @transform_15, window_bounds = array<i64: 1, 32, 3>}, {pipeline_mode = #tpu.pipeline_mode<synchronous>, transform_indices = @transform_16, window_bounds = array<i64: 32, 32>}, {transform_indices = @transform_17, window_bounds = array<i64: 1, 32, 1>}]} {
    %c0 = arith.constant 0 : index
    %c0_0 = arith.constant 0 : index
    %c0_1 = arith.constant 0 : index
    %0 = vector.load %arg1[%c0, %c0_0, %c0_1] : memref<1x2x1000xf32, #tpu.memory_space<vmem>>, vector<1x2x1000xf32>
    %1 = vector.shape_cast %0 : vector<1x2x1000xf32> to vector<2x1000xf32>
    %c0_2 = arith.constant 0 : index
    %c0_3 = arith.constant 0 : index
    %2 = vector.load %arg2[%c0_2, %c0_3] : memref<994x332xf32, #tpu.memory_space<vmem>>, vector<994x332xf32>
    %c0_4 = arith.constant 0 : index
    %c0_5 = arith.constant 0 : index
    %c0_6 = arith.constant 0 : index
    %c0_7 = arith.constant 0 : index
    %3 = vector.load %arg3[%c0_4, %c0_5, %c0_6, %c0_7] : memref<1x7x8x2xf32, #tpu.memory_space<vmem>>, vector<1x7x8x2xf32>
    %4 = vector.shape_cast %3 : vector<1x7x8x2xf32> to vector<7x8x2xf32>
    %c0_8 = arith.constant 0 : index
    %c0_9 = arith.constant 0 : index
    %c0_10 = arith.constant 0 : index
    %5 = vector.load %arg4[%c0_8, %c0_9, %c0_10] : memref<1x8x3xf32, #tpu.memory_space<vmem>>, vector<1x8x3xf32>
    %6 = vector.shape_cast %5 : vector<1x8x3xf32> to vector<8x3xf32>
    %c0_11 = arith.constant 0 : index
    %c0_12 = arith.constant 0 : index
    %7 = vector.load %arg5[%c0_11, %c0_12] : memref<8x8xf32, #tpu.memory_space<vmem>>, vector<8x8xf32>
    %8 = vector.extract_strided_slice %4 {offsets = [0, 0, 0], sizes = [1, 8, 2], strides = [1, 1, 1]} : vector<7x8x2xf32> to vector<1x8x2xf32>
    %9 = vector.shape_cast %8 : vector<1x8x2xf32> to vector<8x2xf32>
    %10 = vector.extract_strided_slice %1 {offsets = [0, 0], sizes = [2, 994], strides = [1, 1]} : vector<2x1000xf32> to vector<2x994xf32>
    %cst = arith.constant dense<0.000000e+00> : vector<8x994xf32>
    %11 = tpu.matmul %9, %10, %cst {dimension_numbers = #tpu.dot_dimension_numbers<[1], [0], [0], [1], [0, 0, 1, 1], [], []>} : vector<8x2xf32>, vector<2x994xf32>, vector<8x994xf32> -> vector<8x994xf32>
    %12 = vector.extract_strided_slice %4 {offsets = [1, 0, 0], sizes = [1, 8, 2], strides = [1, 1, 1]} : vector<7x8x2xf32> to vector<1x8x2xf32>
    %13 = vector.shape_cast %12 : vector<1x8x2xf32> to vector<8x2xf32>
    %14 = vector.extract_strided_slice %1 {offsets = [0, 1], sizes = [2, 994], strides = [1, 1]} : vector<2x1000xf32> to vector<2x994xf32>
    %cst_13 = arith.constant dense<0.000000e+00> : vector<8x994xf32>
    %15 = tpu.matmul %13, %14, %cst_13 {dimension_numbers = #tpu.dot_dimension_numbers<[1], [0], [0], [1], [0, 0, 1, 1], [], []>} : vector<8x2xf32>, vector<2x994xf32>, vector<8x994xf32> -> vector<8x994xf32>
    %16 = arith.addf %11, %15 : vector<8x994xf32>
    %17 = vector.extract_strided_slice %4 {offsets = [2, 0, 0], sizes = [1, 8, 2], strides = [1, 1, 1]} : vector<7x8x2xf32> to vector<1x8x2xf32>
    %18 = vector.shape_cast %17 : vector<1x8x2xf32> to vector<8x2xf32>
    %19 = vector.extract_strided_slice %1 {offsets = [0, 2], sizes = [2, 994], strides = [1, 1]} : vector<2x1000xf32> to vector<2x994xf32>
    %cst_14 = arith.constant dense<0.000000e+00> : vector<8x994xf32>
    %20 = tpu.matmul %18, %19, %cst_14 {dimension_numbers = #tpu.dot_dimension_numbers<[1], [0], [0], [1], [0, 0, 1, 1], [], []>} : vector<8x2xf32>, vector<2x994xf32>, vector<8x994xf32> -> vector<8x994xf32>
    %21 = arith.addf %16, %20 : vector<8x994xf32>
    %22 = vector.extract_strided_slice %4 {offsets = [3, 0, 0], sizes = [1, 8, 2], strides = [1, 1, 1]} : vector<7x8x2xf32> to vector<1x8x2xf32>
    %23 = vector.shape_cast %22 : vector<1x8x2xf32> to vector<8x2xf32>
    %24 = vector.extract_strided_slice %1 {offsets = [0, 3], sizes = [2, 994], strides = [1, 1]} : vector<2x1000xf32> to vector<2x994xf32>
    %cst_15 = arith.constant dense<0.000000e+00> : vector<8x994xf32>
    %25 = tpu.matmul %23, %24, %cst_15 {dimension_numbers = #tpu.dot_dimension_numbers<[1], [0], [0], [1], [0, 0, 1, 1], [], []>} : vector<8x2xf32>, vector<2x994xf32>, vector<8x994xf32> -> vector<8x994xf32>
    %26 = arith.addf %21, %25 : vector<8x994xf32>
    %27 = vector.extract_strided_slice %4 {offsets = [4, 0, 0], sizes = [1, 8, 2], strides = [1, 1, 1]} : vector<7x8x2xf32> to vector<1x8x2xf32>
    %28 = vector.shape_cast %27 : vector<1x8x2xf32> to vector<8x2xf32>
    %29 = vector.extract_strided_slice %1 {offsets = [0, 4], sizes = [2, 994], strides = [1, 1]} : vector<2x1000xf32> to vector<2x994xf32>
    %cst_16 = arith.constant dense<0.000000e+00> : vector<8x994xf32>
    %30 = tpu.matmul %28, %29, %cst_16 {dimension_numbers = #tpu.dot_dimension_numbers<[1], [0], [0], [1], [0, 0, 1, 1], [], []>} : vector<8x2xf32>, vector<2x994xf32>, vector<8x994xf32> -> vector<8x994xf32>
    %31 = arith.addf %26, %30 : vector<8x994xf32>
    %32 = vector.extract_strided_slice %4 {offsets = [5, 0, 0], sizes = [1, 8, 2], strides = [1, 1, 1]} : vector<7x8x2xf32> to vector<1x8x2xf32>
    %33 = vector.shape_cast %32 : vector<1x8x2xf32> to vector<8x2xf32>
    %34 = vector.extract_strided_slice %1 {offsets = [0, 5], sizes = [2, 994], strides = [1, 1]} : vector<2x1000xf32> to vector<2x994xf32>
    %cst_17 = arith.constant dense<0.000000e+00> : vector<8x994xf32>
    %35 = tpu.matmul %33, %34, %cst_17 {dimension_numbers = #tpu.dot_dimension_numbers<[1], [0], [0], [1], [0, 0, 1, 1], [], []>} : vector<8x2xf32>, vector<2x994xf32>, vector<8x994xf32> -> vector<8x994xf32>
    %36 = arith.addf %31, %35 : vector<8x994xf32>
    %37 = vector.extract_strided_slice %4 {offsets = [6, 0, 0], sizes = [1, 8, 2], strides = [1, 1, 1]} : vector<7x8x2xf32> to vector<1x8x2xf32>
    %38 = vector.shape_cast %37 : vector<1x8x2xf32> to vector<8x2xf32>
    %39 = vector.extract_strided_slice %1 {offsets = [0, 6], sizes = [2, 994], strides = [1, 1]} : vector<2x1000xf32> to vector<2x994xf32>
    %cst_18 = arith.constant dense<0.000000e+00> : vector<8x994xf32>
    %40 = tpu.matmul %38, %39, %cst_18 {dimension_numbers = #tpu.dot_dimension_numbers<[1], [0], [0], [1], [0, 0, 1, 1], [], []>} : vector<8x2xf32>, vector<2x994xf32>, vector<8x994xf32> -> vector<8x994xf32>
    %41 = arith.addf %36, %40 : vector<8x994xf32>
    %cst_19 = arith.constant dense<0.000000e+00> : vector<8x332xf32>
    %42 = tpu.matmul %41, %2, %cst_19 {dimension_numbers = #tpu.dot_dimension_numbers<[1], [0], [0], [1], [0, 0, 1, 1], [], []>} : vector<8x994xf32>, vector<994x332xf32>, vector<8x332xf32> -> vector<8x332xf32>
    %43 = vector.extract_strided_slice %6 {offsets = [0, 0], sizes = [8, 1], strides = [1, 1]} : vector<8x3xf32> to vector<8x1xf32>
    %44 = vector.broadcast %43 : vector<8x1xf32> to vector<8x332xf32>
    %45 = arith.addf %42, %44 : vector<8x332xf32>
    %cst_20 = arith.constant dense<0.000000e+00> : vector<8xf32>
    %46 = vector.multi_reduction <add>, %45, %cst_20 [1] : vector<8x332xf32> to vector<8xf32>
    %47 = vector.shape_cast %46 : vector<8xf32> to vector<8x1xf32>
    %cst_21 = arith.constant dense<0.000000e+00> : vector<8x1xf32>
    %48 = tpu.matmul %7, %47, %cst_21 {dimension_numbers = #tpu.dot_dimension_numbers<[1], [0], [0], [1], [0, 0, 1, 1], [], []>} : vector<8x8xf32>, vector<8x1xf32>, vector<8x1xf32> -> vector<8x1xf32>
    %cst_22 = arith.constant 0.00150602404 : f32
    %49 = vector.broadcast %cst_22 : f32 to vector<8x1xf32>
    %50 = arith.mulf %48, %49 : vector<8x1xf32>
    %51 = vector.broadcast %50 : vector<8x1xf32> to vector<8x332xf32>
    %52 = arith.subf %45, %51 : vector<8x332xf32>
    %53 = arith.mulf %52, %52 : vector<8x332xf32>
    %cst_23 = arith.constant dense<0.000000e+00> : vector<8xf32>
    %54 = vector.multi_reduction <add>, %53, %cst_23 [1] : vector<8x332xf32> to vector<8xf32>
    %55 = vector.shape_cast %54 : vector<8xf32> to vector<8x1xf32>
    %cst_24 = arith.constant dense<0.000000e+00> : vector<8x1xf32>
    %56 = tpu.matmul %7, %55, %cst_24 {dimension_numbers = #tpu.dot_dimension_numbers<[1], [0], [0], [1], [0, 0, 1, 1], [], []>} : vector<8x8xf32>, vector<8x1xf32>, vector<8x1xf32> -> vector<8x1xf32>
    %cst_25 = arith.constant 0.00150602404 : f32
    %57 = vector.broadcast %cst_25 : f32 to vector<8x1xf32>
    %58 = arith.mulf %56, %57 : vector<8x1xf32>
    %59 = vector.extract_strided_slice %6 {offsets = [0, 1], sizes = [8, 1], strides = [1, 1]} : vector<8x3xf32> to vector<8x1xf32>
    %60 = vector.broadcast %59 : vector<8x1xf32> to vector<8x332xf32>
    %61 = arith.mulf %60, %52 : vector<8x332xf32>
    %cst_26 = arith.constant 9.99999974E-6 : f32
    %62 = vector.broadcast %cst_26 : f32 to vector<8x1xf32>
    %63 = arith.addf %58, %62 : vector<8x1xf32>
    %64 = math.rsqrt %63 : vector<8x1xf32>
    %65 = vector.broadcast %64 : vector<8x1xf32> to vector<8x332xf32>
    %66 = arith.mulf %61, %65 : vector<8x332xf32>
    %67 = vector.extract_strided_slice %6 {offsets = [0, 2], sizes = [8, 1], strides = [1, 1]} : vector<8x3xf32> to vector<8x1xf32>
    %68 = vector.broadcast %67 : vector<8x1xf32> to vector<8x332xf32>
    %69 = arith.addf %66, %68 : vector<8x332xf32>
    %cst_27 = arith.constant 0.000000e+00 : f32
    %70 = vector.broadcast %cst_27 : f32 to vector<8x332xf32>
    %71 = arith.maximumf %69, %70 : vector<8x332xf32>
    %c0_28 = arith.constant 0 : index
    %c0_29 = arith.constant 0 : index
    %72 = vector.load %arg6[%c0_28, %c0_29] : memref<325x109xf32, #tpu.memory_space<vmem>>, vector<325x109xf32>
    %c0_30 = arith.constant 0 : index
    %c0_31 = arith.constant 0 : index
    %c0_32 = arith.constant 0 : index
    %c0_33 = arith.constant 0 : index
    %73 = vector.load %arg7[%c0_30, %c0_31, %c0_32, %c0_33] : memref<1x7x16x8xf32, #tpu.memory_space<vmem>>, vector<1x7x16x8xf32>
    %74 = vector.shape_cast %73 : vector<1x7x16x8xf32> to vector<7x16x8xf32>
    %c0_34 = arith.constant 0 : index
    %c0_35 = arith.constant 0 : index
    %c0_36 = arith.constant 0 : index
    %75 = vector.load %arg8[%c0_34, %c0_35, %c0_36] : memref<1x16x3xf32, #tpu.memory_space<vmem>>, vector<1x16x3xf32>
    %76 = vector.shape_cast %75 : vector<1x16x3xf32> to vector<16x3xf32>
    %c0_37 = arith.constant 0 : index
    %c0_38 = arith.constant 0 : index
    %77 = vector.load %arg9[%c0_37, %c0_38] : memref<16x16xf32, #tpu.memory_space<vmem>>, vector<16x16xf32>
    %78 = vector.extract_strided_slice %74 {offsets = [0, 0, 0], sizes = [1, 16, 8], strides = [1, 1, 1]} : vector<7x16x8xf32> to vector<1x16x8xf32>
    %79 = vector.shape_cast %78 : vector<1x16x8xf32> to vector<16x8xf32>
    %80 = vector.extract_strided_slice %71 {offsets = [0, 0], sizes = [8, 325], strides = [1, 1]} : vector<8x332xf32> to vector<8x325xf32>
    %cst_39 = arith.constant dense<0.000000e+00> : vector<16x325xf32>
    %81 = tpu.matmul %79, %80, %cst_39 {dimension_numbers = #tpu.dot_dimension_numbers<[1], [0], [0], [1], [0, 0, 1, 1], [], []>} : vector<16x8xf32>, vector<8x325xf32>, vector<16x325xf32> -> vector<16x325xf32>
    %82 = vector.extract_strided_slice %74 {offsets = [1, 0, 0], sizes = [1, 16, 8], strides = [1, 1, 1]} : vector<7x16x8xf32> to vector<1x16x8xf32>
    %83 = vector.shape_cast %82 : vector<1x16x8xf32> to vector<16x8xf32>
    %84 = vector.extract_strided_slice %71 {offsets = [0, 1], sizes = [8, 325], strides = [1, 1]} : vector<8x332xf32> to vector<8x325xf32>
    %cst_40 = arith.constant dense<0.000000e+00> : vector<16x325xf32>
    %85 = tpu.matmul %83, %84, %cst_40 {dimension_numbers = #tpu.dot_dimension_numbers<[1], [0], [0], [1], [0, 0, 1, 1], [], []>} : vector<16x8xf32>, vector<8x325xf32>, vector<16x325xf32> -> vector<16x325xf32>
    %86 = arith.addf %81, %85 : vector<16x325xf32>
    %87 = vector.extract_strided_slice %74 {offsets = [2, 0, 0], sizes = [1, 16, 8], strides = [1, 1, 1]} : vector<7x16x8xf32> to vector<1x16x8xf32>
    %88 = vector.shape_cast %87 : vector<1x16x8xf32> to vector<16x8xf32>
    %89 = vector.extract_strided_slice %71 {offsets = [0, 2], sizes = [8, 325], strides = [1, 1]} : vector<8x332xf32> to vector<8x325xf32>
    %cst_41 = arith.constant dense<0.000000e+00> : vector<16x325xf32>
    %90 = tpu.matmul %88, %89, %cst_41 {dimension_numbers = #tpu.dot_dimension_numbers<[1], [0], [0], [1], [0, 0, 1, 1], [], []>} : vector<16x8xf32>, vector<8x325xf32>, vector<16x325xf32> -> vector<16x325xf32>
    %91 = arith.addf %86, %90 : vector<16x325xf32>
    %92 = vector.extract_strided_slice %74 {offsets = [3, 0, 0], sizes = [1, 16, 8], strides = [1, 1, 1]} : vector<7x16x8xf32> to vector<1x16x8xf32>
    %93 = vector.shape_cast %92 : vector<1x16x8xf32> to vector<16x8xf32>
    %94 = vector.extract_strided_slice %71 {offsets = [0, 3], sizes = [8, 325], strides = [1, 1]} : vector<8x332xf32> to vector<8x325xf32>
    %cst_42 = arith.constant dense<0.000000e+00> : vector<16x325xf32>
    %95 = tpu.matmul %93, %94, %cst_42 {dimension_numbers = #tpu.dot_dimension_numbers<[1], [0], [0], [1], [0, 0, 1, 1], [], []>} : vector<16x8xf32>, vector<8x325xf32>, vector<16x325xf32> -> vector<16x325xf32>
    %96 = arith.addf %91, %95 : vector<16x325xf32>
    %97 = vector.extract_strided_slice %74 {offsets = [4, 0, 0], sizes = [1, 16, 8], strides = [1, 1, 1]} : vector<7x16x8xf32> to vector<1x16x8xf32>
    %98 = vector.shape_cast %97 : vector<1x16x8xf32> to vector<16x8xf32>
    %99 = vector.extract_strided_slice %71 {offsets = [0, 4], sizes = [8, 325], strides = [1, 1]} : vector<8x332xf32> to vector<8x325xf32>
    %cst_43 = arith.constant dense<0.000000e+00> : vector<16x325xf32>
    %100 = tpu.matmul %98, %99, %cst_43 {dimension_numbers = #tpu.dot_dimension_numbers<[1], [0], [0], [1], [0, 0, 1, 1], [], []>} : vector<16x8xf32>, vector<8x325xf32>, vector<16x325xf32> -> vector<16x325xf32>
    %101 = arith.addf %96, %100 : vector<16x325xf32>
    %102 = vector.extract_strided_slice %74 {offsets = [5, 0, 0], sizes = [1, 16, 8], strides = [1, 1, 1]} : vector<7x16x8xf32> to vector<1x16x8xf32>
    %103 = vector.shape_cast %102 : vector<1x16x8xf32> to vector<16x8xf32>
    %104 = vector.extract_strided_slice %71 {offsets = [0, 5], sizes = [8, 325], strides = [1, 1]} : vector<8x332xf32> to vector<8x325xf32>
    %cst_44 = arith.constant dense<0.000000e+00> : vector<16x325xf32>
    %105 = tpu.matmul %103, %104, %cst_44 {dimension_numbers = #tpu.dot_dimension_numbers<[1], [0], [0], [1], [0, 0, 1, 1], [], []>} : vector<16x8xf32>, vector<8x325xf32>, vector<16x325xf32> -> vector<16x325xf32>
    %106 = arith.addf %101, %105 : vector<16x325xf32>
    %107 = vector.extract_strided_slice %74 {offsets = [6, 0, 0], sizes = [1, 16, 8], strides = [1, 1, 1]} : vector<7x16x8xf32> to vector<1x16x8xf32>
    %108 = vector.shape_cast %107 : vector<1x16x8xf32> to vector<16x8xf32>
    %109 = vector.extract_strided_slice %71 {offsets = [0, 6], sizes = [8, 325], strides = [1, 1]} : vector<8x332xf32> to vector<8x325xf32>
    %cst_45 = arith.constant dense<0.000000e+00> : vector<16x325xf32>
    %110 = tpu.matmul %108, %109, %cst_45 {dimension_numbers = #tpu.dot_dimension_numbers<[1], [0], [0], [1], [0, 0, 1, 1], [], []>} : vector<16x8xf32>, vector<8x325xf32>, vector<16x325xf32> -> vector<16x325xf32>
    %111 = arith.addf %106, %110 : vector<16x325xf32>
    %cst_46 = arith.constant dense<0.000000e+00> : vector<16x109xf32>
    %112 = tpu.matmul %111, %72, %cst_46 {dimension_numbers = #tpu.dot_dimension_numbers<[1], [0], [0], [1], [0, 0, 1, 1], [], []>} : vector<16x325xf32>, vector<325x109xf32>, vector<16x109xf32> -> vector<16x109xf32>
    %113 = vector.extract_strided_slice %76 {offsets = [0, 0], sizes = [16, 1], strides = [1, 1]} : vector<16x3xf32> to vector<16x1xf32>
    %114 = vector.broadcast %113 : vector<16x1xf32> to vector<16x109xf32>
    %115 = arith.addf %112, %114 : vector<16x109xf32>
    %cst_47 = arith.constant dense<0.000000e+00> : vector<16xf32>
    %116 = vector.multi_reduction <add>, %115, %cst_47 [1] : vector<16x109xf32> to vector<16xf32>
    %117 = vector.shape_cast %116 : vector<16xf32> to vector<16x1xf32>
    %cst_48 = arith.constant dense<0.000000e+00> : vector<16x1xf32>
    %118 = tpu.matmul %77, %117, %cst_48 {dimension_numbers = #tpu.dot_dimension_numbers<[1], [0], [0], [1], [0, 0, 1, 1], [], []>} : vector<16x16xf32>, vector<16x1xf32>, vector<16x1xf32> -> vector<16x1xf32>
    %cst_49 = arith.constant 0.00458715577 : f32
    %119 = vector.broadcast %cst_49 : f32 to vector<16x1xf32>
    %120 = arith.mulf %118, %119 : vector<16x1xf32>
    %121 = vector.broadcast %120 : vector<16x1xf32> to vector<16x109xf32>
    %122 = arith.subf %115, %121 : vector<16x109xf32>
    %123 = arith.mulf %122, %122 : vector<16x109xf32>
    %cst_50 = arith.constant dense<0.000000e+00> : vector<16xf32>
    %124 = vector.multi_reduction <add>, %123, %cst_50 [1] : vector<16x109xf32> to vector<16xf32>
    %125 = vector.shape_cast %124 : vector<16xf32> to vector<16x1xf32>
    %cst_51 = arith.constant dense<0.000000e+00> : vector<16x1xf32>
    %126 = tpu.matmul %77, %125, %cst_51 {dimension_numbers = #tpu.dot_dimension_numbers<[1], [0], [0], [1], [0, 0, 1, 1], [], []>} : vector<16x16xf32>, vector<16x1xf32>, vector<16x1xf32> -> vector<16x1xf32>
    %cst_52 = arith.constant 0.00458715577 : f32
    %127 = vector.broadcast %cst_52 : f32 to vector<16x1xf32>
    %128 = arith.mulf %126, %127 : vector<16x1xf32>
    %129 = vector.extract_strided_slice %76 {offsets = [0, 1], sizes = [16, 1], strides = [1, 1]} : vector<16x3xf32> to vector<16x1xf32>
    %130 = vector.broadcast %129 : vector<16x1xf32> to vector<16x109xf32>
    %131 = arith.mulf %130, %122 : vector<16x109xf32>
    %cst_53 = arith.constant 9.99999974E-6 : f32
    %132 = vector.broadcast %cst_53 : f32 to vector<16x1xf32>
    %133 = arith.addf %128, %132 : vector<16x1xf32>
    %134 = math.rsqrt %133 : vector<16x1xf32>
    %135 = vector.broadcast %134 : vector<16x1xf32> to vector<16x109xf32>
    %136 = arith.mulf %131, %135 : vector<16x109xf32>
    %137 = vector.extract_strided_slice %76 {offsets = [0, 2], sizes = [16, 1], strides = [1, 1]} : vector<16x3xf32> to vector<16x1xf32>
    %138 = vector.broadcast %137 : vector<16x1xf32> to vector<16x109xf32>
    %139 = arith.addf %136, %138 : vector<16x109xf32>
    %cst_54 = arith.constant 0.000000e+00 : f32
    %140 = vector.broadcast %cst_54 : f32 to vector<16x109xf32>
    %141 = arith.maximumf %139, %140 : vector<16x109xf32>
    %c0_55 = arith.constant 0 : index
    %c0_56 = arith.constant 0 : index
    %142 = vector.load %arg10[%c0_55, %c0_56] : memref<103x35xf32, #tpu.memory_space<vmem>>, vector<103x35xf32>
    %c0_57 = arith.constant 0 : index
    %c0_58 = arith.constant 0 : index
    %c0_59 = arith.constant 0 : index
    %c0_60 = arith.constant 0 : index
    %143 = vector.load %arg11[%c0_57, %c0_58, %c0_59, %c0_60] : memref<1x7x32x16xf32, #tpu.memory_space<vmem>>, vector<1x7x32x16xf32>
    %144 = vector.shape_cast %143 : vector<1x7x32x16xf32> to vector<7x32x16xf32>
    %c0_61 = arith.constant 0 : index
    %c0_62 = arith.constant 0 : index
    %c0_63 = arith.constant 0 : index
    %145 = vector.load %arg12[%c0_61, %c0_62, %c0_63] : memref<1x32x3xf32, #tpu.memory_space<vmem>>, vector<1x32x3xf32>
    %146 = vector.shape_cast %145 : vector<1x32x3xf32> to vector<32x3xf32>
    %c0_64 = arith.constant 0 : index
    %c0_65 = arith.constant 0 : index
    %147 = vector.load %arg13[%c0_64, %c0_65] : memref<32x32xf32, #tpu.memory_space<vmem>>, vector<32x32xf32>
    %148 = vector.extract_strided_slice %144 {offsets = [0, 0, 0], sizes = [1, 32, 16], strides = [1, 1, 1]} : vector<7x32x16xf32> to vector<1x32x16xf32>
    %149 = vector.shape_cast %148 : vector<1x32x16xf32> to vector<32x16xf32>
    %150 = vector.extract_strided_slice %141 {offsets = [0, 0], sizes = [16, 103], strides = [1, 1]} : vector<16x109xf32> to vector<16x103xf32>
    %cst_66 = arith.constant dense<0.000000e+00> : vector<32x103xf32>
    %151 = tpu.matmul %149, %150, %cst_66 {dimension_numbers = #tpu.dot_dimension_numbers<[1], [0], [0], [1], [0, 0, 1, 1], [], []>} : vector<32x16xf32>, vector<16x103xf32>, vector<32x103xf32> -> vector<32x103xf32>
    %152 = vector.extract_strided_slice %144 {offsets = [1, 0, 0], sizes = [1, 32, 16], strides = [1, 1, 1]} : vector<7x32x16xf32> to vector<1x32x16xf32>
    %153 = vector.shape_cast %152 : vector<1x32x16xf32> to vector<32x16xf32>
    %154 = vector.extract_strided_slice %141 {offsets = [0, 1], sizes = [16, 103], strides = [1, 1]} : vector<16x109xf32> to vector<16x103xf32>
    %cst_67 = arith.constant dense<0.000000e+00> : vector<32x103xf32>
    %155 = tpu.matmul %153, %154, %cst_67 {dimension_numbers = #tpu.dot_dimension_numbers<[1], [0], [0], [1], [0, 0, 1, 1], [], []>} : vector<32x16xf32>, vector<16x103xf32>, vector<32x103xf32> -> vector<32x103xf32>
    %156 = arith.addf %151, %155 : vector<32x103xf32>
    %157 = vector.extract_strided_slice %144 {offsets = [2, 0, 0], sizes = [1, 32, 16], strides = [1, 1, 1]} : vector<7x32x16xf32> to vector<1x32x16xf32>
    %158 = vector.shape_cast %157 : vector<1x32x16xf32> to vector<32x16xf32>
    %159 = vector.extract_strided_slice %141 {offsets = [0, 2], sizes = [16, 103], strides = [1, 1]} : vector<16x109xf32> to vector<16x103xf32>
    %cst_68 = arith.constant dense<0.000000e+00> : vector<32x103xf32>
    %160 = tpu.matmul %158, %159, %cst_68 {dimension_numbers = #tpu.dot_dimension_numbers<[1], [0], [0], [1], [0, 0, 1, 1], [], []>} : vector<32x16xf32>, vector<16x103xf32>, vector<32x103xf32> -> vector<32x103xf32>
    %161 = arith.addf %156, %160 : vector<32x103xf32>
    %162 = vector.extract_strided_slice %144 {offsets = [3, 0, 0], sizes = [1, 32, 16], strides = [1, 1, 1]} : vector<7x32x16xf32> to vector<1x32x16xf32>
    %163 = vector.shape_cast %162 : vector<1x32x16xf32> to vector<32x16xf32>
    %164 = vector.extract_strided_slice %141 {offsets = [0, 3], sizes = [16, 103], strides = [1, 1]} : vector<16x109xf32> to vector<16x103xf32>
    %cst_69 = arith.constant dense<0.000000e+00> : vector<32x103xf32>
    %165 = tpu.matmul %163, %164, %cst_69 {dimension_numbers = #tpu.dot_dimension_numbers<[1], [0], [0], [1], [0, 0, 1, 1], [], []>} : vector<32x16xf32>, vector<16x103xf32>, vector<32x103xf32> -> vector<32x103xf32>
    %166 = arith.addf %161, %165 : vector<32x103xf32>
    %167 = vector.extract_strided_slice %144 {offsets = [4, 0, 0], sizes = [1, 32, 16], strides = [1, 1, 1]} : vector<7x32x16xf32> to vector<1x32x16xf32>
    %168 = vector.shape_cast %167 : vector<1x32x16xf32> to vector<32x16xf32>
    %169 = vector.extract_strided_slice %141 {offsets = [0, 4], sizes = [16, 103], strides = [1, 1]} : vector<16x109xf32> to vector<16x103xf32>
    %cst_70 = arith.constant dense<0.000000e+00> : vector<32x103xf32>
    %170 = tpu.matmul %168, %169, %cst_70 {dimension_numbers = #tpu.dot_dimension_numbers<[1], [0], [0], [1], [0, 0, 1, 1], [], []>} : vector<32x16xf32>, vector<16x103xf32>, vector<32x103xf32> -> vector<32x103xf32>
    %171 = arith.addf %166, %170 : vector<32x103xf32>
    %172 = vector.extract_strided_slice %144 {offsets = [5, 0, 0], sizes = [1, 32, 16], strides = [1, 1, 1]} : vector<7x32x16xf32> to vector<1x32x16xf32>
    %173 = vector.shape_cast %172 : vector<1x32x16xf32> to vector<32x16xf32>
    %174 = vector.extract_strided_slice %141 {offsets = [0, 5], sizes = [16, 103], strides = [1, 1]} : vector<16x109xf32> to vector<16x103xf32>
    %cst_71 = arith.constant dense<0.000000e+00> : vector<32x103xf32>
    %175 = tpu.matmul %173, %174, %cst_71 {dimension_numbers = #tpu.dot_dimension_numbers<[1], [0], [0], [1], [0, 0, 1, 1], [], []>} : vector<32x16xf32>, vector<16x103xf32>, vector<32x103xf32> -> vector<32x103xf32>
    %176 = arith.addf %171, %175 : vector<32x103xf32>
    %177 = vector.extract_strided_slice %144 {offsets = [6, 0, 0], sizes = [1, 32, 16], strides = [1, 1, 1]} : vector<7x32x16xf32> to vector<1x32x16xf32>
    %178 = vector.shape_cast %177 : vector<1x32x16xf32> to vector<32x16xf32>
    %179 = vector.extract_strided_slice %141 {offsets = [0, 6], sizes = [16, 103], strides = [1, 1]} : vector<16x109xf32> to vector<16x103xf32>
    %cst_72 = arith.constant dense<0.000000e+00> : vector<32x103xf32>
    %180 = tpu.matmul %178, %179, %cst_72 {dimension_numbers = #tpu.dot_dimension_numbers<[1], [0], [0], [1], [0, 0, 1, 1], [], []>} : vector<32x16xf32>, vector<16x103xf32>, vector<32x103xf32> -> vector<32x103xf32>
    %181 = arith.addf %176, %180 : vector<32x103xf32>
    %cst_73 = arith.constant dense<0.000000e+00> : vector<32x35xf32>
    %182 = tpu.matmul %181, %142, %cst_73 {dimension_numbers = #tpu.dot_dimension_numbers<[1], [0], [0], [1], [0, 0, 1, 1], [], []>} : vector<32x103xf32>, vector<103x35xf32>, vector<32x35xf32> -> vector<32x35xf32>
    %183 = vector.extract_strided_slice %146 {offsets = [0, 0], sizes = [32, 1], strides = [1, 1]} : vector<32x3xf32> to vector<32x1xf32>
    %184 = vector.broadcast %183 : vector<32x1xf32> to vector<32x35xf32>
    %185 = arith.addf %182, %184 : vector<32x35xf32>
    %cst_74 = arith.constant dense<0.000000e+00> : vector<32xf32>
    %186 = vector.multi_reduction <add>, %185, %cst_74 [1] : vector<32x35xf32> to vector<32xf32>
    %187 = vector.shape_cast %186 : vector<32xf32> to vector<32x1xf32>
    %cst_75 = arith.constant dense<0.000000e+00> : vector<32x1xf32>
    %188 = tpu.matmul %147, %187, %cst_75 {dimension_numbers = #tpu.dot_dimension_numbers<[1], [0], [0], [1], [0, 0, 1, 1], [], []>} : vector<32x32xf32>, vector<32x1xf32>, vector<32x1xf32> -> vector<32x1xf32>
    %cst_76 = arith.constant 0.0142857144 : f32
    %189 = vector.broadcast %cst_76 : f32 to vector<32x1xf32>
    %190 = arith.mulf %188, %189 : vector<32x1xf32>
    %191 = vector.broadcast %190 : vector<32x1xf32> to vector<32x35xf32>
    %192 = arith.subf %185, %191 : vector<32x35xf32>
    %193 = arith.mulf %192, %192 : vector<32x35xf32>
    %cst_77 = arith.constant dense<0.000000e+00> : vector<32xf32>
    %194 = vector.multi_reduction <add>, %193, %cst_77 [1] : vector<32x35xf32> to vector<32xf32>
    %195 = vector.shape_cast %194 : vector<32xf32> to vector<32x1xf32>
    %cst_78 = arith.constant dense<0.000000e+00> : vector<32x1xf32>
    %196 = tpu.matmul %147, %195, %cst_78 {dimension_numbers = #tpu.dot_dimension_numbers<[1], [0], [0], [1], [0, 0, 1, 1], [], []>} : vector<32x32xf32>, vector<32x1xf32>, vector<32x1xf32> -> vector<32x1xf32>
    %cst_79 = arith.constant 0.0142857144 : f32
    %197 = vector.broadcast %cst_79 : f32 to vector<32x1xf32>
    %198 = arith.mulf %196, %197 : vector<32x1xf32>
    %199 = vector.extract_strided_slice %146 {offsets = [0, 1], sizes = [32, 1], strides = [1, 1]} : vector<32x3xf32> to vector<32x1xf32>
    %200 = vector.broadcast %199 : vector<32x1xf32> to vector<32x35xf32>
    %201 = arith.mulf %200, %192 : vector<32x35xf32>
    %cst_80 = arith.constant 9.99999974E-6 : f32
    %202 = vector.broadcast %cst_80 : f32 to vector<32x1xf32>
    %203 = arith.addf %198, %202 : vector<32x1xf32>
    %204 = math.rsqrt %203 : vector<32x1xf32>
    %205 = vector.broadcast %204 : vector<32x1xf32> to vector<32x35xf32>
    %206 = arith.mulf %201, %205 : vector<32x35xf32>
    %207 = vector.extract_strided_slice %146 {offsets = [0, 2], sizes = [32, 1], strides = [1, 1]} : vector<32x3xf32> to vector<32x1xf32>
    %208 = vector.broadcast %207 : vector<32x1xf32> to vector<32x35xf32>
    %209 = arith.addf %206, %208 : vector<32x35xf32>
    %cst_81 = arith.constant 0.000000e+00 : f32
    %210 = vector.broadcast %cst_81 : f32 to vector<32x35xf32>
    %211 = arith.maximumf %209, %210 : vector<32x35xf32>
    %c0_82 = arith.constant 0 : index
    %c0_83 = arith.constant 0 : index
    %212 = vector.load %arg14[%c0_82, %c0_83] : memref<28x10xf32, #tpu.memory_space<vmem>>, vector<28x10xf32>
    %c0_84 = arith.constant 0 : index
    %c0_85 = arith.constant 0 : index
    %c0_86 = arith.constant 0 : index
    %c0_87 = arith.constant 0 : index
    %213 = vector.load %arg15[%c0_84, %c0_85, %c0_86, %c0_87] : memref<1x7x32x32xf32, #tpu.memory_space<vmem>>, vector<1x7x32x32xf32>
    %214 = vector.shape_cast %213 : vector<1x7x32x32xf32> to vector<7x32x32xf32>
    %c0_88 = arith.constant 0 : index
    %c0_89 = arith.constant 0 : index
    %c0_90 = arith.constant 0 : index
    %215 = vector.load %arg16[%c0_88, %c0_89, %c0_90] : memref<1x32x3xf32, #tpu.memory_space<vmem>>, vector<1x32x3xf32>
    %216 = vector.shape_cast %215 : vector<1x32x3xf32> to vector<32x3xf32>
    %c0_91 = arith.constant 0 : index
    %c0_92 = arith.constant 0 : index
    %217 = vector.load %arg17[%c0_91, %c0_92] : memref<32x32xf32, #tpu.memory_space<vmem>>, vector<32x32xf32>
    %218 = vector.extract_strided_slice %214 {offsets = [0, 0, 0], sizes = [1, 32, 32], strides = [1, 1, 1]} : vector<7x32x32xf32> to vector<1x32x32xf32>
    %219 = vector.shape_cast %218 : vector<1x32x32xf32> to vector<32x32xf32>
    %220 = vector.extract_strided_slice %211 {offsets = [0, 0], sizes = [32, 28], strides = [1, 1]} : vector<32x35xf32> to vector<32x28xf32>
    %cst_93 = arith.constant dense<0.000000e+00> : vector<32x28xf32>
    %221 = tpu.matmul %219, %220, %cst_93 {dimension_numbers = #tpu.dot_dimension_numbers<[1], [0], [0], [1], [0, 0, 1, 1], [], []>} : vector<32x32xf32>, vector<32x28xf32>, vector<32x28xf32> -> vector<32x28xf32>
    %222 = vector.extract_strided_slice %214 {offsets = [1, 0, 0], sizes = [1, 32, 32], strides = [1, 1, 1]} : vector<7x32x32xf32> to vector<1x32x32xf32>
    %223 = vector.shape_cast %222 : vector<1x32x32xf32> to vector<32x32xf32>
    %224 = vector.extract_strided_slice %211 {offsets = [0, 1], sizes = [32, 28], strides = [1, 1]} : vector<32x35xf32> to vector<32x28xf32>
    %cst_94 = arith.constant dense<0.000000e+00> : vector<32x28xf32>
    %225 = tpu.matmul %223, %224, %cst_94 {dimension_numbers = #tpu.dot_dimension_numbers<[1], [0], [0], [1], [0, 0, 1, 1], [], []>} : vector<32x32xf32>, vector<32x28xf32>, vector<32x28xf32> -> vector<32x28xf32>
    %226 = arith.addf %221, %225 : vector<32x28xf32>
    %227 = vector.extract_strided_slice %214 {offsets = [2, 0, 0], sizes = [1, 32, 32], strides = [1, 1, 1]} : vector<7x32x32xf32> to vector<1x32x32xf32>
    %228 = vector.shape_cast %227 : vector<1x32x32xf32> to vector<32x32xf32>
    %229 = vector.extract_strided_slice %211 {offsets = [0, 2], sizes = [32, 28], strides = [1, 1]} : vector<32x35xf32> to vector<32x28xf32>
    %cst_95 = arith.constant dense<0.000000e+00> : vector<32x28xf32>
    %230 = tpu.matmul %228, %229, %cst_95 {dimension_numbers = #tpu.dot_dimension_numbers<[1], [0], [0], [1], [0, 0, 1, 1], [], []>} : vector<32x32xf32>, vector<32x28xf32>, vector<32x28xf32> -> vector<32x28xf32>
    %231 = arith.addf %226, %230 : vector<32x28xf32>
    %232 = vector.extract_strided_slice %214 {offsets = [3, 0, 0], sizes = [1, 32, 32], strides = [1, 1, 1]} : vector<7x32x32xf32> to vector<1x32x32xf32>
    %233 = vector.shape_cast %232 : vector<1x32x32xf32> to vector<32x32xf32>
    %234 = vector.extract_strided_slice %211 {offsets = [0, 3], sizes = [32, 28], strides = [1, 1]} : vector<32x35xf32> to vector<32x28xf32>
    %cst_96 = arith.constant dense<0.000000e+00> : vector<32x28xf32>
    %235 = tpu.matmul %233, %234, %cst_96 {dimension_numbers = #tpu.dot_dimension_numbers<[1], [0], [0], [1], [0, 0, 1, 1], [], []>} : vector<32x32xf32>, vector<32x28xf32>, vector<32x28xf32> -> vector<32x28xf32>
    %236 = arith.addf %231, %235 : vector<32x28xf32>
    %237 = vector.extract_strided_slice %214 {offsets = [4, 0, 0], sizes = [1, 32, 32], strides = [1, 1, 1]} : vector<7x32x32xf32> to vector<1x32x32xf32>
    %238 = vector.shape_cast %237 : vector<1x32x32xf32> to vector<32x32xf32>
    %239 = vector.extract_strided_slice %211 {offsets = [0, 4], sizes = [32, 28], strides = [1, 1]} : vector<32x35xf32> to vector<32x28xf32>
    %cst_97 = arith.constant dense<0.000000e+00> : vector<32x28xf32>
    %240 = tpu.matmul %238, %239, %cst_97 {dimension_numbers = #tpu.dot_dimension_numbers<[1], [0], [0], [1], [0, 0, 1, 1], [], []>} : vector<32x32xf32>, vector<32x28xf32>, vector<32x28xf32> -> vector<32x28xf32>
    %241 = arith.addf %236, %240 : vector<32x28xf32>
    %242 = vector.extract_strided_slice %214 {offsets = [5, 0, 0], sizes = [1, 32, 32], strides = [1, 1, 1]} : vector<7x32x32xf32> to vector<1x32x32xf32>
    %243 = vector.shape_cast %242 : vector<1x32x32xf32> to vector<32x32xf32>
    %244 = vector.extract_strided_slice %211 {offsets = [0, 5], sizes = [32, 28], strides = [1, 1]} : vector<32x35xf32> to vector<32x28xf32>
    %cst_98 = arith.constant dense<0.000000e+00> : vector<32x28xf32>
    %245 = tpu.matmul %243, %244, %cst_98 {dimension_numbers = #tpu.dot_dimension_numbers<[1], [0], [0], [1], [0, 0, 1, 1], [], []>} : vector<32x32xf32>, vector<32x28xf32>, vector<32x28xf32> -> vector<32x28xf32>
    %246 = arith.addf %241, %245 : vector<32x28xf32>
    %247 = vector.extract_strided_slice %214 {offsets = [6, 0, 0], sizes = [1, 32, 32], strides = [1, 1, 1]} : vector<7x32x32xf32> to vector<1x32x32xf32>
    %248 = vector.shape_cast %247 : vector<1x32x32xf32> to vector<32x32xf32>
    %249 = vector.extract_strided_slice %211 {offsets = [0, 6], sizes = [32, 28], strides = [1, 1]} : vector<32x35xf32> to vector<32x28xf32>
    %cst_99 = arith.constant dense<0.000000e+00> : vector<32x28xf32>
    %250 = tpu.matmul %248, %249, %cst_99 {dimension_numbers = #tpu.dot_dimension_numbers<[1], [0], [0], [1], [0, 0, 1, 1], [], []>} : vector<32x32xf32>, vector<32x28xf32>, vector<32x28xf32> -> vector<32x28xf32>
    %251 = arith.addf %246, %250 : vector<32x28xf32>
    %cst_100 = arith.constant dense<0.000000e+00> : vector<32x10xf32>
    %252 = tpu.matmul %251, %212, %cst_100 {dimension_numbers = #tpu.dot_dimension_numbers<[1], [0], [0], [1], [0, 0, 1, 1], [], []>} : vector<32x28xf32>, vector<28x10xf32>, vector<32x10xf32> -> vector<32x10xf32>
    %253 = vector.extract_strided_slice %216 {offsets = [0, 0], sizes = [32, 1], strides = [1, 1]} : vector<32x3xf32> to vector<32x1xf32>
    %254 = vector.broadcast %253 : vector<32x1xf32> to vector<32x10xf32>
    %255 = arith.addf %252, %254 : vector<32x10xf32>
    %cst_101 = arith.constant dense<0.000000e+00> : vector<32xf32>
    %256 = vector.multi_reduction <add>, %255, %cst_101 [1] : vector<32x10xf32> to vector<32xf32>
    %257 = vector.shape_cast %256 : vector<32xf32> to vector<32x1xf32>
    %cst_102 = arith.constant dense<0.000000e+00> : vector<32x1xf32>
    %258 = tpu.matmul %217, %257, %cst_102 {dimension_numbers = #tpu.dot_dimension_numbers<[1], [0], [0], [1], [0, 0, 1, 1], [], []>} : vector<32x32xf32>, vector<32x1xf32>, vector<32x1xf32> -> vector<32x1xf32>
    %cst_103 = arith.constant 5.000000e-02 : f32
    %259 = vector.broadcast %cst_103 : f32 to vector<32x1xf32>
    %260 = arith.mulf %258, %259 : vector<32x1xf32>
    %261 = vector.broadcast %260 : vector<32x1xf32> to vector<32x10xf32>
    %262 = arith.subf %255, %261 : vector<32x10xf32>
    %263 = arith.mulf %262, %262 : vector<32x10xf32>
    %cst_104 = arith.constant dense<0.000000e+00> : vector<32xf32>
    %264 = vector.multi_reduction <add>, %263, %cst_104 [1] : vector<32x10xf32> to vector<32xf32>
    %265 = vector.shape_cast %264 : vector<32xf32> to vector<32x1xf32>
    %cst_105 = arith.constant dense<0.000000e+00> : vector<32x1xf32>
    %266 = tpu.matmul %217, %265, %cst_105 {dimension_numbers = #tpu.dot_dimension_numbers<[1], [0], [0], [1], [0, 0, 1, 1], [], []>} : vector<32x32xf32>, vector<32x1xf32>, vector<32x1xf32> -> vector<32x1xf32>
    %cst_106 = arith.constant 5.000000e-02 : f32
    %267 = vector.broadcast %cst_106 : f32 to vector<32x1xf32>
    %268 = arith.mulf %266, %267 : vector<32x1xf32>
    %269 = vector.extract_strided_slice %216 {offsets = [0, 1], sizes = [32, 1], strides = [1, 1]} : vector<32x3xf32> to vector<32x1xf32>
    %270 = vector.broadcast %269 : vector<32x1xf32> to vector<32x10xf32>
    %271 = arith.mulf %270, %262 : vector<32x10xf32>
    %cst_107 = arith.constant 9.99999974E-6 : f32
    %272 = vector.broadcast %cst_107 : f32 to vector<32x1xf32>
    %273 = arith.addf %268, %272 : vector<32x1xf32>
    %274 = math.rsqrt %273 : vector<32x1xf32>
    %275 = vector.broadcast %274 : vector<32x1xf32> to vector<32x10xf32>
    %276 = arith.mulf %271, %275 : vector<32x10xf32>
    %277 = vector.extract_strided_slice %216 {offsets = [0, 2], sizes = [32, 1], strides = [1, 1]} : vector<32x3xf32> to vector<32x1xf32>
    %278 = vector.broadcast %277 : vector<32x1xf32> to vector<32x10xf32>
    %279 = arith.addf %276, %278 : vector<32x10xf32>
    %cst_108 = arith.constant 0.000000e+00 : f32
    %280 = vector.broadcast %cst_108 : f32 to vector<32x10xf32>
    %281 = arith.maximumf %279, %280 : vector<32x10xf32>
    %cst_109 = arith.constant dense<0.000000e+00> : vector<32xf32>
    %282 = vector.multi_reduction <add>, %281, %cst_109 [1] : vector<32x10xf32> to vector<32xf32>
    %283 = vector.shape_cast %282 : vector<32xf32> to vector<32x1xf32>
    %cst_110 = arith.constant 1.000000e+01 : f32
    %284 = vector.broadcast %cst_110 : f32 to vector<32x1xf32>
    %285 = arith.divf %283, %284 : vector<32x1xf32>
    %c0_111 = arith.constant 0 : index
    %c0_112 = arith.constant 0 : index
    %c0_113 = arith.constant 0 : index
    %286 = vector.load %arg18[%c0_111, %c0_112, %c0_113] : memref<1x32x1xf32, #tpu.memory_space<vmem>>, vector<1x32x1xf32>
    %287 = vector.shape_cast %286 : vector<1x32x1xf32> to vector<32x1xf32>
    %288 = vector.shape_cast %285 : vector<32x1xf32> to vector<1x32x1xf32>
    tpu.vector_store %arg18[%c0_111, %c0_112, %c0_113], %288 {strides = array<i32>} : memref<1x32x1xf32, #tpu.memory_space<vmem>>, vector<1x32x1xf32>,
    return
  }
  func.func @transform_0(%arg0: i32) -> (i32, i32, i32) {
    %c0_i32 = arith.constant 0 : i32
    %c0_i32_0 = arith.constant 0 : i32
    %c0_i32_1 = arith.constant 0 : i32
    return %arg0, %c0_i32, %c0_i32_0 : i32, i32, i32
  }
  func.func @transform_1(%arg0: i32) -> (i32, i32) {
    %c0_i32 = arith.constant 0 : i32
    %c0_i32_0 = arith.constant 0 : i32
    %c0_i32_1 = arith.constant 0 : i32
    return %c0_i32, %c0_i32_0 : i32, i32
  }
  func.func @transform_2(%arg0: i32) -> (i32, i32, i32, i32) {
    %c0_i32 = arith.constant 0 : i32
    %c0_i32_0 = arith.constant 0 : i32
    %c0_i32_1 = arith.constant 0 : i32
    %c0_i32_2 = arith.constant 0 : i32
    return %arg0, %c0_i32, %c0_i32_0, %c0_i32_1 : i32, i32, i32, i32
  }
  func.func @transform_3(%arg0: i32) -> (i32, i32, i32) {
    %c0_i32 = arith.constant 0 : i32
    %c0_i32_0 = arith.constant 0 : i32
    %c0_i32_1 = arith.constant 0 : i32
    return %arg0, %c0_i32, %c0_i32_0 : i32, i32, i32
  }
  func.func @transform_4(%arg0: i32) -> (i32, i32) {
    %c0_i32 = arith.constant 0 : i32
    %c0_i32_0 = arith.constant 0 : i32
    %c0_i32_1 = arith.constant 0 : i32
    return %c0_i32, %c0_i32_0 : i32, i32
  }
  func.func @transform_5(%arg0: i32) -> (i32, i32) {
    %c0_i32 = arith.constant 0 : i32
    %c0_i32_0 = arith.constant 0 : i32
    %c0_i32_1 = arith.constant 0 : i32
    return %c0_i32, %c0_i32_0 : i32, i32
  }
  func.func @transform_6(%arg0: i32) -> (i32, i32, i32, i32) {
    %c0_i32 = arith.constant 0 : i32
    %c0_i32_0 = arith.constant 0 : i32
    %c0_i32_1 = arith.constant 0 : i32
    %c0_i32_2 = arith.constant 0 : i32
    return %arg0, %c0_i32, %c0_i32_0, %c0_i32_1 : i32, i32, i32, i32
  }
  func.func @transform_7(%arg0: i32) -> (i32, i32, i32) {
    %c0_i32 = arith.constant 0 : i32
    %c0_i32_0 = arith.constant 0 : i32
    %c0_i32_1 = arith.constant 0 : i32
    return %arg0, %c0_i32, %c0_i32_0 : i32, i32, i32
  }
  func.func @transform_8(%arg0: i32) -> (i32, i32) {
    %c0_i32 = arith.constant 0 : i32
    %c0_i32_0 = arith.constant 0 : i32
    %c0_i32_1 = arith.constant 0 : i32
    return %c0_i32, %c0_i32_0 : i32, i32
  }
  func.func @transform_9(%arg0: i32) -> (i32, i32) {
    %c0_i32 = arith.constant 0 : i32
    %c0_i32_0 = arith.constant 0 : i32
    %c0_i32_1 = arith.constant 0 : i32
    return %c0_i32, %c0_i32_0 : i32, i32
  }
  func.func @transform_10(%arg0: i32) -> (i32, i32, i32, i32) {
    %c0_i32 = arith.constant 0 : i32
    %c0_i32_0 = arith.constant 0 : i32
    %c0_i32_1 = arith.constant 0 : i32
    %c0_i32_2 = arith.constant 0 : i32
    return %arg0, %c0_i32, %c0_i32_0, %c0_i32_1 : i32, i32, i32, i32
  }
  func.func @transform_11(%arg0: i32) -> (i32, i32, i32) {
    %c0_i32 = arith.constant 0 : i32
    %c0_i32_0 = arith.constant 0 : i32
    %c0_i32_1 = arith.constant 0 : i32
    return %arg0, %c0_i32, %c0_i32_0 : i32, i32, i32
  }
  func.func @transform_12(%arg0: i32) -> (i32, i32) {
    %c0_i32 = arith.constant 0 : i32
    %c0_i32_0 = arith.constant 0 : i32
    %c0_i32_1 = arith.constant 0 : i32
    return %c0_i32, %c0_i32_0 : i32, i32
  }
  func.func @transform_13(%arg0: i32) -> (i32, i32) {
    %c0_i32 = arith.constant 0 : i32
    %c0_i32_0 = arith.constant 0 : i32
    %c0_i32_1 = arith.constant 0 : i32
    return %c0_i32, %c0_i32_0 : i32, i32
  }
  func.func @transform_14(%arg0: i32) -> (i32, i32, i32, i32) {
    %c0_i32 = arith.constant 0 : i32
    %c0_i32_0 = arith.constant 0 : i32
    %c0_i32_1 = arith.constant 0 : i32
    %c0_i32_2 = arith.constant 0 : i32
    return %arg0, %c0_i32, %c0_i32_0, %c0_i32_1 : i32, i32, i32, i32
  }
  func.func @transform_15(%arg0: i32) -> (i32, i32, i32) {
    %c0_i32 = arith.constant 0 : i32
    %c0_i32_0 = arith.constant 0 : i32
    %c0_i32_1 = arith.constant 0 : i32
    return %arg0, %c0_i32, %c0_i32_0 : i32, i32, i32
  }
  func.func @transform_16(%arg0: i32) -> (i32, i32) {
    %c0_i32 = arith.constant 0 : i32
    %c0_i32_0 = arith.constant 0 : i32
    %c0_i32_1 = arith.constant 0 : i32
    return %c0_i32, %c0_i32_0 : i32, i32
  }
  func.func @transform_17(%arg0: i32) -> (i32, i32, i32) {
    %c0_i32 = arith.constant 0 : i32
    %c0_i32_0 = arith.constant 0 : i32
    %c0_i32_1 = arith.constant 0 : i32
    return %arg0, %c0_i32, %c0_i32_0 : i32, i32, i32
  }
}

</mosaic_0001>

<llo_original>
// kernel: pcconvnet_forward.1
$region0: #{pcconvnet_forward.1}
  #allocation0 [shape = 'u32[]', space=smem, size = 0x4, offset = 0x4, fixed_abs, tag = 'smem constant byte address 0x4 - core index']
  #allocation1 [shape = 'u32[72,128]{1,0:T(1,128)}', space=vmem, size = 0x9000, scoped, tag = 'internal scratch']
  %s0 = inlined_call_operand.vmem [shape: f32[1,2,1000], index: 0, kind: input, shape index: {}]
  %s1 = inlined_call_operand.vmem [shape: f32[994,332], index: 1, kind: input, shape index: {}]
  %s2 = inlined_call_operand.vmem [shape: f32[1,7,8,2], index: 2, kind: input, shape index: {}]
  %s3 = inlined_call_operand.vmem [shape: f32[1,8,3], index: 3, kind: input, shape index: {}]
  %s4 = inlined_call_operand.vmem [shape: f32[8,8], index: 4, kind: input, shape index: {}]
  %s5 = inlined_call_operand.hbm [shape: f32[325,109], index: 5, kind: input, shape index: {}]
  %s6 = inlined_call_operand.vmem [shape: f32[1,7,16,8], index: 6, kind: input, shape index: {}]
  %s7 = inlined_call_operand.vmem [shape: f32[1,16,3], index: 7, kind: input, shape index: {}]
  %s8 = inlined_call_operand.hbm [shape: f32[16,16], index: 8, kind: input, shape index: {}]
  %s9 = inlined_call_operand.hbm [shape: f32[103,35], index: 9, kind: input, shape index: {}]
  %s10 = inlined_call_operand.vmem [shape: f32[1,7,32,16], index: 10, kind: input, shape index: {}]
  %s11 = inlined_call_operand.vmem [shape: f32[1,32,3], index: 11, kind: input, shape index: {}]
  %s12 = inlined_call_operand.vmem [shape: f32[32,32], index: 12, kind: input, shape index: {}, may-alias: {12,16}]
  %s13 = inlined_call_operand.hbm [shape: f32[28,10], index: 13, kind: input, shape index: {}]
  %s14 = inlined_call_operand.vmem [shape: f32[1,7,32,32], index: 14, kind: input, shape index: {}]
  %s15 = inlined_call_operand.vmem [shape: f32[1,32,3], index: 15, kind: input, shape index: {}]
  %s16 = inlined_call_operand.vmem [shape: f32[32,32], index: 16, kind: input, shape index: {}, may-alias: {12,16}]
  %s17 = inlined_call_operand.vmem [shape: f32[1,32,1], index: 17, kind: output, shape index: {}]
  %s18 = sld [smem:[#allocation0]]
  $region94: #{pcconvnet_forward.1} parent=0
    _
  %s20 = ssub.s32 1, %s18
  %s21 = scalar_select 0, %s20, %s18
  $region1: #{pcconvnet_forward.1} parent=0
    #allocation2 [shape = 'u8[167936]{0}', space=vmem, size = 0x29000, scoped, tag = 'input window, operand 5, single buffered']
    #allocation3 [shape = 's32[1]{0}', space=sflag, size = 0x4, scoped, tag = 'scoped memory for pcconvnet_forward.1']
    #allocation4 [shape = 'u8[8192]{0}', space=vmem, size = 0x2000, scoped, tag = 'input window, operand 8, single buffered']
    #allocation5 [shape = 's32[1]{0}', space=sflag, size = 0x4, scoped, tag = 'scoped memory for pcconvnet_forward.1']
    #allocation6 [shape = 'u8[53248]{0}', space=vmem, size = 0xd000, scoped, tag = 'input window, operand 9, single buffered']
    #allocation7 [shape = 'u8[16384]{0}', space=vmem, size = 0x4000, scoped, tag = 'input window, operand 13, single buffered']
    #allocation8 [shape = 's32[1]{0}', space=sflag, size = 0x4, scoped, tag = 'scoped memory for pcconvnet_forward.1']
    %22 = vsyncpa [#allocation3], 0
    %23 = vsyncpa [#allocation5], 0
    %24 = vsyncpa [#allocation8], 0
    // Predicated region
    $region2: #{pcconvnet_forward.1} parent=1 // pred_check
      _
    $region3: #{pcconvnet_forward.1} parent=1 // pred_check_branch
      %26 = sbr.rel (0) target = $region5
    $region4: #{pcconvnet_forward.1} parent=1 // pred_region
      _
    $region5: #{pcconvnet_forward.1} parent=1 // pred_fallthru
      _
    // Predicated region
    $region6: #{pcconvnet_forward.1} parent=1 // pred_check
      _
    $region7: #{pcconvnet_forward.1} parent=1 // pred_check_branch
      %28 = sbr.rel (0) target = $region9
    $region8: #{pcconvnet_forward.1} parent=1 // pred_region
      _
    $region9: #{pcconvnet_forward.1} parent=1 // pred_fallthru
      _
    // Predicated region
    $region10: #{pcconvnet_forward.1} parent=1 // pred_check
      _
    $region11: #{pcconvnet_forward.1} parent=1 // pred_check_branch
      %30 = sbr.rel (0) target = $region13
    $region12: #{pcconvnet_forward.1} parent=1 // pred_region
      _
    $region13: #{pcconvnet_forward.1} parent=1 // pred_fallthru
      _
    // Predicated region
    $region14: #{pcconvnet_forward.1} parent=1 // pred_check
      _
    $region15: #{pcconvnet_forward.1} parent=1 // pred_check_branch
      %32 = sbr.rel (0) target = $region17
    $region16: #{pcconvnet_forward.1} parent=1 // pred_region
      _
    $region17: #{pcconvnet_forward.1} parent=1 // pred_fallthru
      _
    // Predicated region
    $region18: #{pcconvnet_forward.1} parent=1 // pred_check
      _
    $region19: #{pcconvnet_forward.1} parent=1 // pred_check_branch
      %34 = sbr.rel (0) target = $region21
    $region20: #{pcconvnet_forward.1} parent=1 // pred_region
      _
    $region21: #{pcconvnet_forward.1} parent=1 // pred_fallthru
      _
    // Predicated region
    $region22: #{pcconvnet_forward.1} parent=1 // pred_check
      _
    $region23: #{pcconvnet_forward.1} parent=1 // pred_check_branch
      %36 = sbr.rel (0) target = $region25
    $region24: #{pcconvnet_forward.1} parent=1 // pred_region
      %38 = vsyncadd [#allocation3], 0
      %s39 = sshll.u32 %s5, 4
      %s40 = int_to_ptr.hbm [resolvable:$true] %s39
      %s41 = sshll.u32 [#allocation2], 4
      %s42 = int_to_ptr.vmem [resolvable:$true] %s41
      %47 = dma.hbm_to_vmem [thread:$0]  %s40, 5248, %s42, [#allocation3], 128, 128, 8
    $region25: #{pcconvnet_forward.1} parent=1 // pred_fallthru
      _
    // Predicated region
    $region26: #{pcconvnet_forward.1} parent=1 // pred_check
      _
    $region27: #{pcconvnet_forward.1} parent=1 // pred_check_branch
      %49 = sbr.rel (0) target = $region29
    $region28: #{pcconvnet_forward.1} parent=1 // pred_region
      _
    $region29: #{pcconvnet_forward.1} parent=1 // pred_fallthru
      _
    // Predicated region
    $region30: #{pcconvnet_forward.1} parent=1 // pred_check
      _
    $region31: #{pcconvnet_forward.1} parent=1 // pred_check_branch
      %51 = sbr.rel (0) target = $region33
    $region32: #{pcconvnet_forward.1} parent=1 // pred_region
      _
    $region33: #{pcconvnet_forward.1} parent=1 // pred_fallthru
      _
    // Predicated region
    $region34: #{pcconvnet_forward.1} parent=1 // pred_check
      _
    $region35: #{pcconvnet_forward.1} parent=1 // pred_check_branch
      %53 = sbr.rel (0) target = $region37
    $region36: #{pcconvnet_forward.1} parent=1 // pred_region
      %55 = vsyncadd [#allocation5], 0
      %s56 = sshll.u32 %s8, 4
      %s57 = int_to_ptr.hbm [resolvable:$true] %s56
      %s58 = sshll.u32 [#allocation4], 4
      %s59 = int_to_ptr.vmem [resolvable:$true] %s58
      %64 = dma.hbm_to_vmem [thread:$0]  %s57, 256, %s59, [#allocation5], 128, 128, 8
    $region37: #{pcconvnet_forward.1} parent=1 // pred_fallthru
      _
    // Predicated region
    $region38: #{pcconvnet_forward.1} parent=1 // pred_check
      _
    $region39: #{pcconvnet_forward.1} parent=1 // pred_check_branch
      %66 = sbr.rel (0) target = $region41
    $region40: #{pcconvnet_forward.1} parent=1 // pred_region
      %68 = vsyncadd [#allocation5], 0
      %s69 = sshll.u32 %s9, 4
      %s70 = int_to_ptr.hbm [resolvable:$true] %s69
      %s71 = sshll.u32 [#allocation6], 4
      %s72 = int_to_ptr.vmem [resolvable:$true] %s71
      %77 = dma.hbm_to_vmem [thread:$0]  %s70, 1664, %s72, [#allocation5], 128, 128, 8
    $region41: #{pcconvnet_forward.1} parent=1 // pred_fallthru
      _
    // Predicated region
    $region42: #{pcconvnet_forward.1} parent=1 // pred_check
      _
    $region43: #{pcconvnet_forward.1} parent=1 // pred_check_branch
      %79 = sbr.rel (0) target = $region45
    $region44: #{pcconvnet_forward.1} parent=1 // pred_region
      _
    $region45: #{pcconvnet_forward.1} parent=1 // pred_fallthru
      _
    // Predicated region
    $region46: #{pcconvnet_forward.1} parent=1 // pred_check
      _
    $region47: #{pcconvnet_forward.1} parent=1 // pred_check_branch
      %81 = sbr.rel (0) target = $region49
    $region48: #{pcconvnet_forward.1} parent=1 // pred_region
      _
    $region49: #{pcconvnet_forward.1} parent=1 // pred_fallthru
      _
    // Predicated region
    $region50: #{pcconvnet_forward.1} parent=1 // pred_check
      _
    $region51: #{pcconvnet_forward.1} parent=1 // pred_check_branch
      %83 = sbr.rel (0) target = $region53
    $region52: #{pcconvnet_forward.1} parent=1 // pred_region
      _
    $region53: #{pcconvnet_forward.1} parent=1 // pred_fallthru
      _
    // Predicated region
    $region54: #{pcconvnet_forward.1} parent=1 // pred_check
      _
    $region55: #{pcconvnet_forward.1} parent=1 // pred_check_branch
      %85 = sbr.rel (0) target = $region57
    $region56: #{pcconvnet_forward.1} parent=1 // pred_region
      %87 = vsyncadd [#allocation8], 0
      %s88 = sshll.u32 %s13, 4
      %s89 = int_to_ptr.hbm [resolvable:$true] %s88
      %s90 = sshll.u32 [#allocation7], 4
      %s91 = int_to_ptr.vmem [resolvable:$true] %s90
      %96 = dma.hbm_to_vmem [thread:$0]  %s89, 512, %s91, [#allocation8], 128, 128, 8
    $region57: #{pcconvnet_forward.1} parent=1 // pred_fallthru
      _
    // Predicated region
    $region58: #{pcconvnet_forward.1} parent=1 // pred_check
      _
    $region59: #{pcconvnet_forward.1} parent=1 // pred_check_branch
      %98 = sbr.rel (0) target = $region61
    $region60: #{pcconvnet_forward.1} parent=1 // pred_region
      _
    $region61: #{pcconvnet_forward.1} parent=1 // pred_fallthru
      _
    // Predicated region
    $region62: #{pcconvnet_forward.1} parent=1 // pred_check
      _
    $region63: #{pcconvnet_forward.1} parent=1 // pred_check_branch
      %100 = sbr.rel (0) target = $region65
    $region64: #{pcconvnet_forward.1} parent=1 // pred_region
      _
    $region65: #{pcconvnet_forward.1} parent=1 // pred_fallthru
      _
    // Predicated region
    $region66: #{pcconvnet_forward.1} parent=1 // pred_check
      _
    $region67: #{pcconvnet_forward.1} parent=1 // pred_check_branch
      %102 = sbr.rel (0) target = $region69
    $region68: #{pcconvnet_forward.1} parent=1 // pred_region
      _
    $region69: #{pcconvnet_forward.1} parent=1 // pred_fallthru
      _
    // Predicated region
    $region70: #{pcconvnet_forward.1} parent=1 // pred_check
      _
    $region71: #{pcconvnet_forward.1} parent=1 // pred_check_branch
      %104 = sbr.rel (0) target = $region73
    $region72: #{pcconvnet_forward.1} parent=1 // pred_region
      %106 = dma.done [#allocation3], 5248
    $region73: #{pcconvnet_forward.1} parent=1 // pred_fallthru
      _
    // Predicated region
    $region74: #{pcconvnet_forward.1} parent=1 // pred_check
      _
    $region75: #{pcconvnet_forward.1} parent=1 // pred_check_branch
      %108 = sbr.rel (0) target = $region77
    $region76: #{pcconvnet_forward.1} parent=1 // pred_region
      %110 = dma.done [#allocation5], 256
    $region77: #{pcconvnet_forward.1} parent=1 // pred_fallthru
      _
    // Predicated region
    $region78: #{pcconvnet_forward.1} parent=1 // pred_check
      _
    $region79: #{pcconvnet_forward.1} parent=1 // pred_check_branch
      %112 = sbr.rel (0) target = $region81
    $region80: #{pcconvnet_forward.1} parent=1 // pred_region
      %114 = dma.done [#allocation5], 1664
    $region81: #{pcconvnet_forward.1} parent=1 // pred_fallthru
      _
    // Predicated region
    $region82: #{pcconvnet_forward.1} parent=1 // pred_check
      _
    $region83: #{pcconvnet_forward.1} parent=1 // pred_check_branch
      %116 = sbr.rel (0) target = $region85
    $region84: #{pcconvnet_forward.1} parent=1 // pred_region
      %118 = dma.done [#allocation8], 512
    $region85: #{pcconvnet_forward.1} parent=1 // pred_fallthru
      _
    %v119 = vld [vmem:[%s0] sm:$0xff]
    %v120 = vld [vmem:[%s0 + $0x8] sm:$0xff]
    %v121 = vld [vmem:[%s1] sm:$0xff]
    %v122 = vld [vmem:[%s1 + $0x8] sm:$0xff]
    %v123 = vld [vmem:[%s1 + $0x10] sm:$0xff]
    %v124 = vld [vmem:[%s1 + $0x18] sm:$0xff]
    %v125 = vld [vmem:[%s1 + $0x20] sm:$0xff]
    %v126 = vld [vmem:[%s1 + $0x28] sm:$0xff]
    %v127 = vld [vmem:[%s1 + $0x30] sm:$0xff]
    %v128 = vld [vmem:[%s1 + $0x38] sm:$0xff]
    %v129 = vld [vmem:[%s1 + $0x40] sm:$0xff]
    %v130 = vld [vmem:[%s1 + $0x48] sm:$0xff]
    %v131 = vld [vmem:[%s1 + $0x50] sm:$0xff]
    %v132 = vld [vmem:[%s1 + $0x58] sm:$0xff]
    %v133 = vld [vmem:[%s1 + $0x60] sm:$0xff]
    %v134 = vld [vmem:[%s1 + $0x68] sm:$0xff]
    %v135 = vld [vmem:[%s1 + $0x70] sm:$0xff]
    %v136 = vld [vmem:[%s1 + $0x78] sm:$0xff]
    %v137 = vld [vmem:[%s1 + $0x80] sm:$0xff]
    %v138 = vld [vmem:[%s1 + $0x88] sm:$0xff]
    %v139 = vld [vmem:[%s1 + $0x90] sm:$0xff]
    %v140 = vld [vmem:[%s1 + $0x98] sm:$0xff]
    %v141 = vld [vmem:[%s1 + $0xa0] sm:$0xff]
    %v142 = vld [vmem:[%s1 + $0xa8] sm:$0xff]
    %v143 = vld [vmem:[%s1 + $0xb0] sm:$0xff]
    %v144 = vld [vmem:[%s1 + $0xb8] sm:$0xff]
    %v145 = vld [vmem:[%s1 + $0xc0] sm:$0xff]
    %v146 = vld [vmem:[%s1 + $0xc8] sm:$0xff]
    %v147 = vld [vmem:[%s1 + $0xd0] sm:$0xff]
    %v148 = vld [vmem:[%s1 + $0xd8] sm:$0xff]
    %v149 = vld [vmem:[%s1 + $0xe0] sm:$0xff]
    %v150 = vld [vmem:[%s1 + $0xe8] sm:$0xff]
    %v151 = vld [vmem:[%s1 + $0xf0] sm:$0xff]
    %v152 = vld [vmem:[%s1 + $0xf8] sm:$0xff]
    %v153 = vld [vmem:[%s1 + $0x100] sm:$0xff]
    %v154 = vld [vmem:[%s1 + $0x108] sm:$0xff]
    %v155 = vld [vmem:[%s1 + $0x110] sm:$0xff]
    %v156 = vld [vmem:[%s1 + $0x118] sm:$0xff]
    %v157 = vld [vmem:[%s1 + $0x120] sm:$0xff]
    %v158 = vld [vmem:[%s1 + $0x128] sm:$0xff]
    %v159 = vld [vmem:[%s1 + $0x130] sm:$0xff]
    %v160 = vld [vmem:[%s1 + $0x138] sm:$0xff]
    %v161 = vld [vmem:[%s1 + $0x140] sm:$0xff]
    %v162 = vld [vmem:[%s1 + $0x148] sm:$0xff]
    %v163 = vld [vmem:[%s1 + $0x150] sm:$0xff]
    %v164 = vld [vmem:[%s1 + $0x158] sm:$0xff]
    %v165 = vld [vmem:[%s1 + $0x160] sm:$0xff]
    %v166 = vld [vmem:[%s1 + $0x168] sm:$0xff]
    %v167 = vld [vmem:[%s1 + $0x170] sm:$0xff]
    %v168 = vld [vmem:[%s1 + $0x178] sm:$0xff]
    %v169 = vld [vmem:[%s1 + $0x180] sm:$0xff]
    %v170 = vld [vmem:[%s1 + $0x188] sm:$0xff]
    %v171 = vld [vmem:[%s1 + $0x190] sm:$0xff]
    %v172 = vld [vmem:[%s1 + $0x198] sm:$0xff]
    %v173 = vld [vmem:[%s1 + $0x1a0] sm:$0xff]
    %v174 = vld [vmem:[%s1 + $0x1a8] sm:$0xff]
    %v175 = vld [vmem:[%s1 + $0x1b0] sm:$0xff]
    %v176 = vld [vmem:[%s1 + $0x1b8] sm:$0xff]
    %v177 = vld [vmem:[%s1 + $0x1c0] sm:$0xff]
    %v178 = vld [vmem:[%s1 + $0x1c8] sm:$0xff]
    %v179 = vld [vmem:[%s1 + $0x1d0] sm:$0xff]
    %v180 = vld [vmem:[%s1 + $0x1d8] sm:$0xff]
    %v181 = vld [vmem:[%s1 + $0x1e0] sm:$0xff]
    %v182 = vld [vmem:[%s1 + $0x1e8] sm:$0xff]
    %v183 = vld [vmem:[%s1 + $0x1f0] sm:$0xff]
    %v184 = vld [vmem:[%s1 + $0x1f8] sm:$0xff]
    %v185 = vld [vmem:[%s1 + $0x200] sm:$0xff]
    %v186 = vld [vmem:[%s1 + $0x208] sm:$0xff]
    %v187 = vld [vmem:[%s1 + $0x210] sm:$0xff]
    %v188 = vld [vmem:[%s1 + $0x218] sm:$0xff]
    %v189 = vld [vmem:[%s1 + $0x220] sm:$0xff]
    %v190 = vld [vmem:[%s1 + $0x228] sm:$0xff]
    %v191 = vld [vmem:[%s1 + $0x230] sm:$0xff]
    %v192 = vld [vmem:[%s1 + $0x238] sm:$0xff]
    %v193 = vld [vmem:[%s1 + $0x240] sm:$0xff]
    %v194 = vld [vmem:[%s1 + $0x248] sm:$0xff]
    %v195 = vld [vmem:[%s1 + $0x250] sm:$0xff]
    %v196 = vld [vmem:[%s1 + $0x258] sm:$0xff]
    %v197 = vld [vmem:[%s1 + $0x260] sm:$0xff]
    %v198 = vld [vmem:[%s1 + $0x268] sm:$0xff]
    %v199 = vld [vmem:[%s1 + $0x270] sm:$0xff]
    %v200 = vld [vmem:[%s1 + $0x278] sm:$0xff]
    %v201 = vld [vmem:[%s1 + $0x280] sm:$0xff]
    %v202 = vld [vmem:[%s1 + $0x288] sm:$0xff]
    %v203 = vld [vmem:[%s1 + $0x290] sm:$0xff]
    %v204 = vld [vmem:[%s1 + $0x298] sm:$0xff]
    %v205 = vld [vmem:[%s1 + $0x2a0] sm:$0xff]
    %v206 = vld [vmem:[%s1 + $0x2a8] sm:$0xff]
    %v207 = vld [vmem:[%s1 + $0x2b0] sm:$0xff]
    %v208 = vld [vmem:[%s1 + $0x2b8] sm:$0xff]
    %v209 = vld [vmem:[%s1 + $0x2c0] sm:$0xff]
    %v210 = vld [vmem:[%s1 + $0x2c8] sm:$0xff]
    %v211 = vld [vmem:[%s1 + $0x2d0] sm:$0xff]
    %v212 = vld [vmem:[%s1 + $0x2d8] sm:$0xff]
    %v213 = vld [vmem:[%s1 + $0x2e0] sm:$0xff]
    %v214 = vld [vmem:[%s1 + $0x2e8] sm:$0xff]
    %v215 = vld [vmem:[%s1 + $0x2f0] sm:$0xff]
    %v216 = vld [vmem:[%s1 + $0x2f8] sm:$0xff]
    %v217 = vld [vmem:[%s1 + $0x300] sm:$0xff]
    %v218 = vld [vmem:[%s1 + $0x308] sm:$0xff]
    %v219 = vld [vmem:[%s1 + $0x310] sm:$0xff]
    %v220 = vld [vmem:[%s1 + $0x318] sm:$0xff]
    %v221 = vld [vmem:[%s1 + $0x320] sm:$0xff]
    %v222 = vld [vmem:[%s1 + $0x328] sm:$0xff]
    %v223 = vld [vmem:[%s1 + $0x330] sm:$0xff]
    %v224 = vld [vmem:[%s1 + $0x338] sm:$0xff]
    %v225 = vld [vmem:[%s1 + $0x340] sm:$0xff]
    %v226 = vld [vmem:[%s1 + $0x348] sm:$0xff]
    %v227 = vld [vmem:[%s1 + $0x350] sm:$0xff]
    %v228 = vld [vmem:[%s1 + $0x358] sm:$0xff]
    %v229 = vld [vmem:[%s1 + $0x360] sm:$0xff]
    %v230 = vld [vmem:[%s1 + $0x368] sm:$0xff]
    %v231 = vld [vmem:[%s1 + $0x370] sm:$0xff]
    %v232 = vld [vmem:[%s1 + $0x378] sm:$0xff]
    %v233 = vld [vmem:[%s1 + $0x380] sm:$0xff]
    %v234 = vld [vmem:[%s1 + $0x388] sm:$0xff]
    %v235 = vld [vmem:[%s1 + $0x390] sm:$0xff]
    %v236 = vld [vmem:[%s1 + $0x398] sm:$0xff]
    %v237 = vld [vmem:[%s1 + $0x3a0] sm:$0xff]
    %v238 = vld [vmem:[%s1 + $0x3a8] sm:$0xff]
    %v239 = vld [vmem:[%s1 + $0x3b0] sm:$0xff]
    %v240 = vld [vmem:[%s1 + $0x3b8] sm:$0xff]
    %v241 = vld [vmem:[%s1 + $0x3c0] sm:$0xff]
    %v242 = vld [vmem:[%s1 + $0x3c8] sm:$0xff]
    %v243 = vld [vmem:[%s1 + $0x3d0] sm:$0xff]
    %v244 = vld [vmem:[%s1 + $0x3d8] sm:$0xff]
    %v245 = vld [vmem:[%s1 + $0x3e0] sm:$0xff]
    %v246 = vld [vmem:[%s1 + $0x3e8] sm:$0xff]
    %v247 = vld [vmem:[%s1 + $0x3f0] sm:$0xff]
    %v248 = vld [vmem:[%s1 + $0x3f8] sm:$0xff]
    %v249 = vld [vmem:[%s1 + $0x400] sm:$0xff]
    %v250 = vld [vmem:[%s1 + $0x408] sm:$0xff]
    %v251 = vld [vmem:[%s1 + $0x410] sm:$0xff]
    %v252 = vld [vmem:[%s1 + $0x418] sm:$0xff]
    %v253 = vld [vmem:[%s1 + $0x420] sm:$0xff]
    %v254 = vld [vmem:[%s1 + $0x428] sm:$0xff]
    %v255 = vld [vmem:[%s1 + $0x430] sm:$0xff]
    %v256 = vld [vmem:[%s1 + $0x438] sm:$0xff]
    %v257 = vld [vmem:[%s1 + $0x440] sm:$0xff]
    %v258 = vld [vmem:[%s1 + $0x448] sm:$0xff]
    %v259 = vld [vmem:[%s1 + $0x450] sm:$0xff]
    %v260 = vld [vmem:[%s1 + $0x458] sm:$0xff]
    %v261 = vld [vmem:[%s1 + $0x460] sm:$0xff]
    %v262 = vld [vmem:[%s1 + $0x468] sm:$0xff]
    %v263 = vld [vmem:[%s1 + $0x470] sm:$0xff]
    %v264 = vld [vmem:[%s1 + $0x478] sm:$0xff]
    %v265 = vld [vmem:[%s1 + $0x480] sm:$0xff]
    %v266 = vld [vmem:[%s1 + $0x488] sm:$0xff]
    %v267 = vld [vmem:[%s1 + $0x490] sm:$0xff]
    %v268 = vld [vmem:[%s1 + $0x498] sm:$0xff]
    %v269 = vld [vmem:[%s1 + $0x4a0] sm:$0xff]
    %v270 = vld [vmem:[%s1 + $0x4a8] sm:$0xff]
    %v271 = vld [vmem:[%s1 + $0x4b0] sm:$0xff]
    %v272 = vld [vmem:[%s1 + $0x4b8] sm:$0xff]
    %v273 = vld [vmem:[%s1 + $0x4c0] sm:$0xff]
    %v274 = vld [vmem:[%s1 + $0x4c8] sm:$0xff]
    %v275 = vld [vmem:[%s1 + $0x4d0] sm:$0xff]
    %v276 = vld [vmem:[%s1 + $0x4d8] sm:$0xff]
    %v277 = vld [vmem:[%s1 + $0x4e0] sm:$0xff]
    %v278 = vld [vmem:[%s1 + $0x4e8] sm:$0xff]
    %v279 = vld [vmem:[%s1 + $0x4f0] sm:$0xff]
    %v280 = vld [vmem:[%s1 + $0x4f8] sm:$0xff]
    %v281 = vld [vmem:[%s1 + $0x500] sm:$0xff]
    %v282 = vld [vmem:[%s1 + $0x508] sm:$0xff]
    %v283 = vld [vmem:[%s1 + $0x510] sm:$0xff]
    %v284 = vld [vmem:[%s1 + $0x518] sm:$0xff]
    %v285 = vld [vmem:[%s1 + $0x520] sm:$0xff]
    %v286 = vld [vmem:[%s1 + $0x528] sm:$0xff]
    %v287 = vld [vmem:[%s1 + $0x530] sm:$0xff]
    %v288 = vld [vmem:[%s1 + $0x538] sm:$0xff]
    %v289 = vld [vmem:[%s1 + $0x540] sm:$0xff]
    %v290 = vld [vmem:[%s1 + $0x548] sm:$0xff]
    %v291 = vld [vmem:[%s1 + $0x550] sm:$0xff]
    %v292 = vld [vmem:[%s1 + $0x558] sm:$0xff]
    %v293 = vld [vmem:[%s1 + $0x560] sm:$0xff]
    %v294 = vld [vmem:[%s1 + $0x568] sm:$0xff]
    %v295 = vld [vmem:[%s1 + $0x570] sm:$0xff]
    %v296 = vld [vmem:[%s1 + $0x578] sm:$0xff]
    %v297 = vld [vmem:[%s1 + $0x580] sm:$0xff]
    %v298 = vld [vmem:[%s1 + $0x588] sm:$0xff]
    %v299 = vld [vmem:[%s1 + $0x590] sm:$0xff]
    %v300 = vld [vmem:[%s1 + $0x598] sm:$0xff]
    %v301 = vld [vmem:[%s1 + $0x5a0] sm:$0xff]
    %v302 = vld [vmem:[%s1 + $0x5a8] sm:$0xff]
    %v303 = vld [vmem:[%s1 + $0x5b0] sm:$0xff]
    %v304 = vld [vmem:[%s1 + $0x5b8] sm:$0xff]
    %v305 = vld [vmem:[%s1 + $0x5c0] sm:$0xff]
    %v306 = vld [vmem:[%s1 + $0x5c8] sm:$0xff]
    %v307 = vld [vmem:[%s1 + $0x5d0] sm:$0xff]
    %v308 = vld [vmem:[%s1 + $0x5d8] sm:$0xff]
    %v309 = vld [vmem:[%s1 + $0x5e0] sm:$0xff]
    %v310 = vld [vmem:[%s1 + $0x5e8] sm:$0xff]
    %v311 = vld [vmem:[%s1 + $0x5f0] sm:$0xff]
    %v312 = vld [vmem:[%s1 + $0x5f8] sm:$0xff]
    %v313 = vld [vmem:[%s1 + $0x600] sm:$0xff]
    %v314 = vld [vmem:[%s1 + $0x608] sm:$0xff]
    %v315 = vld [vmem:[%s1 + $0x610] sm:$0xff]
    %v316 = vld [vmem:[%s1 + $0x618] sm:$0xff]
    %v317 = vld [vmem:[%s1 + $0x620] sm:$0xff]
    %v318 = vld [vmem:[%s1 + $0x628] sm:$0xff]
    %v319 = vld [vmem:[%s1 + $0x630] sm:$0xff]
    %v320 = vld [vmem:[%s1 + $0x638] sm:$0xff]
    %v321 = vld [vmem:[%s1 + $0x640] sm:$0xff]
    %v322 = vld [vmem:[%s1 + $0x648] sm:$0xff]
    %v323 = vld [vmem:[%s1 + $0x650] sm:$0xff]
    %v324 = vld [vmem:[%s1 + $0x658] sm:$0xff]
    %v325 = vld [vmem:[%s1 + $0x660] sm:$0xff]
    %v326 = vld [vmem:[%s1 + $0x668] sm:$0xff]
    %v327 = vld [vmem:[%s1 + $0x670] sm:$0xff]
    %v328 = vld [vmem:[%s1 + $0x678] sm:$0xff]
    %v329 = vld [vmem:[%s1 + $0x680] sm:$0xff]
    %v330 = vld [vmem:[%s1 + $0x688] sm:$0xff]
    %v331 = vld [vmem:[%s1 + $0x690] sm:$0xff]
    %v332 = vld [vmem:[%s1 + $0x698] sm:$0xff]
    %v333 = vld [vmem:[%s1 + $0x6a0] sm:$0xff]
    %v334 = vld [vmem:[%s1 + $0x6a8] sm:$0xff]
    %v335 = vld [vmem:[%s1 + $0x6b0] sm:$0xff]
    %v336 = vld [vmem:[%s1 + $0x6b8] sm:$0xff]
    %v337 = vld [vmem:[%s1 + $0x6c0] sm:$0xff]
    %v338 = vld [vmem:[%s1 + $0x6c8] sm:$0xff]
    %v339 = vld [vmem:[%s1 + $0x6d0] sm:$0xff]
    %v340 = vld [vmem:[%s1 + $0x6d8] sm:$0xff]
    %v341 = vld [vmem:[%s1 + $0x6e0] sm:$0xff]
    %v342 = vld [vmem:[%s1 + $0x6e8] sm:$0xff]
    %v343 = vld [vmem:[%s1 + $0x6f0] sm:$0xff]
    %v344 = vld [vmem:[%s1 + $0x6f8] sm:$0xff]
    %v345 = vld [vmem:[%s1 + $0x700] sm:$0xff]
    %v346 = vld [vmem:[%s1 + $0x708] sm:$0xff]
    %v347 = vld [vmem:[%s1 + $0x710] sm:$0xff]
    %v348 = vld [vmem:[%s1 + $0x718] sm:$0xff]
    %v349 = vld [vmem:[%s1 + $0x720] sm:$0xff]
    %v350 = vld [vmem:[%s1 + $0x728] sm:$0xff]
    %v351 = vld [vmem:[%s1 + $0x730] sm:$0xff]
    %v352 = vld [vmem:[%s1 + $0x738] sm:$0xff]
    %v353 = vld [vmem:[%s1 + $0x740] sm:$0xff]
    %v354 = vld [vmem:[%s1 + $0x748] sm:$0xff]
    %v355 = vld [vmem:[%s1 + $0x750] sm:$0xff]
    %v356 = vld [vmem:[%s1 + $0x758] sm:$0xff]
    %v357 = vld [vmem:[%s1 + $0x760] sm:$0xff]
    %v358 = vld [vmem:[%s1 + $0x768] sm:$0xff]
    %v359 = vld [vmem:[%s1 + $0x770] sm:$0xff]
    %v360 = vld [vmem:[%s1 + $0x778] sm:$0xff]
    %v361 = vld [vmem:[%s1 + $0x780] sm:$0xff]
    %v362 = vld [vmem:[%s1 + $0x788] sm:$0xff]
    %v363 = vld [vmem:[%s1 + $0x790] sm:$0xff]
    %v364 = vld [vmem:[%s1 + $0x798] sm:$0xff]
    %v365 = vld [vmem:[%s1 + $0x7a0] sm:$0xff]
    %v366 = vld [vmem:[%s1 + $0x7a8] sm:$0xff]
    %v367 = vld [vmem:[%s1 + $0x7b0] sm:$0xff]
    %v368 = vld [vmem:[%s1 + $0x7b8] sm:$0xff]
    %v369 = vld [vmem:[%s1 + $0x7c0] sm:$0xff]
    %v370 = vld [vmem:[%s1 + $0x7c8] sm:$0xff]
    %v371 = vld [vmem:[%s1 + $0x7d0] sm:$0xff]
    %v372 = vld [vmem:[%s1 + $0x7d8] sm:$0xff]
    %v373 = vld [vmem:[%s1 + $0x7e0] sm:$0xff]
    %v374 = vld [vmem:[%s1 + $0x7e8] sm:$0xff]
    %v375 = vld [vmem:[%s1 + $0x7f0] sm:$0xff]
    %v376 = vld [vmem:[%s1 + $0x7f8] sm:$0xff]
    %v377 = vld [vmem:[%s1 + $0x800] sm:$0xff]
    %v378 = vld [vmem:[%s1 + $0x808] sm:$0xff]
    %v379 = vld [vmem:[%s1 + $0x810] sm:$0xff]
    %v380 = vld [vmem:[%s1 + $0x818] sm:$0xff]
    %v381 = vld [vmem:[%s1 + $0x820] sm:$0xff]
    %v382 = vld [vmem:[%s1 + $0x828] sm:$0xff]
    %v383 = vld [vmem:[%s1 + $0x830] sm:$0xff]
    %v384 = vld [vmem:[%s1 + $0x838] sm:$0xff]
    %v385 = vld [vmem:[%s1 + $0x840] sm:$0xff]
    %v386 = vld [vmem:[%s1 + $0x848] sm:$0xff]
    %v387 = vld [vmem:[%s1 + $0x850] sm:$0xff]
    %v388 = vld [vmem:[%s1 + $0x858] sm:$0xff]
    %v389 = vld [vmem:[%s1 + $0x860] sm:$0xff]
    %v390 = vld [vmem:[%s1 + $0x868] sm:$0xff]
    %v391 = vld [vmem:[%s1 + $0x870] sm:$0xff]
    %v392 = vld [vmem:[%s1 + $0x878] sm:$0xff]
    %v393 = vld [vmem:[%s1 + $0x880] sm:$0xff]
    %v394 = vld [vmem:[%s1 + $0x888] sm:$0xff]
    %v395 = vld [vmem:[%s1 + $0x890] sm:$0xff]
    %v396 = vld [vmem:[%s1 + $0x898] sm:$0xff]
    %v397 = vld [vmem:[%s1 + $0x8a0] sm:$0xff]
    %v398 = vld [vmem:[%s1 + $0x8a8] sm:$0xff]
    %v399 = vld [vmem:[%s1 + $0x8b0] sm:$0xff]
    %v400 = vld [vmem:[%s1 + $0x8b8] sm:$0xff]
    %v401 = vld [vmem:[%s1 + $0x8c0] sm:$0xff]
    %v402 = vld [vmem:[%s1 + $0x8c8] sm:$0xff]
    %v403 = vld [vmem:[%s1 + $0x8d0] sm:$0xff]
    %v404 = vld [vmem:[%s1 + $0x8d8] sm:$0xff]
    %v405 = vld [vmem:[%s1 + $0x8e0] sm:$0xff]
    %v406 = vld [vmem:[%s1 + $0x8e8] sm:$0xff]
    %v407 = vld [vmem:[%s1 + $0x8f0] sm:$0xff]
    %v408 = vld [vmem:[%s1 + $0x8f8] sm:$0xff]
    %v409 = vld [vmem:[%s1 + $0x900] sm:$0xff]
    %v410 = vld [vmem:[%s1 + $0x908] sm:$0xff]
    %v411 = vld [vmem:[%s1 + $0x910] sm:$0xff]
    %v412 = vld [vmem:[%s1 + $0x918] sm:$0xff]
    %v413 = vld [vmem:[%s1 + $0x920] sm:$0xff]
    %v414 = vld [vmem:[%s1 + $0x928] sm:$0xff]
    %v415 = vld [vmem:[%s1 + $0x930] sm:$0xff]
    %v416 = vld [vmem:[%s1 + $0x938] sm:$0xff]
    %v417 = vld [vmem:[%s1 + $0x940] sm:$0xff]
    %v418 = vld [vmem:[%s1 + $0x948] sm:$0xff]
    %v419 = vld [vmem:[%s1 + $0x950] sm:$0xff]
    %v420 = vld [vmem:[%s1 + $0x958] sm:$0xff]
    %v421 = vld [vmem:[%s1 + $0x960] sm:$0xff]
    %v422 = vld [vmem:[%s1 + $0x968] sm:$0xff]
    %v423 = vld [vmem:[%s1 + $0x970] sm:$0xff]
    %v424 = vld [vmem:[%s1 + $0x978] sm:$0xff]
    %v425 = vld [vmem:[%s1 + $0x980] sm:$0xff]
    %v426 = vld [vmem:[%s1 + $0x988] sm:$0xff]
    %v427 = vld [vmem:[%s1 + $0x990] sm:$0xff]
    %v428 = vld [vmem:[%s1 + $0x998] sm:$0xff]
    %v429 = vld [vmem:[%s1 + $0x9a0] sm:$0xff]
    %v430 = vld [vmem:[%s1 + $0x9a8] sm:$0xff]
    %v431 = vld [vmem:[%s1 + $0x9b0] sm:$0xff]
    %v432 = vld [vmem:[%s1 + $0x9b8] sm:$0xff]
    %v433 = vld [vmem:[%s1 + $0x9c0] sm:$0xff]
    %v434 = vld [vmem:[%s1 + $0x9c8] sm:$0xff]
    %v435 = vld [vmem:[%s1 + $0x9d0] sm:$0xff]
    %v436 = vld [vmem:[%s1 + $0x9d8] sm:$0xff]
    %v437 = vld [vmem:[%s1 + $0x9e0] sm:$0xff]
    %v438 = vld [vmem:[%s1 + $0x9e8] sm:$0xff]
    %v439 = vld [vmem:[%s1 + $0x9f0] sm:$0xff]
    %v440 = vld [vmem:[%s1 + $0x9f8] sm:$0xff]
    %v441 = vld [vmem:[%s1 + $0xa00] sm:$0xff]
    %v442 = vld [vmem:[%s1 + $0xa08] sm:$0xff]
    %v443 = vld [vmem:[%s1 + $0xa10] sm:$0xff]
    %v444 = vld [vmem:[%s1 + $0xa18] sm:$0xff]
    %v445 = vld [vmem:[%s1 + $0xa20] sm:$0xff]
    %v446 = vld [vmem:[%s1 + $0xa28] sm:$0xff]
    %v447 = vld [vmem:[%s1 + $0xa30] sm:$0xff]
    %v448 = vld [vmem:[%s1 + $0xa38] sm:$0xff]
    %v449 = vld [vmem:[%s1 + $0xa40] sm:$0xff]
    %v450 = vld [vmem:[%s1 + $0xa48] sm:$0xff]
    %v451 = vld [vmem:[%s1 + $0xa50] sm:$0xff]
    %v452 = vld [vmem:[%s1 + $0xa58] sm:$0xff]
    %v453 = vld [vmem:[%s1 + $0xa60] sm:$0xff]
    %v454 = vld [vmem:[%s1 + $0xa68] sm:$0xff]
    %v455 = vld [vmem:[%s1 + $0xa70] sm:$0xff]
    %v456 = vld [vmem:[%s1 + $0xa78] sm:$0xff]
    %v457 = vld [vmem:[%s1 + $0xa80] sm:$0xff]
    %v458 = vld [vmem:[%s1 + $0xa88] sm:$0xff]
    %v459 = vld [vmem:[%s1 + $0xa90] sm:$0xff]
    %v460 = vld [vmem:[%s1 + $0xa98] sm:$0xff]
    %v461 = vld [vmem:[%s1 + $0xaa0] sm:$0xff]
    %v462 = vld [vmem:[%s1 + $0xaa8] sm:$0xff]
    %v463 = vld [vmem:[%s1 + $0xab0] sm:$0xff]
    %v464 = vld [vmem:[%s1 + $0xab8] sm:$0xff]
    %v465 = vld [vmem:[%s1 + $0xac0] sm:$0xff]
    %v466 = vld [vmem:[%s1 + $0xac8] sm:$0xff]
    %v467 = vld [vmem:[%s1 + $0xad0] sm:$0xff]
    %v468 = vld [vmem:[%s1 + $0xad8] sm:$0xff]
    %v469 = vld [vmem:[%s1 + $0xae0] sm:$0xff]
    %v470 = vld [vmem:[%s1 + $0xae8] sm:$0xff]
    %v471 = vld [vmem:[%s1 + $0xaf0] sm:$0xff]
    %v472 = vld [vmem:[%s1 + $0xaf8] sm:$0xff]
    %v473 = vld [vmem:[%s1 + $0xb00] sm:$0xff]
    %v474 = vld [vmem:[%s1 + $0xb08] sm:$0xff]
    %v475 = vld [vmem:[%s1 + $0xb10] sm:$0xff]
    %v476 = vld [vmem:[%s1 + $0xb18] sm:$0xff]
    %v477 = vld [vmem:[%s1 + $0xb20] sm:$0xff]
    %v478 = vld [vmem:[%s1 + $0xb28] sm:$0xff]
    %v479 = vld [vmem:[%s1 + $0xb30] sm:$0xff]
    %v480 = vld [vmem:[%s1 + $0xb38] sm:$0xff]
    %v481 = vld [vmem:[%s1 + $0xb40] sm:$0xff]
    %v482 = vld [vmem:[%s1 + $0xb48] sm:$0xff]
    %v483 = vld [vmem:[%s1 + $0xb50] sm:$0xff]
    %v484 = vld [vmem:[%s1 + $0xb58] sm:$0xff]
    %v485 = vld [vmem:[%s1 + $0xb60] sm:$0xff]
    %v486 = vld [vmem:[%s1 + $0xb68] sm:$0xff]
    %v487 = vld [vmem:[%s1 + $0xb70] sm:$0xff]
    %v488 = vld [vmem:[%s1 + $0xb78] sm:$0xff]
    %v489 = vld [vmem:[%s1 + $0xb80] sm:$0xff]
    %v490 = vld [vmem:[%s1 + $0xb88] sm:$0xff]
    %v491 = vld [vmem:[%s1 + $0xb90] sm:$0xff]
    %v492 = vld [vmem:[%s1 + $0xb98] sm:$0xff]
    %v493 = vld [vmem:[%s1 + $0xba0] sm:$0x3]
    %v494 = vld [vmem:[%s1 + $0xba8] sm:$0x3]
    %v495 = vld [vmem:[%s1 + $0xbb0] sm:$0x3]
    %v496 = vld [vmem:[%s2] sm:$0xff]
    %v497 = vld [vmem:[%s2 + $0x8] sm:$0xff]
    %v498 = vld [vmem:[%s2 + $0x10] sm:$0xff]
    %v499 = vld [vmem:[%s2 + $0x18] sm:$0xff]
    %v500 = vld [vmem:[%s2 + $0x20] sm:$0xff]
    %v501 = vld [vmem:[%s2 + $0x28] sm:$0xff]
    %v502 = vld [vmem:[%s2 + $0x30] sm:$0xff]
    %v503 = vld [vmem:[%s3] sm:$0xff]
    %v504 = vld [vmem:[%s4] sm:$0xff]
    %507 = vst [vmem:[#allocation1] ss:$4 sm:$0xff] %v119
    %s508 = scalar_lea.vmem [#allocation1], 32
    %509 = vst [vmem:[%s508] ss:$4 sm:$0xff] %v120
    %v510 = vld.sshfl [vmem:[#allocation1] sm:$0xff pattern:$0x73625140]
    %v511 = vld.sshfl [vmem:[#allocation1 + $0x8] sm:$0xff pattern:$0x73625140]
    %v512 = vld.sshfl [vmem:[#allocation1 + $0x10] sm:$0xff pattern:$0x73625140]
    %v513 = vld.sshfl [vmem:[#allocation1 + $0x18] sm:$0xff pattern:$0x73625140]
    %v514 = vld.sshfl [vmem:[#allocation1 + $0x20] sm:$0xff pattern:$0x73625140]
    %v515 = vld.sshfl [vmem:[#allocation1 + $0x28] sm:$0xff pattern:$0x73625140]
    %v516 = vld.sshfl [vmem:[#allocation1 + $0x30] sm:$0xff pattern:$0x73625140]
    %v517 = vld.sshfl [vmem:[#allocation1 + $0x38] sm:$0xff pattern:$0x73625140]
    %518 = vrot.lane.b32.xlu0 %v510, 127
    %v519 = vpop.permute.xlu0 %518
    %520 = vrot.lane.b32.xlu0 %v511, 127
    %v521 = vpop.permute.xlu0 %520
    %522 = vrot.lane.b32.xlu0 %v512, 127
    %v523 = vpop.permute.xlu0 %522
    %524 = vrot.lane.b32.xlu0 %v513, 127
    %v525 = vpop.permute.xlu0 %524
    %526 = vrot.lane.b32.xlu0 %v514, 127
    %v527 = vpop.permute.xlu0 %526
    %528 = vrot.lane.b32.xlu0 %v515, 127
    %v529 = vpop.permute.xlu0 %528
    %530 = vrot.lane.b32.xlu0 %v516, 127
    %v531 = vpop.permute.xlu0 %530
    %532 = vrot.lane.b32.xlu0 %v517, 127
    %v533 = vpop.permute.xlu0 %532
    %vm534 = vcmask 1039360
    %v535 = vsel %vm534, %v519, %v521
    %v536 = vsel %vm534, %v521, %v523
    %v537 = vsel %vm534, %v523, %v525
    %v538 = vsel %vm534, %v525, %v527
    %v539 = vsel %vm534, %v527, %v529
    %v540 = vsel %vm534, %v529, %v531
    %v541 = vsel %vm534, %v531, %v533
    %vm542 = vcmask 15360
    %v544 = vsel %vm542, %v497, 0
    %vm546 = vcmask 1041408
    %v547 = vsel %vm546, %v535, 0
    %v549 = vsel %vm546, %v536, 0
    %v551 = vsel %vm546, %v537, 0
    %v553 = vsel %vm546, %v538, 0
    %v555 = vsel %vm546, %v539, 0
    %v557 = vsel %vm546, %v540, 0
    %v559 = vsel %vm546, %v541, 0
    %v561 = vsel %vm546, %v533, 0
    %563 = vmatpush.msra.mxu0 0.0
    %564 = vmatpush.msra.mxu0 0.0
    %565 = vmatpush.msra.mxu0 0.0
    %566 = vmatpush.msra.mxu0 0.0
    %567 = vmatpush.msra.mxu0 0.0
    %568 = vmatpush.msra.mxu0 0.0
    %569 = vmatpush.msra.mxu0 0.0
    %570 = vmatpush.msra.mxu0 0.0
    %571 = vmatpush.msra.mxu0 0.0
    %572 = vmatpush.msra.mxu0 0.0
    %573 = vmatpush.msra.mxu0 0.0
    %574 = vmatpush.msra.mxu0 0.0
    %575 = vmatpush.msra.mxu0 0.0
    %576 = vmatpush.msra.mxu0 0.0
    %577 = vmatpush.msra.mxu0 0.0
    %578 = vmatpush.msra.mxu0 %v547
    %579 = vmatmul.f32.gmra.mxu0 %v544
    %v580 = vpop.f32.mrf.mxu0
    %v581 = vadd.f32 0.0, %v580
    %582 = vdwg.mxu0
    %583 = vmatpush.msra.mxu0 0.0
    %584 = vmatpush.msra.mxu0 0.0
    %585 = vmatpush.msra.mxu0 0.0
    %586 = vmatpush.msra.mxu0 0.0
    %587 = vmatpush.msra.mxu0 0.0
    %588 = vmatpush.msra.mxu0 0.0
    %589 = vmatpush.msra.mxu0 0.0
    %590 = vmatpush.msra.mxu0 0.0
    %591 = vmatpush.msra.mxu0 0.0
    %592 = vmatpush.msra.mxu0 0.0
    %593 = vmatpush.msra.mxu0 0.0
    %594 = vmatpush.msra.mxu0 0.0
    %595 = vmatpush.msra.mxu0 0.0
    %596 = vmatpush.msra.mxu0 0.0
    %597 = vmatpush.msra.mxu0 0.0
    %598 = vmatpush.msra.mxu0 %v549
    %599 = vmatmul.f32.gmra.mxu0 %v544
    %v600 = vpop.f32.mrf.mxu0
    %v601 = vadd.f32 0.0, %v600
    %602 = vdwg.mxu0
    %603 = vmatpush.msra.mxu0 0.0
    %604 = vmatpush.msra.mxu0 0.0
    %605 = vmatpush.msra.mxu0 0.0
    %606 = vmatpush.msra.mxu0 0.0
    %607 = vmatpush.msra.mxu0 0.0
    %608 = vmatpush.msra.mxu0 0.0
    %609 = vmatpush.msra.mxu0 0.0
    %610 = vmatpush.msra.mxu0 0.0
    %611 = vmatpush.msra.mxu0 0.0
    %612 = vmatpush.msra.mxu0 0.0
    %613 = vmatpush.msra.mxu0 0.0
    %614 = vmatpush.msra.mxu0 0.0
    %615 = vmatpush.msra.mxu0 0.0
    %616 = vmatpush.msra.mxu0 0.0
    %617 = vmatpush.msra.mxu0 0.0
    %618 = vmatpush.msra.mxu0 %v551
    %619 = vmatmul.f32.gmra.mxu0 %v544
    %v620 = vpop.f32.mrf.mxu0
    %v621 = vadd.f32 0.0, %v620
    %622 = vdwg.mxu0
    %623 = vmatpush.msra.mxu0 0.0
    %624 = vmatpush.msra.mxu0 0.0
    %625 = vmatpush.msra.mxu0 0.0
    %626 = vmatpush.msra.mxu0 0.0
    %627 = vmatpush.msra.mxu0 0.0
    %628 = vmatpush.msra.mxu0 0.0
    %629 = vmatpush.msra.mxu0 0.0
    %630 = vmatpush.msra.mxu0 0.0
    %631 = vmatpush.msra.mxu0 0.0
    %632 = vmatpush.msra.mxu0 0.0
    %633 = vmatpush.msra.mxu0 0.0
    %634 = vmatpush.msra.mxu0 0.0
    %635 = vmatpush.msra.mxu0 0.0
    %636 = vmatpush.msra.mxu0 0.0
    %637 = vmatpush.msra.mxu0 0.0
    %638 = vmatpush.msra.mxu0 %v553
    %639 = vmatmul.f32.gmra.mxu0 %v544
    %v640 = vpop.f32.mrf.mxu0
    %v641 = vadd.f32 0.0, %v640
    %642 = vdwg.mxu0
    %643 = vmatpush.msra.mxu0 0.0
    %644 = vmatpush.msra.mxu0 0.0
    %645 = vmatpush.msra.mxu0 0.0
    %646 = vmatpush.msra.mxu0 0.0
    %647 = vmatpush.msra.mxu0 0.0
    %648 = vmatpush.msra.mxu0 0.0
    %649 = vmatpush.msra.mxu0 0.0
    %650 = vmatpush.msra.mxu0 0.0
    %651 = vmatpush.msra.mxu0 0.0
    %652 = vmatpush.msra.mxu0 0.0
    %653 = vmatpush.msra.mxu0 0.0
    %654 = vmatpush.msra.mxu0 0.0
    %655 = vmatpush.msra.mxu0 0.0
    %656 = vmatpush.msra.mxu0 0.0
    %657 = vmatpush.msra.mxu0 0.0
    %658 = vmatpush.msra.mxu0 %v555
    %659 = vmatmul.f32.gmra.mxu0 %v544
    %v660 = vpop.f32.mrf.mxu0
    %v661 = vadd.f32 0.0, %v660
    %662 = vdwg.mxu0
    %663 = vmatpush.msra.mxu0 0.0
    %664 = vmatpush.msra.mxu0 0.0
    %665 = vmatpush.msra.mxu0 0.0
    %666 = vmatpush.msra.mxu0 0.0
    %667 = vmatpush.msra.mxu0 0.0
    %668 = vmatpush.msra.mxu0 0.0
    %669 = vmatpush.msra.mxu0 0.0
    %670 = vmatpush.msra.mxu0 0.0
    %671 = vmatpush.msra.mxu0 0.0
    %672 = vmatpush.msra.mxu0 0.0
    %673 = vmatpush.msra.mxu0 0.0
    %674 = vmatpush.msra.mxu0 0.0
    %675 = vmatpush.msra.mxu0 0.0
    %676 = vmatpush.msra.mxu0 0.0
    %677 = vmatpush.msra.mxu0 0.0
    %678 = vmatpush.msra.mxu0 %v557
    %679 = vmatmul.f32.gmra.mxu0 %v544
    %v680 = vpop.f32.mrf.mxu0
    %v681 = vadd.f32 0.0, %v680
    %682 = vdwg.mxu0
    %683 = vmatpush.msra.mxu0 0.0
    %684 = vmatpush.msra.mxu0 0.0
    %685 = vmatpush.msra.mxu0 0.0
    %686 = vmatpush.msra.mxu0 0.0
    %687 = vmatpush.msra.mxu0 0.0
    %688 = vmatpush.msra.mxu0 0.0
    %689 = vmatpush.msra.mxu0 0.0
    %690 = vmatpush.msra.mxu0 0.0
    %691 = vmatpush.msra.mxu0 0.0
    %692 = vmatpush.msra.mxu0 0.0
    %693 = vmatpush.msra.mxu0 0.0
    %694 = vmatpush.msra.mxu0 0.0
    %695 = vmatpush.msra.mxu0 0.0
    %696 = vmatpush.msra.mxu0 0.0
    %697 = vmatpush.msra.mxu0 0.0
    %698 = vmatpush.msra.mxu0 %v559
    %699 = vmatmul.f32.gmra.mxu0 %v544
    %v700 = vpop.f32.mrf.mxu0
    %v701 = vadd.f32 0.0, %v700
    %702 = vdwg.mxu0
    %703 = vmatpush.msra.mxu0 0.0
    %704 = vmatpush.msra.mxu0 0.0
    %705 = vmatpush.msra.mxu0 0.0
    %706 = vmatpush.msra.mxu0 0.0
    %707 = vmatpush.msra.mxu0 0.0
    %708 = vmatpush.msra.mxu0 0.0
    %709 = vmatpush.msra.mxu0 0.0
    %710 = vmatpush.msra.mxu0 0.0
    %711 = vmatpush.msra.mxu0 0.0
    %712 = vmatpush.msra.mxu0 0.0
    %713 = vmatpush.msra.mxu0 0.0
    %714 = vmatpush.msra.mxu0 0.0
    %715 = vmatpush.msra.mxu0 0.0
    %716 = vmatpush.msra.mxu0 0.0
    %717 = vmatpush.msra.mxu0 0.0
    %718 = vmatpush.msra.mxu0 %v561
    %719 = vmatmul.f32.gmra.mxu0 %v544
    %v720 = vpop.f32.mrf.mxu0
    %v721 = vadd.f32 0.0, %v720
    %722 = vdwg.mxu0
    %723 = vst [vmem:[#allocation1] ss:$4 sm:$0xff] %v119
    %s724 = scalar_lea.vmem [#allocation1], 32
    %725 = vst [vmem:[%s724] ss:$4 sm:$0xff] %v120
    %v726 = vld.sshfl [vmem:[#allocation1] sm:$0xff pattern:$0x73625140]
    %v727 = vld.sshfl [vmem:[#allocation1 + $0x8] sm:$0xff pattern:$0x73625140]
    %v728 = vld.sshfl [vmem:[#allocation1 + $0x10] sm:$0xff pattern:$0x73625140]
    %v729 = vld.sshfl [vmem:[#allocation1 + $0x18] sm:$0xff pattern:$0x73625140]
    %v730 = vld.sshfl [vmem:[#allocation1 + $0x20] sm:$0xff pattern:$0x73625140]
    %v731 = vld.sshfl [vmem:[#allocation1 + $0x28] sm:$0xff pattern:$0x73625140]
    %v732 = vld.sshfl [vmem:[#allocation1 + $0x30] sm:$0xff pattern:$0x73625140]
    %v733 = vld.sshfl [vmem:[#allocation1 + $0x38] sm:$0xff pattern:$0x73625140]
    %v735 = vsel %vm542, %v496, 0
    %v737 = vsel %vm546, %v726, 0
    %v739 = vsel %vm546, %v727, 0
    %v741 = vsel %vm546, %v728, 0
    %v743 = vsel %vm546, %v729, 0
    %v745 = vsel %vm546, %v730, 0
    %v747 = vsel %vm546, %v731, 0
    %v749 = vsel %vm546, %v732, 0
    %v751 = vsel %vm546, %v733, 0
    %753 = vmatpush.msra.mxu0 0.0
    %754 = vmatpush.msra.mxu0 0.0
    %755 = vmatpush.msra.mxu0 0.0
    %756 = vmatpush.msra.mxu0 0.0
    %757 = vmatpush.msra.mxu0 0.0
    %758 = vmatpush.msra.mxu0 0.0
    %759 = vmatpush.msra.mxu0 0.0
    %760 = vmatpush.msra.mxu0 0.0
    %761 = vmatpush.msra.mxu0 0.0
    %762 = vmatpush.msra.mxu0 0.0
    %763 = vmatpush.msra.mxu0 0.0
    %764 = vmatpush.msra.mxu0 0.0
    %765 = vmatpush.msra.mxu0 0.0
    %766 = vmatpush.msra.mxu0 0.0
    %767 = vmatpush.msra.mxu0 0.0
    %768 = vmatpush.msra.mxu0 %v737
    %769 = vmatmul.f32.gmra.mxu0 %v735
    %v770 = vpop.f32.mrf.mxu0
    %v771 = vadd.f32 %v581, %v770
    %772 = vdwg.mxu0
    %773 = vmatpush.msra.mxu0 0.0
    %774 = vmatpush.msra.mxu0 0.0
    %775 = vmatpush.msra.mxu0 0.0
    %776 = vmatpush.msra.mxu0 0.0
    %777 = vmatpush.msra.mxu0 0.0
    %778 = vmatpush.msra.mxu0 0.0
    %779 = vmatpush.msra.mxu0 0.0
    %780 = vmatpush.msra.mxu0 0.0
    %781 = vmatpush.msra.mxu0 0.0
    %782 = vmatpush.msra.mxu0 0.0
    %783 = vmatpush.msra.mxu0 0.0
    %784 = vmatpush.msra.mxu0 0.0
    %785 = vmatpush.msra.mxu0 0.0
    %786 = vmatpush.msra.mxu0 0.0
    %787 = vmatpush.msra.mxu0 0.0
    %788 = vmatpush.msra.mxu0 %v739
    %789 = vmatmul.f32.gmra.mxu0 %v735
    %v790 = vpop.f32.mrf.mxu0
    %v791 = vadd.f32 %v601, %v790
    %792 = vdwg.mxu0
    %793 = vmatpush.msra.mxu0 0.0
    %794 = vmatpush.msra.mxu0 0.0
    %795 = vmatpush.msra.mxu0 0.0
    %796 = vmatpush.msra.mxu0 0.0
    %797 = vmatpush.msra.mxu0 0.0
    %798 = vmatpush.msra.mxu0 0.0
    %799 = vmatpush.msra.mxu0 0.0
    %800 = vmatpush.msra.mxu0 0.0
    %801 = vmatpush.msra.mxu0 0.0
    %802 = vmatpush.msra.mxu0 0.0
    %803 = vmatpush.msra.mxu0 0.0
    %804 = vmatpush.msra.mxu0 0.0
    %805 = vmatpush.msra.mxu0 0.0
    %806 = vmatpush.msra.mxu0 0.0
    %807 = vmatpush.msra.mxu0 0.0
    %808 = vmatpush.msra.mxu0 %v741
    %809 = vmatmul.f32.gmra.mxu0 %v735
    %v810 = vpop.f32.mrf.mxu0
    %v811 = vadd.f32 %v621, %v810
    %812 = vdwg.mxu0
    %813 = vmatpush.msra.mxu0 0.0
    %814 = vmatpush.msra.mxu0 0.0
    %815 = vmatpush.msra.mxu0 0.0
    %816 = vmatpush.msra.mxu0 0.0
    %817 = vmatpush.msra.mxu0 0.0
    %818 = vmatpush.msra.mxu0 0.0
    %819 = vmatpush.msra.mxu0 0.0
    %820 = vmatpush.msra.mxu0 0.0
    %821 = vmatpush.msra.mxu0 0.0
    %822 = vmatpush.msra.mxu0 0.0
    %823 = vmatpush.msra.mxu0 0.0
    %824 = vmatpush.msra.mxu0 0.0
    %825 = vmatpush.msra.mxu0 0.0
    %826 = vmatpush.msra.mxu0 0.0
    %827 = vmatpush.msra.mxu0 0.0
    %828 = vmatpush.msra.mxu0 %v743
    %829 = vmatmul.f32.gmra.mxu0 %v735
    %v830 = vpop.f32.mrf.mxu0
    %v831 = vadd.f32 %v641, %v830
    %832 = vdwg.mxu0
    %833 = vmatpush.msra.mxu0 0.0
    %834 = vmatpush.msra.mxu0 0.0
    %835 = vmatpush.msra.mxu0 0.0
    %836 = vmatpush.msra.mxu0 0.0
    %837 = vmatpush.msra.mxu0 0.0
    %838 = vmatpush.msra.mxu0 0.0
    %839 = vmatpush.msra.mxu0 0.0
    %840 = vmatpush.msra.mxu0 0.0
    %841 = vmatpush.msra.mxu0 0.0
    %842 = vmatpush.msra.mxu0 0.0
    %843 = vmatpush.msra.mxu0 0.0
    %844 = vmatpush.msra.mxu0 0.0
    %845 = vmatpush.msra.mxu0 0.0
    %846 = vmatpush.msra.mxu0 0.0
    %847 = vmatpush.msra.mxu0 0.0
    %848 = vmatpush.msra.mxu0 %v745
    %849 = vmatmul.f32.gmra.mxu0 %v735
    %v850 = vpop.f32.mrf.mxu0
    %v851 = vadd.f32 %v661, %v850
    %852 = vdwg.mxu0
    %853 = vmatpush.msra.mxu0 0.0
    %854 = vmatpush.msra.mxu0 0.0
    %855 = vmatpush.msra.mxu0 0.0
    %856 = vmatpush.msra.mxu0 0.0
    %857 = vmatpush.msra.mxu0 0.0
    %858 = vmatpush.msra.mxu0 0.0
    %859 = vmatpush.msra.mxu0 0.0
    %860 = vmatpush.msra.mxu0 0.0
    %861 = vmatpush.msra.mxu0 0.0
    %862 = vmatpush.msra.mxu0 0.0
    %863 = vmatpush.msra.mxu0 0.0
    %864 = vmatpush.msra.mxu0 0.0
    %865 = vmatpush.msra.mxu0 0.0
    %866 = vmatpush.msra.mxu0 0.0
    %867 = vmatpush.msra.mxu0 0.0
    %868 = vmatpush.msra.mxu0 %v747
    %869 = vmatmul.f32.gmra.mxu0 %v735
    %v870 = vpop.f32.mrf.mxu0
    %v871 = vadd.f32 %v681, %v870
    %872 = vdwg.mxu0
    %873 = vmatpush.msra.mxu0 0.0
    %874 = vmatpush.msra.mxu0 0.0
    %875 = vmatpush.msra.mxu0 0.0
    %876 = vmatpush.msra.mxu0 0.0
    %877 = vmatpush.msra.mxu0 0.0
    %878 = vmatpush.msra.mxu0 0.0
    %879 = vmatpush.msra.mxu0 0.0
    %880 = vmatpush.msra.mxu0 0.0
    %881 = vmatpush.msra.mxu0 0.0
    %882 = vmatpush.msra.mxu0 0.0
    %883 = vmatpush.msra.mxu0 0.0
    %884 = vmatpush.msra.mxu0 0.0
    %885 = vmatpush.msra.mxu0 0.0
    %886 = vmatpush.msra.mxu0 0.0
    %887 = vmatpush.msra.mxu0 0.0
    %888 = vmatpush.msra.mxu0 %v749
    %889 = vmatmul.f32.gmra.mxu0 %v735
    %v890 = vpop.f32.mrf.mxu0
    %v891 = vadd.f32 %v701, %v890
    %892 = vdwg.mxu0
    %893 = vmatpush.msra.mxu0 0.0
    %894 = vmatpush.msra.mxu0 0.0
    %895 = vmatpush.msra.mxu0 0.0
    %896 = vmatpush.msra.mxu0 0.0
    %897 = vmatpush.msra.mxu0 0.0
    %898 = vmatpush.msra.mxu0 0.0
    %899 = vmatpush.msra.mxu0 0.0
    %900 = vmatpush.msra.mxu0 0.0
    %901 = vmatpush.msra.mxu0 0.0
    %902 = vmatpush.msra.mxu0 0.0
    %903 = vmatpush.msra.mxu0 0.0
    %904 = vmatpush.msra.mxu0 0.0
    %905 = vmatpush.msra.mxu0 0.0
    %906 = vmatpush.msra.mxu0 0.0
    %907 = vmatpush.msra.mxu0 0.0
    %908 = vmatpush.msra.mxu0 %v751
    %909 = vmatmul.f32.gmra.mxu0 %v735
    %v910 = vpop.f32.mrf.mxu0
    %v911 = vadd.f32 %v721, %v910
    %912 = vdwg.mxu0
    %913 = vst [vmem:[#allocation1] ss:$4 sm:$0xff] %v119
    %s914 = scalar_lea.vmem [#allocation1], 32
    %915 = vst [vmem:[%s914] ss:$4 sm:$0xff] %v120
    %v916 = vld.sshfl [vmem:[#allocation1] sm:$0xff pattern:$0x73625140]
    %v917 = vld.sshfl [vmem:[#allocation1 + $0x8] sm:$0xff pattern:$0x73625140]
    %v918 = vld.sshfl [vmem:[#allocation1 + $0x10] sm:$0xff pattern:$0x73625140]
    %v919 = vld.sshfl [vmem:[#allocation1 + $0x18] sm:$0xff pattern:$0x73625140]
    %v920 = vld.sshfl [vmem:[#allocation1 + $0x20] sm:$0xff pattern:$0x73625140]
    %v921 = vld.sshfl [vmem:[#allocation1 + $0x28] sm:$0xff pattern:$0x73625140]
    %v922 = vld.sshfl [vmem:[#allocation1 + $0x30] sm:$0xff pattern:$0x73625140]
    %v923 = vld.sshfl [vmem:[#allocation1 + $0x38] sm:$0xff pattern:$0x73625140]
    %924 = vrot.lane.b32.xlu0 %v916, 126
    %v925 = vpop.permute.xlu0 %924
    %926 = vrot.lane.b32.xlu0 %v917, 126
    %v927 = vpop.permute.xlu0 %926
    %928 = vrot.lane.b32.xlu0 %v918, 126
    %v929 = vpop.permute.xlu0 %928
    %930 = vrot.lane.b32.xlu0 %v919, 126
    %v931 = vpop.permute.xlu0 %930
    %932 = vrot.lane.b32.xlu0 %v920, 126
    %v933 = vpop.permute.xlu0 %932
    %934 = vrot.lane.b32.xlu0 %v921, 126
    %v935 = vpop.permute.xlu0 %934
    %936 = vrot.lane.b32.xlu0 %v922, 126
    %v937 = vpop.permute.xlu0 %936
    %938 = vrot.lane.b32.xlu0 %v923, 126
    %v939 = vpop.permute.xlu0 %938
    %vm940 = vcmask 1031168
    %v941 = vsel %vm940, %v925, %v927
    %v942 = vsel %vm940, %v927, %v929
    %v943 = vsel %vm940, %v929, %v931
    %v944 = vsel %vm940, %v931, %v933
    %v945 = vsel %vm940, %v933, %v935
    %v946 = vsel %vm940, %v935, %v937
    %v947 = vsel %vm940, %v937, %v939
    %v949 = vsel %vm542, %v498, 0
    %v951 = vsel %vm546, %v941, 0
    %v953 = vsel %vm546, %v942, 0
    %v955 = vsel %vm546, %v943, 0
    %v957 = vsel %vm546, %v944, 0
    %v959 = vsel %vm546, %v945, 0
    %v961 = vsel %vm546, %v946, 0
    %v963 = vsel %vm546, %v947, 0
    %v965 = vsel %vm546, %v939, 0
    %967 = vmatpush.msra.mxu0 0.0
    %968 = vmatpush.msra.mxu0 0.0
    %969 = vmatpush.msra.mxu0 0.0
    %970 = vmatpush.msra.mxu0 0.0
    %971 = vmatpush.msra.mxu0 0.0
    %972 = vmatpush.msra.mxu0 0.0
    %973 = vmatpush.msra.mxu0 0.0
    %974 = vmatpush.msra.mxu0 0.0
    %975 = vmatpush.msra.mxu0 0.0
    %976 = vmatpush.msra.mxu0 0.0
    %977 = vmatpush.msra.mxu0 0.0
    %978 = vmatpush.msra.mxu0 0.0
    %979 = vmatpush.msra.mxu0 0.0
    %980 = vmatpush.msra.mxu0 0.0
    %981 = vmatpush.msra.mxu0 0.0
    %982 = vmatpush.msra.mxu0 %v951
    %983 = vmatmul.f32.gmra.mxu0 %v949
    %v984 = vpop.f32.mrf.mxu0
    %v985 = vadd.f32 0.0, %v984
    %986 = vdwg.mxu0
    %987 = vmatpush.msra.mxu0 0.0
    %988 = vmatpush.msra.mxu0 0.0
    %989 = vmatpush.msra.mxu0 0.0
    %990 = vmatpush.msra.mxu0 0.0
    %991 = vmatpush.msra.mxu0 0.0
    %992 = vmatpush.msra.mxu0 0.0
    %993 = vmatpush.msra.mxu0 0.0
    %994 = vmatpush.msra.mxu0 0.0
    %995 = vmatpush.msra.mxu0 0.0
    %996 = vmatpush.msra.mxu0 0.0
    %997 = vmatpush.msra.mxu0 0.0
    %998 = vmatpush.msra.mxu0 0.0
    %999 = vmatpush.msra.mxu0 0.0
    %1000 = vmatpush.msra.mxu0 0.0
    %1001 = vmatpush.msra.mxu0 0.0
    %1002 = vmatpush.msra.mxu0 %v953
    %1003 = vmatmul.f32.gmra.mxu0 %v949
    %v1004 = vpop.f32.mrf.mxu0
    %v1005 = vadd.f32 0.0, %v1004
    %1006 = vdwg.mxu0
    %1007 = vmatpush.msra.mxu0 0.0
    %1008 = vmatpush.msra.mxu0 0.0
    %1009 = vmatpush.msra.mxu0 0.0
    %1010 = vmatpush.msra.mxu0 0.0
    %1011 = vmatpush.msra.mxu0 0.0
    %1012 = vmatpush.msra.mxu0 0.0
    %1013 = vmatpush.msra.mxu0 0.0
    %1014 = vmatpush.msra.mxu0 0.0
    %1015 = vmatpush.msra.mxu0 0.0
    %1016 = vmatpush.msra.mxu0 0.0
    %1017 = vmatpush.msra.mxu0 0.0
    %1018 = vmatpush.msra.mxu0 0.0
    %1019 = vmatpush.msra.mxu0 0.0
    %1020 = vmatpush.msra.mxu0 0.0
    %1021 = vmatpush.msra.mxu0 0.0
    %1022 = vmatpush.msra.mxu0 %v955
    %1023 = vmatmul.f32.gmra.mxu0 %v949
    %v1024 = vpop.f32.mrf.mxu0
    %v1025 = vadd.f32 0.0, %v1024
    %1026 = vdwg.mxu0
    %1027 = vmatpush.msra.mxu0 0.0
    %1028 = vmatpush.msra.mxu0 0.0
    %1029 = vmatpush.msra.mxu0 0.0
    %1030 = vmatpush.msra.mxu0 0.0
    %1031 = vmatpush.msra.mxu0 0.0
    %1032 = vmatpush.msra.mxu0 0.0
    %1033 = vmatpush.msra.mxu0 0.0
    %1034 = vmatpush.msra.mxu0 0.0
    %1035 = vmatpush.msra.mxu0 0.0
    %1036 = vmatpush.msra.mxu0 0.0
    %1037 = vmatpush.msra.mxu0 0.0
    %1038 = vmatpush.msra.mxu0 0.0
    %1039 = vmatpush.msra.mxu0 0.0
    %1040 = vmatpush.msra.mxu0 0.0
    %1041 = vmatpush.msra.mxu0 0.0
    %1042 = vmatpush.msra.mxu0 %v957
    %1043 = vmatmul.f32.gmra.mxu0 %v949
    %v1044 = vpop.f32.mrf.mxu0
    %v1045 = vadd.f32 0.0, %v1044
    %1046 = vdwg.mxu0
    %1047 = vmatpush.msra.mxu0 0.0
    %1048 = vmatpush.msra.mxu0 0.0
    %1049 = vmatpush.msra.mxu0 0.0
    %1050 = vmatpush.msra.mxu0 0.0
    %1051 = vmatpush.msra.mxu0 0.0
    %1052 = vmatpush.msra.mxu0 0.0
    %1053 = vmatpush.msra.mxu0 0.0
    %1054 = vmatpush.msra.mxu0 0.0
    %1055 = vmatpush.msra.mxu0 0.0
    %1056 = vmatpush.msra.mxu0 0.0
    %1057 = vmatpush.msra.mxu0 0.0
    %1058 = vmatpush.msra.mxu0 0.0
    %1059 = vmatpush.msra.mxu0 0.0
    %1060 = vmatpush.msra.mxu0 0.0
    %1061 = vmatpush.msra.mxu0 0.0
    %1062 = vmatpush.msra.mxu0 %v959
    %1063 = vmatmul.f32.gmra.mxu0 %v949
    %v1064 = vpop.f32.mrf.mxu0
    %v1065 = vadd.f32 0.0, %v1064
    %1066 = vdwg.mxu0
    %1067 = vmatpush.msra.mxu0 0.0
    %1068 = vmatpush.msra.mxu0 0.0
    %1069 = vmatpush.msra.mxu0 0.0
    %1070 = vmatpush.msra.mxu0 0.0
    %1071 = vmatpush.msra.mxu0 0.0
    %1072 = vmatpush.msra.mxu0 0.0
    %1073 = vmatpush.msra.mxu0 0.0
    %1074 = vmatpush.msra.mxu0 0.0
    %1075 = vmatpush.msra.mxu0 0.0
    %1076 = vmatpush.msra.mxu0 0.0
    %1077 = vmatpush.msra.mxu0 0.0
    %1078 = vmatpush.msra.mxu0 0.0
    %1079 = vmatpush.msra.mxu0 0.0
    %1080 = vmatpush.msra.mxu0 0.0
    %1081 = vmatpush.msra.mxu0 0.0
    %1082 = vmatpush.msra.mxu0 %v961
    %1083 = vmatmul.f32.gmra.mxu0 %v949
    %v1084 = vpop.f32.mrf.mxu0
    %v1085 = vadd.f32 0.0, %v1084
    %1086 = vdwg.mxu0
    %1087 = vmatpush.msra.mxu0 0.0
    %1088 = vmatpush.msra.mxu0 0.0
    %1089 = vmatpush.msra.mxu0 0.0
    %1090 = vmatpush.msra.mxu0 0.0
    %1091 = vmatpush.msra.mxu0 0.0
    %1092 = vmatpush.msra.mxu0 0.0
    %1093 = vmatpush.msra.mxu0 0.0
    %1094 = vmatpush.msra.mxu0 0.0
    %1095 = vmatpush.msra.mxu0 0.0
    %1096 = vmatpush.msra.mxu0 0.0
    %1097 = vmatpush.msra.mxu0 0.0
    %1098 = vmatpush.msra.mxu0 0.0
    %1099 = vmatpush.msra.mxu0 0.0
    %1100 = vmatpush.msra.mxu0 0.0
    %1101 = vmatpush.msra.mxu0 0.0
    %1102 = vmatpush.msra.mxu0 %v963
    %1103 = vmatmul.f32.gmra.mxu0 %v949
    %v1104 = vpop.f32.mrf.mxu0
    %v1105 = vadd.f32 0.0, %v1104
    %1106 = vdwg.mxu0
    %1107 = vmatpush.msra.mxu0 0.0
    %1108 = vmatpush.msra.mxu0 0.0
    %1109 = vmatpush.msra.mxu0 0.0
    %1110 = vmatpush.msra.mxu0 0.0
    %1111 = vmatpush.msra.mxu0 0.0
    %1112 = vmatpush.msra.mxu0 0.0
    %1113 = vmatpush.msra.mxu0 0.0
    %1114 = vmatpush.msra.mxu0 0.0
    %1115 = vmatpush.msra.mxu0 0.0
    %1116 = vmatpush.msra.mxu0 0.0
    %1117 = vmatpush.msra.mxu0 0.0
    %1118 = vmatpush.msra.mxu0 0.0
    %1119 = vmatpush.msra.mxu0 0.0
    %1120 = vmatpush.msra.mxu0 0.0
    %1121 = vmatpush.msra.mxu0 0.0
    %1122 = vmatpush.msra.mxu0 %v965
    %1123 = vmatmul.f32.gmra.mxu0 %v949
    %v1124 = vpop.f32.mrf.mxu0
    %v1125 = vadd.f32 0.0, %v1124
    %1126 = vdwg.mxu0
    %v1127 = vadd.f32 %v771, %v985
    %v1128 = vadd.f32 %v791, %v1005
    %v1129 = vadd.f32 %v811, %v1025
    %v1130 = vadd.f32 %v831, %v1045
    %v1131 = vadd.f32 %v851, %v1065
    %v1132 = vadd.f32 %v871, %v1085
    %v1133 = vadd.f32 %v891, %v1105
    %v1134 = vadd.f32 %v911, %v1125
    %1135 = vst [vmem:[#allocation1] ss:$4 sm:$0xff] %v119
    %s1136 = scalar_lea.vmem [#allocation1], 32
    %1137 = vst [vmem:[%s1136] ss:$4 sm:$0xff] %v120
    %v1138 = vld.sshfl [vmem:[#allocation1] sm:$0xff pattern:$0x73625140]
    %v1139 = vld.sshfl [vmem:[#allocation1 + $0x8] sm:$0xff pattern:$0x73625140]
    %v1140 = vld.sshfl [vmem:[#allocation1 + $0x10] sm:$0xff pattern:$0x73625140]
    %v1141 = vld.sshfl [vmem:[#allocation1 + $0x18] sm:$0xff pattern:$0x73625140]
    %v1142 = vld.sshfl [vmem:[#allocation1 + $0x20] sm:$0xff pattern:$0x73625140]
    %v1143 = vld.sshfl [vmem:[#allocation1 + $0x28] sm:$0xff pattern:$0x73625140]
    %v1144 = vld.sshfl [vmem:[#allocation1 + $0x30] sm:$0xff pattern:$0x73625140]
    %v1145 = vld.sshfl [vmem:[#allocation1 + $0x38] sm:$0xff pattern:$0x73625140]
    %1146 = vrot.lane.b32.xlu0 %v1138, 125
    %v1147 = vpop.permute.xlu0 %1146
    %1148 = vrot.lane.b32.xlu0 %v1139, 125
    %v1149 = vpop.permute.xlu0 %1148
    %1150 = vrot.lane.b32.xlu0 %v1140, 125
    %v1151 = vpop.permute.xlu0 %1150
    %1152 = vrot.lane.b32.xlu0 %v1141, 125
    %v1153 = vpop.permute.xlu0 %1152
    %1154 = vrot.lane.b32.xlu0 %v1142, 125
    %v1155 = vpop.permute.xlu0 %1154
    %1156 = vrot.lane.b32.xlu0 %v1143, 125
    %v1157 = vpop.permute.xlu0 %1156
    %1158 = vrot.lane.b32.xlu0 %v1144, 125
    %v1159 = vpop.permute.xlu0 %1158
    %1160 = vrot.lane.b32.xlu0 %v1145, 125
    %v1161 = vpop.permute.xlu0 %1160
    %vm1162 = vcmask 1022976
    %v1163 = vsel %vm1162, %v1147, %v1149
    %v1164 = vsel %vm1162, %v1149, %v1151
    %v1165 = vsel %vm1162, %v1151, %v1153
    %v1166 = vsel %vm1162, %v1153, %v1155
    %v1167 = vsel %vm1162, %v1155, %v1157
    %v1168 = vsel %vm1162, %v1157, %v1159
    %v1169 = vsel %vm1162, %v1159, %v1161
    %v1171 = vsel %vm542, %v499, 0
    %v1173 = vsel %vm546, %v1163, 0
    %v1175 = vsel %vm546, %v1164, 0
    %v1177 = vsel %vm546, %v1165, 0
    %v1179 = vsel %vm546, %v1166, 0
    %v1181 = vsel %vm546, %v1167, 0
    %v1183 = vsel %vm546, %v1168, 0
    %v1185 = vsel %vm546, %v1169, 0
    %v1187 = vsel %vm546, %v1161, 0
    %1189 = vmatpush.msra.mxu0 0.0
    %1190 = vmatpush.msra.mxu0 0.0
    %1191 = vmatpush.msra.mxu0 0.0
    %1192 = vmatpush.msra.mxu0 0.0
    %1193 = vmatpush.msra.mxu0 0.0
    %1194 = vmatpush.msra.mxu0 0.0
    %1195 = vmatpush.msra.mxu0 0.0
    %1196 = vmatpush.msra.mxu0 0.0
    %1197 = vmatpush.msra.mxu0 0.0
    %1198 = vmatpush.msra.mxu0 0.0
    %1199 = vmatpush.msra.mxu0 0.0
    %1200 = vmatpush.msra.mxu0 0.0
    %1201 = vmatpush.msra.mxu0 0.0
    %1202 = vmatpush.msra.mxu0 0.0
    %1203 = vmatpush.msra.mxu0 0.0
    %1204 = vmatpush.msra.mxu0 %v1173
    %1205 = vmatmul.f32.gmra.mxu0 %v1171
    %v1206 = vpop.f32.mrf.mxu0
    %v1207 = vadd.f32 0.0, %v1206
    %1208 = vdwg.mxu0
    %1209 = vmatpush.msra.mxu0 0.0
    %1210 = vmatpush.msra.mxu0 0.0
    %1211 = vmatpush.msra.mxu0 0.0
    %1212 = vmatpush.msra.mxu0 0.0
    %1213 = vmatpush.msra.mxu0 0.0
    %1214 = vmatpush.msra.mxu0 0.0
    %1215 = vmatpush.msra.mxu0 0.0
    %1216 = vmatpush.msra.mxu0 0.0
    %1217 = vmatpush.msra.mxu0 0.0
    %1218 = vmatpush.msra.mxu0 0.0
    %1219 = vmatpush.msra.mxu0 0.0
    %1220 = vmatpush.msra.mxu0 0.0
    %1221 = vmatpush.msra.mxu0 0.0
    %1222 = vmatpush.msra.mxu0 0.0
    %1223 = vmatpush.msra.mxu0 0.0
    %1224 = vmatpush.msra.mxu0 %v1175
    %1225 = vmatmul.f32.gmra.mxu0 %v1171
    %v1226 = vpop.f32.mrf.mxu0
    %v1227 = vadd.f32 0.0, %v1226
    %1228 = vdwg.mxu0
    %1229 = vmatpush.msra.mxu0 0.0
    %1230 = vmatpush.msra.mxu0 0.0
    %1231 = vmatpush.msra.mxu0 0.0
    %1232 = vmatpush.msra.mxu0 0.0
    %1233 = vmatpush.msra.mxu0 0.0
    %1234 = vmatpush.msra.mxu0 0.0
    %1235 = vmatpush.msra.mxu0 0.0
    %1236 = vmatpush.msra.mxu0 0.0
    %1237 = vmatpush.msra.mxu0 0.0
    %1238 = vmatpush.msra.mxu0 0.0
    %1239 = vmatpush.msra.mxu0 0.0
    %1240 = vmatpush.msra.mxu0 0.0
    %1241 = vmatpush.msra.mxu0 0.0
    %1242 = vmatpush.msra.mxu0 0.0
    %1243 = vmatpush.msra.mxu0 0.0
    %1244 = vmatpush.msra.mxu0 %v1177
    %1245 = vmatmul.f32.gmra.mxu0 %v1171
    %v1246 = vpop.f32.mrf.mxu0
    %v1247 = vadd.f32 0.0, %v1246
    %1248 = vdwg.mxu0
    %1249 = vmatpush.msra.mxu0 0.0
    %1250 = vmatpush.msra.mxu0 0.0
    %1251 = vmatpush.msra.mxu0 0.0
    %1252 = vmatpush.msra.mxu0 0.0
    %1253 = vmatpush.msra.mxu0 0.0
    %1254 = vmatpush.msra.mxu0 0.0
    %1255 = vmatpush.msra.mxu0 0.0
    %1256 = vmatpush.msra.mxu0 0.0
    %1257 = vmatpush.msra.mxu0 0.0
    %1258 = vmatpush.msra.mxu0 0.0
    %1259 = vmatpush.msra.mxu0 0.0
    %1260 = vmatpush.msra.mxu0 0.0
    %1261 = vmatpush.msra.mxu0 0.0
    %1262 = vmatpush.msra.mxu0 0.0
    %1263 = vmatpush.msra.mxu0 0.0
    %1264 = vmatpush.msra.mxu0 %v1179
    %1265 = vmatmul.f32.gmra.mxu0 %v1171
    %v1266 = vpop.f32.mrf.mxu0
    %v1267 = vadd.f32 0.0, %v1266
    %1268 = vdwg.mxu0
    %1269 = vmatpush.msra.mxu0 0.0
    %1270 = vmatpush.msra.mxu0 0.0
    %1271 = vmatpush.msra.mxu0 0.0
    %1272 = vmatpush.msra.mxu0 0.0
    %1273 = vmatpush.msra.mxu0 0.0
    %1274 = vmatpush.msra.mxu0 0.0
    %1275 = vmatpush.msra.mxu0 0.0
    %1276 = vmatpush.msra.mxu0 0.0
    %1277 = vmatpush.msra.mxu0 0.0
    %1278 = vmatpush.msra.mxu0 0.0
    %1279 = vmatpush.msra.mxu0 0.0
    %1280 = vmatpush.msra.mxu0 0.0
    %1281 = vmatpush.msra.mxu0 0.0
    %1282 = vmatpush.msra.mxu0 0.0
    %1283 = vmatpush.msra.mxu0 0.0
    %1284 = vmatpush.msra.mxu0 %v1181
    %1285 = vmatmul.f32.gmra.mxu0 %v1171
    %v1286 = vpop.f32.mrf.mxu0
    %v1287 = vadd.f32 0.0, %v1286
    %1288 = vdwg.mxu0
    %1289 = vmatpush.msra.mxu0 0.0
    %1290 = vmatpush.msra.mxu0 0.0
    %1291 = vmatpush.msra.mxu0 0.0
    %1292 = vmatpush.msra.mxu0 0.0
    %1293 = vmatpush.msra.mxu0 0.0
    %1294 = vmatpush.msra.mxu0 0.0
    %1295 = vmatpush.msra.mxu0 0.0
    %1296 = vmatpush.msra.mxu0 0.0
    %1297 = vmatpush.msra.mxu0 0.0
    %1298 = vmatpush.msra.mxu0 0.0
    %1299 = vmatpush.msra.mxu0 0.0
    %1300 = vmatpush.msra.mxu0 0.0
    %1301 = vmatpush.msra.mxu0 0.0
    %1302 = vmatpush.msra.mxu0 0.0
    %1303 = vmatpush.msra.mxu0 0.0
    %1304 = vmatpush.msra.mxu0 %v1183
    %1305 = vmatmul.f32.gmra.mxu0 %v1171
    %v1306 = vpop.f32.mrf.mxu0
    %v1307 = vadd.f32 0.0, %v1306
    %1308 = vdwg.mxu0
    %1309 = vmatpush.msra.mxu0 0.0
    %1310 = vmatpush.msra.mxu0 0.0
    %1311 = vmatpush.msra.mxu0 0.0
    %1312 = vmatpush.msra.mxu0 0.0
    %1313 = vmatpush.msra.mxu0 0.0
    %1314 = vmatpush.msra.mxu0 0.0
    %1315 = vmatpush.msra.mxu0 0.0
    %1316 = vmatpush.msra.mxu0 0.0
    %1317 = vmatpush.msra.mxu0 0.0
    %1318 = vmatpush.msra.mxu0 0.0
    %1319 = vmatpush.msra.mxu0 0.0
    %1320 = vmatpush.msra.mxu0 0.0
    %1321 = vmatpush.msra.mxu0 0.0
    %1322 = vmatpush.msra.mxu0 0.0
    %1323 = vmatpush.msra.mxu0 0.0
    %1324 = vmatpush.msra.mxu0 %v1185
    %1325 = vmatmul.f32.gmra.mxu0 %v1171
    %v1326 = vpop.f32.mrf.mxu0
    %v1327 = vadd.f32 0.0, %v1326
    %1328 = vdwg.mxu0
    %1329 = vmatpush.msra.mxu0 0.0
    %1330 = vmatpush.msra.mxu0 0.0
    %1331 = vmatpush.msra.mxu0 0.0
    %1332 = vmatpush.msra.mxu0 0.0
    %1333 = vmatpush.msra.mxu0 0.0
    %1334 = vmatpush.msra.mxu0 0.0
    %1335 = vmatpush.msra.mxu0 0.0
    %1336 = vmatpush.msra.mxu0 0.0
    %1337 = vmatpush.msra.mxu0 0.0
    %1338 = vmatpush.msra.mxu0 0.0
    %1339 = vmatpush.msra.mxu0 0.0
    %1340 = vmatpush.msra.mxu0 0.0
    %1341 = vmatpush.msra.mxu0 0.0
    %1342 = vmatpush.msra.mxu0 0.0
    %1343 = vmatpush.msra.mxu0 0.0
    %1344 = vmatpush.msra.mxu0 %v1187
    %1345 = vmatmul.f32.gmra.mxu0 %v1171
    %v1346 = vpop.f32.mrf.mxu0
    %v1347 = vadd.f32 0.0, %v1346
    %1348 = vdwg.mxu0
    %v1349 = vadd.f32 %v1127, %v1207
    %v1350 = vadd.f32 %v1128, %v1227
    %v1351 = vadd.f32 %v1129, %v1247
    %v1352 = vadd.f32 %v1130, %v1267
    %v1353 = vadd.f32 %v1131, %v1287
    %v1354 = vadd.f32 %v1132, %v1307
    %v1355 = vadd.f32 %v1133, %v1327
    %v1356 = vadd.f32 %v1134, %v1347
    %1357 = vst [vmem:[#allocation1] ss:$4 sm:$0xff] %v119
    %s1358 = scalar_lea.vmem [#allocation1], 32
    %1359 = vst [vmem:[%s1358] ss:$4 sm:$0xff] %v120
    %v1360 = vld.sshfl [vmem:[#allocation1] sm:$0xff pattern:$0x73625140]
    %v1361 = vld.sshfl [vmem:[#allocation1 + $0x8] sm:$0xff pattern:$0x73625140]
    %v1362 = vld.sshfl [vmem:[#allocation1 + $0x10] sm:$0xff pattern:$0x73625140]
    %v1363 = vld.sshfl [vmem:[#allocation1 + $0x18] sm:$0xff pattern:$0x73625140]
    %v1364 = vld.sshfl [vmem:[#allocation1 + $0x20] sm:$0xff pattern:$0x73625140]
    %v1365 = vld.sshfl [vmem:[#allocation1 + $0x28] sm:$0xff pattern:$0x73625140]
    %v1366 = vld.sshfl [vmem:[#allocation1 + $0x30] sm:$0xff pattern:$0x73625140]
    %v1367 = vld.sshfl [vmem:[#allocation1 + $0x38] sm:$0xff pattern:$0x73625140]
    %1368 = vrot.lane.b32.xlu0 %v1360, 124
    %v1369 = vpop.permute.xlu0 %1368
    %1370 = vrot.lane.b32.xlu0 %v1361, 124
    %v1371 = vpop.permute.xlu0 %1370
    %1372 = vrot.lane.b32.xlu0 %v1362, 124
    %v1373 = vpop.permute.xlu0 %1372
    %1374 = vrot.lane.b32.xlu0 %v1363, 124
    %v1375 = vpop.permute.xlu0 %1374
    %1376 = vrot.lane.b32.xlu0 %v1364, 124
    %v1377 = vpop.permute.xlu0 %1376
    %1378 = vrot.lane.b32.xlu0 %v1365, 124
    %v1379 = vpop.permute.xlu0 %1378
    %1380 = vrot.lane.b32.xlu0 %v1366, 124
    %v1381 = vpop.permute.xlu0 %1380
    %1382 = vrot.lane.b32.xlu0 %v1367, 124
    %v1383 = vpop.permute.xlu0 %1382
    %vm1384 = vcmask 1014784
    %v1385 = vsel %vm1384, %v1369, %v1371
    %v1386 = vsel %vm1384, %v1371, %v1373
    %v1387 = vsel %vm1384, %v1373, %v1375
    %v1388 = vsel %vm1384, %v1375, %v1377
    %v1389 = vsel %vm1384, %v1377, %v1379
    %v1390 = vsel %vm1384, %v1379, %v1381
    %v1391 = vsel %vm1384, %v1381, %v1383
    %v1393 = vsel %vm542, %v500, 0
    %v1395 = vsel %vm546, %v1385, 0
    %v1397 = vsel %vm546, %v1386, 0
    %v1399 = vsel %vm546, %v1387, 0
    %v1401 = vsel %vm546, %v1388, 0
    %v1403 = vsel %vm546, %v1389, 0
    %v1405 = vsel %vm546, %v1390, 0
    %v1407 = vsel %vm546, %v1391, 0
    %v1409 = vsel %vm546, %v1383, 0
    %1411 = vmatpush.msra.mxu0 0.0
    %1412 = vmatpush.msra.mxu0 0.0
    %1413 = vmatpush.msra.mxu0 0.0
    %1414 = vmatpush.msra.mxu0 0.0
    %1415 = vmatpush.msra.mxu0 0.0
    %1416 = vmatpush.msra.mxu0 0.0
    %1417 = vmatpush.msra.mxu0 0.0
    %1418 = vmatpush.msra.mxu0 0.0
    %1419 = vmatpush.msra.mxu0 0.0
    %1420 = vmatpush.msra.mxu0 0.0
    %1421 = vmatpush.msra.mxu0 0.0
    %1422 = vmatpush.msra.mxu0 0.0
    %1423 = vmatpush.msra.mxu0 0.0
    %1424 = vmatpush.msra.mxu0 0.0
    %1425 = vmatpush.msra.mxu0 0.0
    %1426 = vmatpush.msra.mxu0 %v1395
    %1427 = vmatmul.f32.gmra.mxu0 %v1393
    %v1428 = vpop.f32.mrf.mxu0
    %v1429 = vadd.f32 0.0, %v1428
    %1430 = vdwg.mxu0
    %1431 = vmatpush.msra.mxu0 0.0
    %1432 = vmatpush.msra.mxu0 0.0
    %1433 = vmatpush.msra.mxu0 0.0
    %1434 = vmatpush.msra.mxu0 0.0
    %1435 = vmatpush.msra.mxu0 0.0
    %1436 = vmatpush.msra.mxu0 0.0
    %1437 = vmatpush.msra.mxu0 0.0
    %1438 = vmatpush.msra.mxu0 0.0
    %1439 = vmatpush.msra.mxu0 0.0
    %1440 = vmatpush.msra.mxu0 0.0
    %1441 = vmatpush.msra.mxu0 0.0
    %1442 = vmatpush.msra.mxu0 0.0
    %1443 = vmatpush.msra.mxu0 0.0
    %1444 = vmatpush.msra.mxu0 0.0
    %1445 = vmatpush.msra.mxu0 0.0
    %1446 = vmatpush.msra.mxu0 %v1397
    %1447 = vmatmul.f32.gmra.mxu0 %v1393
    %v1448 = vpop.f32.mrf.mxu0
    %v1449 = vadd.f32 0.0, %v1448
    %1450 = vdwg.mxu0
    %1451 = vmatpush.msra.mxu0 0.0
    %1452 = vmatpush.msra.mxu0 0.0
    %1453 = vmatpush.msra.mxu0 0.0
    %1454 = vmatpush.msra.mxu0 0.0
    %1455 = vmatpush.msra.mxu0 0.0
    %1456 = vmatpush.msra.mxu0 0.0
    %1457 = vmatpush.msra.mxu0 0.0
    %1458 = vmatpush.msra.mxu0 0.0
    %1459 = vmatpush.msra.mxu0 0.0
    %1460 = vmatpush.msra.mxu0 0.0
    %1461 = vmatpush.msra.mxu0 0.0
    %1462 = vmatpush.msra.mxu0 0.0
    %1463 = vmatpush.msra.mxu0 0.0
    %1464 = vmatpush.msra.mxu0 0.0
    %1465 = vmatpush.msra.mxu0 0.0
    %1466 = vmatpush.msra.mxu0 %v1399
    %1467 = vmatmul.f32.gmra.mxu0 %v1393
    %v1468 = vpop.f32.mrf.mxu0
    %v1469 = vadd.f32 0.0, %v1468
    %1470 = vdwg.mxu0
    %1471 = vmatpush.msra.mxu0 0.0
    %1472 = vmatpush.msra.mxu0 0.0
    %1473 = vmatpush.msra.mxu0 0.0
    %1474 = vmatpush.msra.mxu0 0.0
    %1475 = vmatpush.msra.mxu0 0.0
    %1476 = vmatpush.msra.mxu0 0.0
    %1477 = vmatpush.msra.mxu0 0.0
    %1478 = vmatpush.msra.mxu0 0.0
    %1479 = vmatpush.msra.mxu0 0.0
    %1480 = vmatpush.msra.mxu0 0.0
    %1481 = vmatpush.msra.mxu0 0.0
    %1482 = vmatpush.msra.mxu0 0.0
    %1483 = vmatpush.msra.mxu0 0.0
    %1484 = vmatpush.msra.mxu0 0.0
    %1485 = vmatpush.msra.mxu0 0.0
    %1486 = vmatpush.msra.mxu0 %v1401
    %1487 = vmatmul.f32.gmra.mxu0 %v1393
    %v1488 = vpop.f32.mrf.mxu0
    %v1489 = vadd.f32 0.0, %v1488
    %1490 = vdwg.mxu0
    %1491 = vmatpush.msra.mxu0 0.0
    %1492 = vmatpush.msra.mxu0 0.0
    %1493 = vmatpush.msra.mxu0 0.0
    %1494 = vmatpush.msra.mxu0 0.0
    %1495 = vmatpush.msra.mxu0 0.0
    %1496 = vmatpush.msra.mxu0 0.0
    %1497 = vmatpush.msra.mxu0 0.0
    %1498 = vmatpush.msra.mxu0 0.0
    %1499 = vmatpush.msra.mxu0 0.0
    %1500 = vmatpush.msra.mxu0 0.0
    %1501 = vmatpush.msra.mxu0 0.0
    %1502 = vmatpush.msra.mxu0 0.0
    %1503 = vmatpush.msra.mxu0 0.0
    %1504 = vmatpush.msra.mxu0 0.0
    %1505 = vmatpush.msra.mxu0 0.0
    %1506 = vmatpush.msra.mxu0 %v1403
    %1507 = vmatmul.f32.gmra.mxu0 %v1393
    %v1508 = vpop.f32.mrf.mxu0
    %v1509 = vadd.f32 0.0, %v1508
    %1510 = vdwg.mxu0
    %1511 = vmatpush.msra.mxu0 0.0
    %1512 = vmatpush.msra.mxu0 0.0
    %1513 = vmatpush.msra.mxu0 0.0
    %1514 = vmatpush.msra.mxu0 0.0
    %1515 = vmatpush.msra.mxu0 0.0
    %1516 = vmatpush.msra.mxu0 0.0
    %1517 = vmatpush.msra.mxu0 0.0
    %1518 = vmatpush.msra.mxu0 0.0
    %1519 = vmatpush.msra.mxu0 0.0
    %1520 = vmatpush.msra.mxu0 0.0
    %1521 = vmatpush.msra.mxu0 0.0
    %1522 = vmatpush.msra.mxu0 0.0
    %1523 = vmatpush.msra.mxu0 0.0
    %1524 = vmatpush.msra.mxu0 0.0
    %1525 = vmatpush.msra.mxu0 0.0
    %1526 = vmatpush.msra.mxu0 %v1405
    %1527 = vmatmul.f32.gmra.mxu0 %v1393
    %v1528 = vpop.f32.mrf.mxu0
    %v1529 = vadd.f32 0.0, %v1528
    %1530 = vdwg.mxu0
    %1531 = vmatpush.msra.mxu0 0.0
    %1532 = vmatpush.msra.mxu0 0.0
    %1533 = vmatpush.msra.mxu0 0.0
    %1534 = vmatpush.msra.mxu0 0.0
    %1535 = vmatpush.msra.mxu0 0.0
    %1536 = vmatpush.msra.mxu0 0.0
    %1537 = vmatpush.msra.mxu0 0.0
    %1538 = vmatpush.msra.mxu0 0.0
    %1539 = vmatpush.msra.mxu0 0.0
    %1540 = vmatpush.msra.mxu0 0.0
    %1541 = vmatpush.msra.mxu0 0.0
    %1542 = vmatpush.msra.mxu0 0.0
    %1543 = vmatpush.msra.mxu0 0.0
    %1544 = vmatpush.msra.mxu0 0.0
    %1545 = vmatpush.msra.mxu0 0.0
    %1546 = vmatpush.msra.mxu0 %v1407
    %1547 = vmatmul.f32.gmra.mxu0 %v1393
    %v1548 = vpop.f32.mrf.mxu0
    %v1549 = vadd.f32 0.0, %v1548
    %1550 = vdwg.mxu0
    %1551 = vmatpush.msra.mxu0 0.0
    %1552 = vmatpush.msra.mxu0 0.0
    %1553 = vmatpush.msra.mxu0 0.0
    %1554 = vmatpush.msra.mxu0 0.0
    %1555 = vmatpush.msra.mxu0 0.0
    %1556 = vmatpush.msra.mxu0 0.0
    %1557 = vmatpush.msra.mxu0 0.0
    %1558 = vmatpush.msra.mxu0 0.0
    %1559 = vmatpush.msra.mxu0 0.0
    %1560 = vmatpush.msra.mxu0 0.0
    %1561 = vmatpush.msra.mxu0 0.0
    %1562 = vmatpush.msra.mxu0 0.0
    %1563 = vmatpush.msra.mxu0 0.0
    %1564 = vmatpush.msra.mxu0 0.0
    %1565 = vmatpush.msra.mxu0 0.0
    %1566 = vmatpush.msra.mxu0 %v1409
    %1567 = vmatmul.f32.gmra.mxu0 %v1393
    %v1568 = vpop.f32.mrf.mxu0
    %v1569 = vadd.f32 0.0, %v1568
    %1570 = vdwg.mxu0
    %v1571 = vadd.f32 %v1349, %v1429
    %v1572 = vadd.f32 %v1350, %v1449
    %v1573 = vadd.f32 %v1351, %v1469
    %v1574 = vadd.f32 %v1352, %v1489
    %v1575 = vadd.f32 %v1353, %v1509
    %v1576 = vadd.f32 %v1354, %v1529
    %v1577 = vadd.f32 %v1355, %v1549
    %v1578 = vadd.f32 %v1356, %v1569
    %1579 = vst [vmem:[#allocation1] ss:$4 sm:$0xff] %v119
    %s1580 = scalar_lea.vmem [#allocation1], 32
    %1581 = vst [vmem:[%s1580] ss:$4 sm:$0xff] %v120
    %v1582 = vld.sshfl [vmem:[#allocation1] sm:$0xff pattern:$0x73625140]
    %v1583 = vld.sshfl [vmem:[#allocation1 + $0x8] sm:$0xff pattern:$0x73625140]
    %v1584 = vld.sshfl [vmem:[#allocation1 + $0x10] sm:$0xff pattern:$0x73625140]
    %v1585 = vld.sshfl [vmem:[#allocation1 + $0x18] sm:$0xff pattern:$0x73625140]
    %v1586 = vld.sshfl [vmem:[#allocation1 + $0x20] sm:$0xff pattern:$0x73625140]
    %v1587 = vld.sshfl [vmem:[#allocation1 + $0x28] sm:$0xff pattern:$0x73625140]
    %v1588 = vld.sshfl [vmem:[#allocation1 + $0x30] sm:$0xff pattern:$0x73625140]
    %v1589 = vld.sshfl [vmem:[#allocation1 + $0x38] sm:$0xff pattern:$0x73625140]
    %1590 = vrot.lane.b32.xlu0 %v1582, 123
    %v1591 = vpop.permute.xlu0 %1590
    %1592 = vrot.lane.b32.xlu0 %v1583, 123
    %v1593 = vpop.permute.xlu0 %1592
    %1594 = vrot.lane.b32.xlu0 %v1584, 123
    %v1595 = vpop.permute.xlu0 %1594
    %1596 = vrot.lane.b32.xlu0 %v1585, 123
    %v1597 = vpop.permute.xlu0 %1596
    %1598 = vrot.lane.b32.xlu0 %v1586, 123
    %v1599 = vpop.permute.xlu0 %1598
    %1600 = vrot.lane.b32.xlu0 %v1587, 123
    %v1601 = vpop.permute.xlu0 %1600
    %1602 = vrot.lane.b32.xlu0 %v1588, 123
    %v1603 = vpop.permute.xlu0 %1602
    %1604 = vrot.lane.b32.xlu0 %v1589, 123
    %v1605 = vpop.permute.xlu0 %1604
    %vm1606 = vcmask 1006592
    %v1607 = vsel %vm1606, %v1591, %v1593
    %v1608 = vsel %vm1606, %v1593, %v1595
    %v1609 = vsel %vm1606, %v1595, %v1597
    %v1610 = vsel %vm1606, %v1597, %v1599
    %v1611 = vsel %vm1606, %v1599, %v1601
    %v1612 = vsel %vm1606, %v1601, %v1603
    %v1613 = vsel %vm1606, %v1603, %v1605
    %v1615 = vsel %vm542, %v501, 0
    %v1617 = vsel %vm546, %v1607, 0
    %v1619 = vsel %vm546, %v1608, 0
    %v1621 = vsel %vm546, %v1609, 0
    %v1623 = vsel %vm546, %v1610, 0
    %v1625 = vsel %vm546, %v1611, 0
    %v1627 = vsel %vm546, %v1612, 0
    %v1629 = vsel %vm546, %v1613, 0
    %v1631 = vsel %vm546, %v1605, 0
    %1633 = vmatpush.msra.mxu0 0.0
    %1634 = vmatpush.msra.mxu0 0.0
    %1635 = vmatpush.msra.mxu0 0.0
    %1636 = vmatpush.msra.mxu0 0.0
    %1637 = vmatpush.msra.mxu0 0.0
    %1638 = vmatpush.msra.mxu0 0.0
    %1639 = vmatpush.msra.mxu0 0.0
    %1640 = vmatpush.msra.mxu0 0.0
    %1641 = vmatpush.msra.mxu0 0.0
    %1642 = vmatpush.msra.mxu0 0.0
    %1643 = vmatpush.msra.mxu0 0.0
    %1644 = vmatpush.msra.mxu0 0.0
    %1645 = vmatpush.msra.mxu0 0.0
    %1646 = vmatpush.msra.mxu0 0.0
    %1647 = vmatpush.msra.mxu0 0.0
    %1648 = vmatpush.msra.mxu0 %v1617
    %1649 = vmatmul.f32.gmra.mxu0 %v1615
    %v1650 = vpop.f32.mrf.mxu0
    %v1651 = vadd.f32 0.0, %v1650
    %1652 = vdwg.mxu0
    %1653 = vmatpush.msra.mxu0 0.0
    %1654 = vmatpush.msra.mxu0 0.0
    %1655 = vmatpush.msra.mxu0 0.0
    %1656 = vmatpush.msra.mxu0 0.0
    %1657 = vmatpush.msra.mxu0 0.0
    %1658 = vmatpush.msra.mxu0 0.0
    %1659 = vmatpush.msra.mxu0 0.0
    %1660 = vmatpush.msra.mxu0 0.0
    %1661 = vmatpush.msra.mxu0 0.0
    %1662 = vmatpush.msra.mxu0 0.0
    %1663 = vmatpush.msra.mxu0 0.0
    %1664 = vmatpush.msra.mxu0 0.0
    %1665 = vmatpush.msra.mxu0 0.0
    %1666 = vmatpush.msra.mxu0 0.0
    %1667 = vmatpush.msra.mxu0 0.0
    %1668 = vmatpush.msra.mxu0 %v1619
    %1669 = vmatmul.f32.gmra.mxu0 %v1615
    %v1670 = vpop.f32.mrf.mxu0
    %v1671 = vadd.f32 0.0, %v1670
    %1672 = vdwg.mxu0
    %1673 = vmatpush.msra.mxu0 0.0
    %1674 = vmatpush.msra.mxu0 0.0
    %1675 = vmatpush.msra.mxu0 0.0
    %1676 = vmatpush.msra.mxu0 0.0
    %1677 = vmatpush.msra.mxu0 0.0
    %1678 = vmatpush.msra.mxu0 0.0
    %1679 = vmatpush.msra.mxu0 0.0
    %1680 = vmatpush.msra.mxu0 0.0
    %1681 = vmatpush.msra.mxu0 0.0
    %1682 = vmatpush.msra.mxu0 0.0
    %1683 = vmatpush.msra.mxu0 0.0
    %1684 = vmatpush.msra.mxu0 0.0
    %1685 = vmatpush.msra.mxu0 0.0
    %1686 = vmatpush.msra.mxu0 0.0
    %1687 = vmatpush.msra.mxu0 0.0
    %1688 = vmatpush.msra.mxu0 %v1621
    %1689 = vmatmul.f32.gmra.mxu0 %v1615
    %v1690 = vpop.f32.mrf.mxu0
    %v1691 = vadd.f32 0.0, %v1690
    %1692 = vdwg.mxu0
    %1693 = vmatpush.msra.mxu0 0.0
    %1694 = vmatpush.msra.mxu0 0.0
    %1695 = vmatpush.msra.mxu0 0.0
    %1696 = vmatpush.msra.mxu0 0.0
    %1697 = vmatpush.msra.mxu0 0.0
    %1698 = vmatpush.msra.mxu0 0.0
    %1699 = vmatpush.msra.mxu0 0.0
    %1700 = vmatpush.msra.mxu0 0.0
    %1701 = vmatpush.msra.mxu0 0.0
    %1702 = vmatpush.msra.mxu0 0.0
    %1703 = vmatpush.msra.mxu0 0.0
    %1704 = vmatpush.msra.mxu0 0.0
    %1705 = vmatpush.msra.mxu0 0.0
    %1706 = vmatpush.msra.mxu0 0.0
    %1707 = vmatpush.msra.mxu0 0.0
    %1708 = vmatpush.msra.mxu0 %v1623
    %1709 = vmatmul.f32.gmra.mxu0 %v1615
    %v1710 = vpop.f32.mrf.mxu0
    %v1711 = vadd.f32 0.0, %v1710
    %1712 = vdwg.mxu0
    %1713 = vmatpush.msra.mxu0 0.0
    %1714 = vmatpush.msra.mxu0 0.0
    %1715 = vmatpush.msra.mxu0 0.0
    %1716 = vmatpush.msra.mxu0 0.0
    %1717 = vmatpush.msra.mxu0 0.0
    %1718 = vmatpush.msra.mxu0 0.0
    %1719 = vmatpush.msra.mxu0 0.0
    %1720 = vmatpush.msra.mxu0 0.0
    %1721 = vmatpush.msra.mxu0 0.0
    %1722 = vmatpush.msra.mxu0 0.0
    %1723 = vmatpush.msra.mxu0 0.0
    %1724 = vmatpush.msra.mxu0 0.0
    %1725 = vmatpush.msra.mxu0 0.0
    %1726 = vmatpush.msra.mxu0 0.0
    %1727 = vmatpush.msra.mxu0 0.0
    %1728 = vmatpush.msra.mxu0 %v1625
    %1729 = vmatmul.f32.gmra.mxu0 %v1615
    %v1730 = vpop.f32.mrf.mxu0
    %v1731 = vadd.f32 0.0, %v1730
    %1732 = vdwg.mxu0
    %1733 = vmatpush.msra.mxu0 0.0
    %1734 = vmatpush.msra.mxu0 0.0
    %1735 = vmatpush.msra.mxu0 0.0
    %1736 = vmatpush.msra.mxu0 0.0
    %1737 = vmatpush.msra.mxu0 0.0
    %1738 = vmatpush.msra.mxu0 0.0
    %1739 = vmatpush.msra.mxu0 0.0
    %1740 = vmatpush.msra.mxu0 0.0
    %1741 = vmatpush.msra.mxu0 0.0
    %1742 = vmatpush.msra.mxu0 0.0
    %1743 = vmatpush.msra.mxu0 0.0
    %1744 = vmatpush.msra.mxu0 0.0
    %1745 = vmatpush.msra.mxu0 0.0
    %1746 = vmatpush.msra.mxu0 0.0
    %1747 = vmatpush.msra.mxu0 0.0
    %1748 = vmatpush.msra.mxu0 %v1627
    %1749 = vmatmul.f32.gmra.mxu0 %v1615
    %v1750 = vpop.f32.mrf.mxu0
    %v1751 = vadd.f32 0.0, %v1750
    %1752 = vdwg.mxu0
    %1753 = vmatpush.msra.mxu0 0.0
    %1754 = vmatpush.msra.mxu0 0.0
    %1755 = vmatpush.msra.mxu0 0.0
    %1756 = vmatpush.msra.mxu0 0.0
    %1757 = vmatpush.msra.mxu0 0.0
    %1758 = vmatpush.msra.mxu0 0.0
    %1759 = vmatpush.msra.mxu0 0.0
    %1760 = vmatpush.msra.mxu0 0.0
    %1761 = vmatpush.msra.mxu0 0.0
    %1762 = vmatpush.msra.mxu0 0.0
    %1763 = vmatpush.msra.mxu0 0.0
    %1764 = vmatpush.msra.mxu0 0.0
    %1765 = vmatpush.msra.mxu0 0.0
    %1766 = vmatpush.msra.mxu0 0.0
    %1767 = vmatpush.msra.mxu0 0.0
    %1768 = vmatpush.msra.mxu0 %v1629
    %1769 = vmatmul.f32.gmra.mxu0 %v1615
    %v1770 = vpop.f32.mrf.mxu0
    %v1771 = vadd.f32 0.0, %v1770
    %1772 = vdwg.mxu0
    %1773 = vmatpush.msra.mxu0 0.0
    %1774 = vmatpush.msra.mxu0 0.0
    %1775 = vmatpush.msra.mxu0 0.0
    %1776 = vmatpush.msra.mxu0 0.0
    %1777 = vmatpush.msra.mxu0 0.0
    %1778 = vmatpush.msra.mxu0 0.0
    %1779 = vmatpush.msra.mxu0 0.0
    %1780 = vmatpush.msra.mxu0 0.0
    %1781 = vmatpush.msra.mxu0 0.0
    %1782 = vmatpush.msra.mxu0 0.0
    %1783 = vmatpush.msra.mxu0 0.0
    %1784 = vmatpush.msra.mxu0 0.0
    %1785 = vmatpush.msra.mxu0 0.0
    %1786 = vmatpush.msra.mxu0 0.0
    %1787 = vmatpush.msra.mxu0 0.0
    %1788 = vmatpush.msra.mxu0 %v1631
    %1789 = vmatmul.f32.gmra.mxu0 %v1615
    %v1790 = vpop.f32.mrf.mxu0
    %v1791 = vadd.f32 0.0, %v1790
    %1792 = vdwg.mxu0
    %v1793 = vadd.f32 %v1571, %v1651
    %v1794 = vadd.f32 %v1572, %v1671
    %v1795 = vadd.f32 %v1573, %v1691
    %v1796 = vadd.f32 %v1574, %v1711
    %v1797 = vadd.f32 %v1575, %v1731
    %v1798 = vadd.f32 %v1576, %v1751
    %v1799 = vadd.f32 %v1577, %v1771
    %v1800 = vadd.f32 %v1578, %v1791
    %1801 = vst [vmem:[#allocation1] ss:$4 sm:$0xff] %v119
    %s1802 = scalar_lea.vmem [#allocation1], 32
    %1803 = vst [vmem:[%s1802] ss:$4 sm:$0xff] %v120
    %v1804 = vld.sshfl [vmem:[#allocation1] sm:$0xff pattern:$0x73625140]
    %v1805 = vld.sshfl [vmem:[#allocation1 + $0x8] sm:$0xff pattern:$0x73625140]
    %v1806 = vld.sshfl [vmem:[#allocation1 + $0x10] sm:$0xff pattern:$0x73625140]
    %v1807 = vld.sshfl [vmem:[#allocation1 + $0x18] sm:$0xff pattern:$0x73625140]
    %v1808 = vld.sshfl [vmem:[#allocation1 + $0x20] sm:$0xff pattern:$0x73625140]
    %v1809 = vld.sshfl [vmem:[#allocation1 + $0x28] sm:$0xff pattern:$0x73625140]
    %v1810 = vld.sshfl [vmem:[#allocation1 + $0x30] sm:$0xff pattern:$0x73625140]
    %v1811 = vld.sshfl [vmem:[#allocation1 + $0x38] sm:$0xff pattern:$0x73625140]
    %1812 = vrot.lane.b32.xlu0 %v1804, 122
    %v1813 = vpop.permute.xlu0 %1812
    %1814 = vrot.lane.b32.xlu0 %v1805, 122
    %v1815 = vpop.permute.xlu0 %1814
    %1816 = vrot.lane.b32.xlu0 %v1806, 122
    %v1817 = vpop.permute.xlu0 %1816
    %1818 = vrot.lane.b32.xlu0 %v1807, 122
    %v1819 = vpop.permute.xlu0 %1818
    %1820 = vrot.lane.b32.xlu0 %v1808, 122
    %v1821 = vpop.permute.xlu0 %1820
    %1822 = vrot.lane.b32.xlu0 %v1809, 122
    %v1823 = vpop.permute.xlu0 %1822
    %1824 = vrot.lane.b32.xlu0 %v1810, 122
    %v1825 = vpop.permute.xlu0 %1824
    %1826 = vrot.lane.b32.xlu0 %v1811, 122
    %v1827 = vpop.permute.xlu0 %1826
    %vm1828 = vcmask 998400
    %v1829 = vsel %vm1828, %v1813, %v1815
    %v1830 = vsel %vm1828, %v1815, %v1817
    %v1831 = vsel %vm1828, %v1817, %v1819
    %v1832 = vsel %vm1828, %v1819, %v1821
    %v1833 = vsel %vm1828, %v1821, %v1823
    %v1834 = vsel %vm1828, %v1823, %v1825
    %v1835 = vsel %vm1828, %v1825, %v1827
    %v1837 = vsel %vm542, %v502, 0
    %v1839 = vsel %vm546, %v1829, 0
    %v1841 = vsel %vm546, %v1830, 0
    %v1843 = vsel %vm546, %v1831, 0
    %v1845 = vsel %vm546, %v1832, 0
    %v1847 = vsel %vm546, %v1833, 0
    %v1849 = vsel %vm546, %v1834, 0
    %v1851 = vsel %vm546, %v1835, 0
    %v1853 = vsel %vm546, %v1827, 0
    %1855 = vmatpush.msra.mxu0 0.0
    %1856 = vmatpush.msra.mxu0 0.0
    %1857 = vmatpush.msra.mxu0 0.0
    %1858 = vmatpush.msra.mxu0 0.0
    %1859 = vmatpush.msra.mxu0 0.0
    %1860 = vmatpush.msra.mxu0 0.0
    %1861 = vmatpush.msra.mxu0 0.0
    %1862 = vmatpush.msra.mxu0 0.0
    %1863 = vmatpush.msra.mxu0 0.0
    %1864 = vmatpush.msra.mxu0 0.0
    %1865 = vmatpush.msra.mxu0 0.0
    %1866 = vmatpush.msra.mxu0 0.0
    %1867 = vmatpush.msra.mxu0 0.0
    %1868 = vmatpush.msra.mxu0 0.0
    %1869 = vmatpush.msra.mxu0 0.0
    %1870 = vmatpush.msra.mxu0 %v1839
    %1871 = vmatmul.f32.gmra.mxu0 %v1837
    %v1872 = vpop.f32.mrf.mxu0
    %v1873 = vadd.f32 0.0, %v1872
    %1874 = vdwg.mxu0
    %1875 = vmatpush.msra.mxu0 0.0
    %1876 = vmatpush.msra.mxu0 0.0
    %1877 = vmatpush.msra.mxu0 0.0
    %1878 = vmatpush.msra.mxu0 0.0
    %1879 = vmatpush.msra.mxu0 0.0
    %1880 = vmatpush.msra.mxu0 0.0
    %1881 = vmatpush.msra.mxu0 0.0
    %1882 = vmatpush.msra.mxu0 0.0
    %1883 = vmatpush.msra.mxu0 0.0
    %1884 = vmatpush.msra.mxu0 0.0
    %1885 = vmatpush.msra.mxu0 0.0
    %1886 = vmatpush.msra.mxu0 0.0
    %1887 = vmatpush.msra.mxu0 0.0
    %1888 = vmatpush.msra.mxu0 0.0
    %1889 = vmatpush.msra.mxu0 0.0
    %1890 = vmatpush.msra.mxu0 %v1841
    %1891 = vmatmul.f32.gmra.mxu0 %v1837
    %v1892 = vpop.f32.mrf.mxu0
    %v1893 = vadd.f32 0.0, %v1892
    %1894 = vdwg.mxu0
    %1895 = vmatpush.msra.mxu0 0.0
    %1896 = vmatpush.msra.mxu0 0.0
    %1897 = vmatpush.msra.mxu0 0.0
    %1898 = vmatpush.msra.mxu0 0.0
    %1899 = vmatpush.msra.mxu0 0.0
    %1900 = vmatpush.msra.mxu0 0.0
    %1901 = vmatpush.msra.mxu0 0.0
    %1902 = vmatpush.msra.mxu0 0.0
    %1903 = vmatpush.msra.mxu0 0.0
    %1904 = vmatpush.msra.mxu0 0.0
    %1905 = vmatpush.msra.mxu0 0.0
    %1906 = vmatpush.msra.mxu0 0.0
    %1907 = vmatpush.msra.mxu0 0.0
    %1908 = vmatpush.msra.mxu0 0.0
    %1909 = vmatpush.msra.mxu0 0.0
    %1910 = vmatpush.msra.mxu0 %v1843
    %1911 = vmatmul.f32.gmra.mxu0 %v1837
    %v1912 = vpop.f32.mrf.mxu0
    %v1913 = vadd.f32 0.0, %v1912
    %1914 = vdwg.mxu0
    %1915 = vmatpush.msra.mxu0 0.0
    %1916 = vmatpush.msra.mxu0 0.0
    %1917 = vmatpush.msra.mxu0 0.0
    %1918 = vmatpush.msra.mxu0 0.0
    %1919 = vmatpush.msra.mxu0 0.0
    %1920 = vmatpush.msra.mxu0 0.0
    %1921 = vmatpush.msra.mxu0 0.0
    %1922 = vmatpush.msra.mxu0 0.0
    %1923 = vmatpush.msra.mxu0 0.0
    %1924 = vmatpush.msra.mxu0 0.0
    %1925 = vmatpush.msra.mxu0 0.0
    %1926 = vmatpush.msra.mxu0 0.0
    %1927 = vmatpush.msra.mxu0 0.0
    %1928 = vmatpush.msra.mxu0 0.0
    %1929 = vmatpush.msra.mxu0 0.0
    %1930 = vmatpush.msra.mxu0 %v1845
    %1931 = vmatmul.f32.gmra.mxu0 %v1837
    %v1932 = vpop.f32.mrf.mxu0
    %v1933 = vadd.f32 0.0, %v1932
    %1934 = vdwg.mxu0
    %1935 = vmatpush.msra.mxu0 0.0
    %1936 = vmatpush.msra.mxu0 0.0
    %1937 = vmatpush.msra.mxu0 0.0
    %1938 = vmatpush.msra.mxu0 0.0
    %1939 = vmatpush.msra.mxu0 0.0
    %1940 = vmatpush.msra.mxu0 0.0
    %1941 = vmatpush.msra.mxu0 0.0
    %1942 = vmatpush.msra.mxu0 0.0
    %1943 = vmatpush.msra.mxu0 0.0
    %1944 = vmatpush.msra.mxu0 0.0
    %1945 = vmatpush.msra.mxu0 0.0
    %1946 = vmatpush.msra.mxu0 0.0
    %1947 = vmatpush.msra.mxu0 0.0
    %1948 = vmatpush.msra.mxu0 0.0
    %1949 = vmatpush.msra.mxu0 0.0
    %1950 = vmatpush.msra.mxu0 %v1847
    %1951 = vmatmul.f32.gmra.mxu0 %v1837
    %v1952 = vpop.f32.mrf.mxu0
    %v1953 = vadd.f32 0.0, %v1952
    %1954 = vdwg.mxu0
    %1955 = vmatpush.msra.mxu0 0.0
    %1956 = vmatpush.msra.mxu0 0.0
    %1957 = vmatpush.msra.mxu0 0.0
    %1958 = vmatpush.msra.mxu0 0.0
    %1959 = vmatpush.msra.mxu0 0.0
    %1960 = vmatpush.msra.mxu0 0.0
    %1961 = vmatpush.msra.mxu0 0.0
    %1962 = vmatpush.msra.mxu0 0.0
    %1963 = vmatpush.msra.mxu0 0.0
    %1964 = vmatpush.msra.mxu0 0.0
    %1965 = vmatpush.msra.mxu0 0.0
    %1966 = vmatpush.msra.mxu0 0.0
    %1967 = vmatpush.msra.mxu0 0.0
    %1968 = vmatpush.msra.mxu0 0.0
    %1969 = vmatpush.msra.mxu0 0.0
    %1970 = vmatpush.msra.mxu0 %v1849
    %1971 = vmatmul.f32.gmra.mxu0 %v1837
    %v1972 = vpop.f32.mrf.mxu0
    %v1973 = vadd.f32 0.0, %v1972
    %1974 = vdwg.mxu0
    %1975 = vmatpush.msra.mxu0 0.0
    %1976 = vmatpush.msra.mxu0 0.0
    %1977 = vmatpush.msra.mxu0 0.0
    %1978 = vmatpush.msra.mxu0 0.0
    %1979 = vmatpush.msra.mxu0 0.0
    %1980 = vmatpush.msra.mxu0 0.0
    %1981 = vmatpush.msra.mxu0 0.0
    %1982 = vmatpush.msra.mxu0 0.0
    %1983 = vmatpush.msra.mxu0 0.0
    %1984 = vmatpush.msra.mxu0 0.0
    %1985 = vmatpush.msra.mxu0 0.0
    %1986 = vmatpush.msra.mxu0 0.0
    %1987 = vmatpush.msra.mxu0 0.0
    %1988 = vmatpush.msra.mxu0 0.0
    %1989 = vmatpush.msra.mxu0 0.0
    %1990 = vmatpush.msra.mxu0 %v1851
    %1991 = vmatmul.f32.gmra.mxu0 %v1837
    %v1992 = vpop.f32.mrf.mxu0
    %v1993 = vadd.f32 0.0, %v1992
    %1994 = vdwg.mxu0
    %1995 = vmatpush.msra.mxu0 0.0
    %1996 = vmatpush.msra.mxu0 0.0
    %1997 = vmatpush.msra.mxu0 0.0
    %1998 = vmatpush.msra.mxu0 0.0
    %1999 = vmatpush.msra.mxu0 0.0
    %2000 = vmatpush.msra.mxu0 0.0
    %2001 = vmatpush.msra.mxu0 0.0
    %2002 = vmatpush.msra.mxu0 0.0
    %2003 = vmatpush.msra.mxu0 0.0
    %2004 = vmatpush.msra.mxu0 0.0
    %2005 = vmatpush.msra.mxu0 0.0
    %2006 = vmatpush.msra.mxu0 0.0
    %2007 = vmatpush.msra.mxu0 0.0
    %2008 = vmatpush.msra.mxu0 0.0
    %2009 = vmatpush.msra.mxu0 0.0
    %2010 = vmatpush.msra.mxu0 %v1853
    %2011 = vmatmul.f32.gmra.mxu0 %v1837
    %v2012 = vpop.f32.mrf.mxu0
    %v2013 = vadd.f32 0.0, %v2012
    %2014 = vdwg.mxu0
    %v2015 = vadd.f32 %v1793, %v1873
    %v2016 = vadd.f32 %v1794, %v1893
    %v2017 = vadd.f32 %v1795, %v1913
    %v2018 = vadd.f32 %v1796, %v1933
    %v2019 = vadd.f32 %v1797, %v1953
    %v2020 = vadd.f32 %v1798, %v1973
    %v2021 = vadd.f32 %v1799, %v1993
    %v2022 = vadd.f32 %v1800, %v2013
    %2024 = vset.pattern.permute.xlu0 0
    %2025 = vperm.xlu0 %2024, %v503
    %v2026 = vpop.permute.xlu0 %2025
    %vm2028 = vcmask 801792
    %v2030 = vsel %vm2028, %v2022, 0
    %v2033 = vsel %vm546, %v493, 0
    %v2036 = vsel %vm546, %v494, 0
    %v2039 = vsel %vm546, %v495, 0
    %2041 = vmatpush.msra.mxu0 %v166
    %2042 = vmatpush.msra.mxu0 %v163
    %2043 = vmatpush.msra.mxu0 %v160
    %2044 = vmatpush.msra.mxu0 %v157
    %2045 = vmatpush.msra.mxu0 %v154
    %2046 = vmatpush.msra.mxu0 %v151
    %2047 = vmatpush.msra.mxu0 %v148
    %2048 = vmatpush.msra.mxu0 %v145
    %2049 = vmatpush.msra.mxu0 %v142
    %2050 = vmatpush.msra.mxu0 %v139
    %2051 = vmatpush.msra.mxu0 %v136
    %2052 = vmatpush.msra.mxu0 %v133
    %2053 = vmatpush.msra.mxu0 %v130
    %2054 = vmatpush.msra.mxu0 %v127
    %2055 = vmatpush.msra.mxu0 %v124
    %2056 = vmatpush.msra.mxu0 %v121
    %2057 = vmatmul.f32.gmra.mxu0 %v2015
    %v2058 = vpop.f32.mrf.mxu0
    %v2059 = vadd.f32 %v2026, %v2058
    %2060 = vdwg.mxu0
    %2061 = vmatpush.msra.mxu0 %v214
    %2062 = vmatpush.msra.mxu0 %v211
    %2063 = vmatpush.msra.mxu0 %v208
    %2064 = vmatpush.msra.mxu0 %v205
    %2065 = vmatpush.msra.mxu0 %v202
    %2066 = vmatpush.msra.mxu0 %v199
    %2067 = vmatpush.msra.mxu0 %v196
    %2068 = vmatpush.msra.mxu0 %v193
    %2069 = vmatpush.msra.mxu0 %v190
    %2070 = vmatpush.msra.mxu0 %v187
    %2071 = vmatpush.msra.mxu0 %v184
    %2072 = vmatpush.msra.mxu0 %v181
    %2073 = vmatpush.msra.mxu0 %v178
    %2074 = vmatpush.msra.mxu0 %v175
    %2075 = vmatpush.msra.mxu0 %v172
    %2076 = vmatpush.msra.mxu0 %v169
    %2077 = vmatmul.f32.gmra.mxu0 %v2016
    %v2078 = vpop.f32.mrf.mxu0
    %v2079 = vadd.f32 %v2059, %v2078
    %2080 = vdwg.mxu0
    %2081 = vmatpush.msra.mxu0 %v262
    %2082 = vmatpush.msra.mxu0 %v259
    %2083 = vmatpush.msra.mxu0 %v256
    %2084 = vmatpush.msra.mxu0 %v253
    %2085 = vmatpush.msra.mxu0 %v250
    %2086 = vmatpush.msra.mxu0 %v247
    %2087 = vmatpush.msra.mxu0 %v244
    %2088 = vmatpush.msra.mxu0 %v241
    %2089 = vmatpush.msra.mxu0 %v238
    %2090 = vmatpush.msra.mxu0 %v235
    %2091 = vmatpush.msra.mxu0 %v232
    %2092 = vmatpush.msra.mxu0 %v229
    %2093 = vmatpush.msra.mxu0 %v226
    %2094 = vmatpush.msra.mxu0 %v223
    %2095 = vmatpush.msra.mxu0 %v220
    %2096 = vmatpush.msra.mxu0 %v217
    %2097 = vmatmul.f32.gmra.mxu0 %v2017
    %v2098 = vpop.f32.mrf.mxu0
    %v2099 = vadd.f32 %v2079, %v2098
    %2100 = vdwg.mxu0
    %2101 = vmatpush.msra.mxu0 %v310
    %2102 = vmatpush.msra.mxu0 %v307
    %2103 = vmatpush.msra.mxu0 %v304
    %2104 = vmatpush.msra.mxu0 %v301
    %2105 = vmatpush.msra.mxu0 %v298
    %2106 = vmatpush.msra.mxu0 %v295
    %2107 = vmatpush.msra.mxu0 %v292
    %2108 = vmatpush.msra.mxu0 %v289
    %2109 = vmatpush.msra.mxu0 %v286
    %2110 = vmatpush.msra.mxu0 %v283
    %2111 = vmatpush.msra.mxu0 %v280
    %2112 = vmatpush.msra.mxu0 %v277
    %2113 = vmatpush.msra.mxu0 %v274
    %2114 = vmatpush.msra.mxu0 %v271
    %2115 = vmatpush.msra.mxu0 %v268
    %2116 = vmatpush.msra.mxu0 %v265
    %2117 = vmatmul.f32.gmra.mxu0 %v2018
    %v2118 = vpop.f32.mrf.mxu0
    %v2119 = vadd.f32 %v2099, %v2118
    %2120 = vdwg.mxu0
    %2121 = vmatpush.msra.mxu0 %v358
    %2122 = vmatpush.msra.mxu0 %v355
    %2123 = vmatpush.msra.mxu0 %v352
    %2124 = vmatpush.msra.mxu0 %v349
    %2125 = vmatpush.msra.mxu0 %v346
    %2126 = vmatpush.msra.mxu0 %v343
    %2127 = vmatpush.msra.mxu0 %v340
    %2128 = vmatpush.msra.mxu0 %v337
    %2129 = vmatpush.msra.mxu0 %v334
    %2130 = vmatpush.msra.mxu0 %v331
    %2131 = vmatpush.msra.mxu0 %v328
    %2132 = vmatpush.msra.mxu0 %v325
    %2133 = vmatpush.msra.mxu0 %v322
    %2134 = vmatpush.msra.mxu0 %v319
    %2135 = vmatpush.msra.mxu0 %v316
    %2136 = vmatpush.msra.mxu0 %v313
    %2137 = vmatmul.f32.gmra.mxu0 %v2019
    %v2138 = vpop.f32.mrf.mxu0
    %v2139 = vadd.f32 %v2119, %v2138
    %2140 = vdwg.mxu0
    %2141 = vmatpush.msra.mxu0 %v406
    %2142 = vmatpush.msra.mxu0 %v403
    %2143 = vmatpush.msra.mxu0 %v400
    %2144 = vmatpush.msra.mxu0 %v397
    %2145 = vmatpush.msra.mxu0 %v394
    %2146 = vmatpush.msra.mxu0 %v391
    %2147 = vmatpush.msra.mxu0 %v388
    %2148 = vmatpush.msra.mxu0 %v385
    %2149 = vmatpush.msra.mxu0 %v382
    %2150 = vmatpush.msra.mxu0 %v379
    %2151 = vmatpush.msra.mxu0 %v376
    %2152 = vmatpush.msra.mxu0 %v373
    %2153 = vmatpush.msra.mxu0 %v370
    %2154 = vmatpush.msra.mxu0 %v367
    %2155 = vmatpush.msra.mxu0 %v364
    %2156 = vmatpush.msra.mxu0 %v361
    %2157 = vmatmul.f32.gmra.mxu0 %v2020
    %v2158 = vpop.f32.mrf.mxu0
    %v2159 = vadd.f32 %v2139, %v2158
    %2160 = vdwg.mxu0
    %2161 = vmatpush.msra.mxu0 %v454
    %2162 = vmatpush.msra.mxu0 %v451
    %2163 = vmatpush.msra.mxu0 %v448
    %2164 = vmatpush.msra.mxu0 %v445
    %2165 = vmatpush.msra.mxu0 %v442
    %2166 = vmatpush.msra.mxu0 %v439
    %2167 = vmatpush.msra.mxu0 %v436
    %2168 = vmatpush.msra.mxu0 %v433
    %2169 = vmatpush.msra.mxu0 %v430
    %2170 = vmatpush.msra.mxu0 %v427
    %2171 = vmatpush.msra.mxu0 %v424
    %2172 = vmatpush.msra.mxu0 %v421
    %2173 = vmatpush.msra.mxu0 %v418
    %2174 = vmatpush.msra.mxu0 %v415
    %2175 = vmatpush.msra.mxu0 %v412
    %2176 = vmatpush.msra.mxu0 %v409
    %2177 = vmatmul.f32.gmra.mxu0 %v2021
    %v2178 = vpop.f32.mrf.mxu0
    %v2179 = vadd.f32 %v2159, %v2178
    %2180 = vdwg.mxu0
    %2181 = vmatpush.msra.mxu0 0.0
    %2182 = vmatpush.msra.mxu0 0.0
    %2183 = vmatpush.msra.mxu0 0.0
    %2184 = vmatpush.msra.mxu0 %v2033
    %2185 = vmatpush.msra.mxu0 %v490
    %2186 = vmatpush.msra.mxu0 %v487
    %2187 = vmatpush.msra.mxu0 %v484
    %2188 = vmatpush.msra.mxu0 %v481
    %2189 = vmatpush.msra.mxu0 %v478
    %2190 = vmatpush.msra.mxu0 %v475
    %2191 = vmatpush.msra.mxu0 %v472
    %2192 = vmatpush.msra.mxu0 %v469
    %2193 = vmatpush.msra.mxu0 %v466
    %2194 = vmatpush.msra.mxu0 %v463
    %2195 = vmatpush.msra.mxu0 %v460
    %2196 = vmatpush.msra.mxu0 %v457
    %2197 = vmatmul.f32.gmra.mxu0 %v2030
    %v2198 = vpop.f32.mrf.mxu0
    %v2199 = vadd.f32 %v2179, %v2198
    %2200 = vdwg.mxu0
    %2201 = vmatpush.msra.mxu0 %v167
    %2202 = vmatpush.msra.mxu0 %v164
    %2203 = vmatpush.msra.mxu0 %v161
    %2204 = vmatpush.msra.mxu0 %v158
    %2205 = vmatpush.msra.mxu0 %v155
    %2206 = vmatpush.msra.mxu0 %v152
    %2207 = vmatpush.msra.mxu0 %v149
    %2208 = vmatpush.msra.mxu0 %v146
    %2209 = vmatpush.msra.mxu0 %v143
    %2210 = vmatpush.msra.mxu0 %v140
    %2211 = vmatpush.msra.mxu0 %v137
    %2212 = vmatpush.msra.mxu0 %v134
    %2213 = vmatpush.msra.mxu0 %v131
    %2214 = vmatpush.msra.mxu0 %v128
    %2215 = vmatpush.msra.mxu0 %v125
    %2216 = vmatpush.msra.mxu0 %v122
    %2217 = vmatmul.f32.gmra.mxu0 %v2015
    %v2218 = vpop.f32.mrf.mxu0
    %v2219 = vadd.f32 %v2026, %v2218
    %2220 = vdwg.mxu0
    %2221 = vmatpush.msra.mxu0 %v215
    %2222 = vmatpush.msra.mxu0 %v212
    %2223 = vmatpush.msra.mxu0 %v209
    %2224 = vmatpush.msra.mxu0 %v206
    %2225 = vmatpush.msra.mxu0 %v203
    %2226 = vmatpush.msra.mxu0 %v200
    %2227 = vmatpush.msra.mxu0 %v197
    %2228 = vmatpush.msra.mxu0 %v194
    %2229 = vmatpush.msra.mxu0 %v191
    %2230 = vmatpush.msra.mxu0 %v188
    %2231 = vmatpush.msra.mxu0 %v185
    %2232 = vmatpush.msra.mxu0 %v182
    %2233 = vmatpush.msra.mxu0 %v179
    %2234 = vmatpush.msra.mxu0 %v176
    %2235 = vmatpush.msra.mxu0 %v173
    %2236 = vmatpush.msra.mxu0 %v170
    %2237 = vmatmul.f32.gmra.mxu0 %v2016
    %v2238 = vpop.f32.mrf.mxu0
    %v2239 = vadd.f32 %v2219, %v2238
    %2240 = vdwg.mxu0
    %2241 = vmatpush.msra.mxu0 %v263
    %2242 = vmatpush.msra.mxu0 %v260
    %2243 = vmatpush.msra.mxu0 %v257
    %2244 = vmatpush.msra.mxu0 %v254
    %2245 = vmatpush.msra.mxu0 %v251
    %2246 = vmatpush.msra.mxu0 %v248
    %2247 = vmatpush.msra.mxu0 %v245
    %2248 = vmatpush.msra.mxu0 %v242
    %2249 = vmatpush.msra.mxu0 %v239
    %2250 = vmatpush.msra.mxu0 %v236
    %2251 = vmatpush.msra.mxu0 %v233
    %2252 = vmatpush.msra.mxu0 %v230
    %2253 = vmatpush.msra.mxu0 %v227
    %2254 = vmatpush.msra.mxu0 %v224
    %2255 = vmatpush.msra.mxu0 %v221
    %2256 = vmatpush.msra.mxu0 %v218
    %2257 = vmatmul.f32.gmra.mxu0 %v2017
    %v2258 = vpop.f32.mrf.mxu0
    %v2259 = vadd.f32 %v2239, %v2258
    %2260 = vdwg.mxu0
    %2261 = vmatpush.msra.mxu0 %v311
    %2262 = vmatpush.msra.mxu0 %v308
    %2263 = vmatpush.msra.mxu0 %v305
    %2264 = vmatpush.msra.mxu0 %v302
    %2265 = vmatpush.msra.mxu0 %v299
    %2266 = vmatpush.msra.mxu0 %v296
    %2267 = vmatpush.msra.mxu0 %v293
    %2268 = vmatpush.msra.mxu0 %v290
    %2269 = vmatpush.msra.mxu0 %v287
    %2270 = vmatpush.msra.mxu0 %v284
    %2271 = vmatpush.msra.mxu0 %v281
    %2272 = vmatpush.msra.mxu0 %v278
    %2273 = vmatpush.msra.mxu0 %v275
    %2274 = vmatpush.msra.mxu0 %v272
    %2275 = vmatpush.msra.mxu0 %v269
    %2276 = vmatpush.msra.mxu0 %v266
    %2277 = vmatmul.f32.gmra.mxu0 %v2018
    %v2278 = vpop.f32.mrf.mxu0
    %v2279 = vadd.f32 %v2259, %v2278
    %2280 = vdwg.mxu0
    %2281 = vmatpush.msra.mxu0 %v359
    %2282 = vmatpush.msra.mxu0 %v356
    %2283 = vmatpush.msra.mxu0 %v353
    %2284 = vmatpush.msra.mxu0 %v350
    %2285 = vmatpush.msra.mxu0 %v347
    %2286 = vmatpush.msra.mxu0 %v344
    %2287 = vmatpush.msra.mxu0 %v341
    %2288 = vmatpush.msra.mxu0 %v338
    %2289 = vmatpush.msra.mxu0 %v335
    %2290 = vmatpush.msra.mxu0 %v332
    %2291 = vmatpush.msra.mxu0 %v329
    %2292 = vmatpush.msra.mxu0 %v326
    %2293 = vmatpush.msra.mxu0 %v323
    %2294 = vmatpush.msra.mxu0 %v320
    %2295 = vmatpush.msra.mxu0 %v317
    %2296 = vmatpush.msra.mxu0 %v314
    %2297 = vmatmul.f32.gmra.mxu0 %v2019
    %v2298 = vpop.f32.mrf.mxu0
    %v2299 = vadd.f32 %v2279, %v2298
    %2300 = vdwg.mxu0
    %2301 = vmatpush.msra.mxu0 %v407
    %2302 = vmatpush.msra.mxu0 %v404
    %2303 = vmatpush.msra.mxu0 %v401
    %2304 = vmatpush.msra.mxu0 %v398
    %2305 = vmatpush.msra.mxu0 %v395
    %2306 = vmatpush.msra.mxu0 %v392
    %2307 = vmatpush.msra.mxu0 %v389
    %2308 = vmatpush.msra.mxu0 %v386
    %2309 = vmatpush.msra.mxu0 %v383
    %2310 = vmatpush.msra.mxu0 %v380
    %2311 = vmatpush.msra.mxu0 %v377
    %2312 = vmatpush.msra.mxu0 %v374
    %2313 = vmatpush.msra.mxu0 %v371
    %2314 = vmatpush.msra.mxu0 %v368
    %2315 = vmatpush.msra.mxu0 %v365
    %2316 = vmatpush.msra.mxu0 %v362
    %2317 = vmatmul.f32.gmra.mxu0 %v2020
    %v2318 = vpop.f32.mrf.mxu0
    %v2319 = vadd.f32 %v2299, %v2318
    %2320 = vdwg.mxu0
    %2321 = vmatpush.msra.mxu0 %v455
    %2322 = vmatpush.msra.mxu0 %v452
    %2323 = vmatpush.msra.mxu0 %v449
    %2324 = vmatpush.msra.mxu0 %v446
    %2325 = vmatpush.msra.mxu0 %v443
    %2326 = vmatpush.msra.mxu0 %v440
    %2327 = vmatpush.msra.mxu0 %v437
    %2328 = vmatpush.msra.mxu0 %v434
    %2329 = vmatpush.msra.mxu0 %v431
    %2330 = vmatpush.msra.mxu0 %v428
    %2331 = vmatpush.msra.mxu0 %v425
    %2332 = vmatpush.msra.mxu0 %v422
    %2333 = vmatpush.msra.mxu0 %v419
    %2334 = vmatpush.msra.mxu0 %v416
    %2335 = vmatpush.msra.mxu0 %v413
    %2336 = vmatpush.msra.mxu0 %v410
    %2337 = vmatmul.f32.gmra.mxu0 %v2021
    %v2338 = vpop.f32.mrf.mxu0
    %v2339 = vadd.f32 %v2319, %v2338
    %2340 = vdwg.mxu0
    %2341 = vmatpush.msra.mxu0 0.0
    %2342 = vmatpush.msra.mxu0 0.0
    %2343 = vmatpush.msra.mxu0 0.0
    %2344 = vmatpush.msra.mxu0 %v2036
    %2345 = vmatpush.msra.mxu0 %v491
    %2346 = vmatpush.msra.mxu0 %v488
    %2347 = vmatpush.msra.mxu0 %v485
    %2348 = vmatpush.msra.mxu0 %v482
    %2349 = vmatpush.msra.mxu0 %v479
    %2350 = vmatpush.msra.mxu0 %v476
    %2351 = vmatpush.msra.mxu0 %v473
    %2352 = vmatpush.msra.mxu0 %v470
    %2353 = vmatpush.msra.mxu0 %v467
    %2354 = vmatpush.msra.mxu0 %v464
    %2355 = vmatpush.msra.mxu0 %v461
    %2356 = vmatpush.msra.mxu0 %v458
    %2357 = vmatmul.f32.gmra.mxu0 %v2030
    %v2358 = vpop.f32.mrf.mxu0
    %v2359 = vadd.f32 %v2339, %v2358
    %2360 = vdwg.mxu0
    %2361 = vmatpush.msra.mxu0 %v168
    %2362 = vmatpush.msra.mxu0 %v165
    %2363 = vmatpush.msra.mxu0 %v162
    %2364 = vmatpush.msra.mxu0 %v159
    %2365 = vmatpush.msra.mxu0 %v156
    %2366 = vmatpush.msra.mxu0 %v153
    %2367 = vmatpush.msra.mxu0 %v150
    %2368 = vmatpush.msra.mxu0 %v147
    %2369 = vmatpush.msra.mxu0 %v144
    %2370 = vmatpush.msra.mxu0 %v141
    %2371 = vmatpush.msra.mxu0 %v138
    %2372 = vmatpush.msra.mxu0 %v135
    %2373 = vmatpush.msra.mxu0 %v132
    %2374 = vmatpush.msra.mxu0 %v129
    %2375 = vmatpush.msra.mxu0 %v126
    %2376 = vmatpush.msra.mxu0 %v123
    %2377 = vmatmul.f32.gmra.mxu0 %v2015
    %v2378 = vpop.f32.mrf.mxu0
    %v2379 = vadd.f32 %v2026, %v2378
    %2380 = vdwg.mxu0
    %2381 = vmatpush.msra.mxu0 %v216
    %2382 = vmatpush.msra.mxu0 %v213
    %2383 = vmatpush.msra.mxu0 %v210
    %2384 = vmatpush.msra.mxu0 %v207
    %2385 = vmatpush.msra.mxu0 %v204
    %2386 = vmatpush.msra.mxu0 %v201
    %2387 = vmatpush.msra.mxu0 %v198
    %2388 = vmatpush.msra.mxu0 %v195
    %2389 = vmatpush.msra.mxu0 %v192
    %2390 = vmatpush.msra.mxu0 %v189
    %2391 = vmatpush.msra.mxu0 %v186
    %2392 = vmatpush.msra.mxu0 %v183
    %2393 = vmatpush.msra.mxu0 %v180
    %2394 = vmatpush.msra.mxu0 %v177
    %2395 = vmatpush.msra.mxu0 %v174
    %2396 = vmatpush.msra.mxu0 %v171
    %2397 = vmatmul.f32.gmra.mxu0 %v2016
    %v2398 = vpop.f32.mrf.mxu0
    %v2399 = vadd.f32 %v2379, %v2398
    %2400 = vdwg.mxu0
    %2401 = vmatpush.msra.mxu0 %v264
    %2402 = vmatpush.msra.mxu0 %v261
    %2403 = vmatpush.msra.mxu0 %v258
    %2404 = vmatpush.msra.mxu0 %v255
    %2405 = vmatpush.msra.mxu0 %v252
    %2406 = vmatpush.msra.mxu0 %v249
    %2407 = vmatpush.msra.mxu0 %v246
    %2408 = vmatpush.msra.mxu0 %v243
    %2409 = vmatpush.msra.mxu0 %v240
    %2410 = vmatpush.msra.mxu0 %v237
    %2411 = vmatpush.msra.mxu0 %v234
    %2412 = vmatpush.msra.mxu0 %v231
    %2413 = vmatpush.msra.mxu0 %v228
    %2414 = vmatpush.msra.mxu0 %v225
    %2415 = vmatpush.msra.mxu0 %v222
    %2416 = vmatpush.msra.mxu0 %v219
    %2417 = vmatmul.f32.gmra.mxu0 %v2017
    %v2418 = vpop.f32.mrf.mxu0
    %v2419 = vadd.f32 %v2399, %v2418
    %2420 = vdwg.mxu0
    %2421 = vmatpush.msra.mxu0 %v312
    %2422 = vmatpush.msra.mxu0 %v309
    %2423 = vmatpush.msra.mxu0 %v306
    %2424 = vmatpush.msra.mxu0 %v303
    %2425 = vmatpush.msra.mxu0 %v300
    %2426 = vmatpush.msra.mxu0 %v297
    %2427 = vmatpush.msra.mxu0 %v294
    %2428 = vmatpush.msra.mxu0 %v291
    %2429 = vmatpush.msra.mxu0 %v288
    %2430 = vmatpush.msra.mxu0 %v285
    %2431 = vmatpush.msra.mxu0 %v282
    %2432 = vmatpush.msra.mxu0 %v279
    %2433 = vmatpush.msra.mxu0 %v276
    %2434 = vmatpush.msra.mxu0 %v273
    %2435 = vmatpush.msra.mxu0 %v270
    %2436 = vmatpush.msra.mxu0 %v267
    %2437 = vmatmul.f32.gmra.mxu0 %v2018
    %v2438 = vpop.f32.mrf.mxu0
    %v2439 = vadd.f32 %v2419, %v2438
    %2440 = vdwg.mxu0
    %2441 = vmatpush.msra.mxu0 %v360
    %2442 = vmatpush.msra.mxu0 %v357
    %2443 = vmatpush.msra.mxu0 %v354
    %2444 = vmatpush.msra.mxu0 %v351
    %2445 = vmatpush.msra.mxu0 %v348
    %2446 = vmatpush.msra.mxu0 %v345
    %2447 = vmatpush.msra.mxu0 %v342
    %2448 = vmatpush.msra.mxu0 %v339
    %2449 = vmatpush.msra.mxu0 %v336
    %2450 = vmatpush.msra.mxu0 %v333
    %2451 = vmatpush.msra.mxu0 %v330
    %2452 = vmatpush.msra.mxu0 %v327
    %2453 = vmatpush.msra.mxu0 %v324
    %2454 = vmatpush.msra.mxu0 %v321
    %2455 = vmatpush.msra.mxu0 %v318
    %2456 = vmatpush.msra.mxu0 %v315
    %2457 = vmatmul.f32.gmra.mxu0 %v2019
    %v2458 = vpop.f32.mrf.mxu0
    %v2459 = vadd.f32 %v2439, %v2458
    %2460 = vdwg.mxu0
    %2461 = vmatpush.msra.mxu0 %v408
    %2462 = vmatpush.msra.mxu0 %v405
    %2463 = vmatpush.msra.mxu0 %v402
    %2464 = vmatpush.msra.mxu0 %v399
    %2465 = vmatpush.msra.mxu0 %v396
    %2466 = vmatpush.msra.mxu0 %v393
    %2467 = vmatpush.msra.mxu0 %v390
    %2468 = vmatpush.msra.mxu0 %v387
    %2469 = vmatpush.msra.mxu0 %v384
    %2470 = vmatpush.msra.mxu0 %v381
    %2471 = vmatpush.msra.mxu0 %v378
    %2472 = vmatpush.msra.mxu0 %v375
    %2473 = vmatpush.msra.mxu0 %v372
    %2474 = vmatpush.msra.mxu0 %v369
    %2475 = vmatpush.msra.mxu0 %v366
    %2476 = vmatpush.msra.mxu0 %v363
    %2477 = vmatmul.f32.gmra.mxu0 %v2020
    %v2478 = vpop.f32.mrf.mxu0
    %v2479 = vadd.f32 %v2459, %v2478
    %2480 = vdwg.mxu0
    %2481 = vmatpush.msra.mxu0 %v456
    %2482 = vmatpush.msra.mxu0 %v453
    %2483 = vmatpush.msra.mxu0 %v450
    %2484 = vmatpush.msra.mxu0 %v447
    %2485 = vmatpush.msra.mxu0 %v444
    %2486 = vmatpush.msra.mxu0 %v441
    %2487 = vmatpush.msra.mxu0 %v438
    %2488 = vmatpush.msra.mxu0 %v435
    %2489 = vmatpush.msra.mxu0 %v432
    %2490 = vmatpush.msra.mxu0 %v429
    %2491 = vmatpush.msra.mxu0 %v426
    %2492 = vmatpush.msra.mxu0 %v423
    %2493 = vmatpush.msra.mxu0 %v420
    %2494 = vmatpush.msra.mxu0 %v417
    %2495 = vmatpush.msra.mxu0 %v414
    %2496 = vmatpush.msra.mxu0 %v411
    %2497 = vmatmul.f32.gmra.mxu0 %v2021
    %v2498 = vpop.f32.mrf.mxu0
    %v2499 = vadd.f32 %v2479, %v2498
    %2500 = vdwg.mxu0
    %2501 = vmatpush.msra.mxu0 0.0
    %2502 = vmatpush.msra.mxu0 0.0
    %2503 = vmatpush.msra.mxu0 0.0
    %2504 = vmatpush.msra.mxu0 %v2039
    %2505 = vmatpush.msra.mxu0 %v492
    %2506 = vmatpush.msra.mxu0 %v489
    %2507 = vmatpush.msra.mxu0 %v486
    %2508 = vmatpush.msra.mxu0 %v483
    %2509 = vmatpush.msra.mxu0 %v480
    %2510 = vmatpush.msra.mxu0 %v477
    %2511 = vmatpush.msra.mxu0 %v474
    %2512 = vmatpush.msra.mxu0 %v471
    %2513 = vmatpush.msra.mxu0 %v468
    %2514 = vmatpush.msra.mxu0 %v465
    %2515 = vmatpush.msra.mxu0 %v462
    %2516 = vmatpush.msra.mxu0 %v459
    %2517 = vmatmul.f32.gmra.mxu0 %v2030
    %v2518 = vpop.f32.mrf.mxu0
    %v2519 = vadd.f32 %v2499, %v2518
    %2520 = vdwg.mxu0
    %v2521 = vadd.f32 %v2199, %v2359
    %vm2522 = vcmask 621568
    %v2523 = vsel %vm2522, %v2519, 0.0
    %v2524 = vadd.f32 %v2521, %v2523
    %2525 = vadd.xlane.f32.xlu0 %v2524
    %v2526 = vpop.xlane.xlu0 %2525
    %vm2527 = vcmask 64512
    %v2529 = vsel %vm2527, %v504, 0
    %2531 = vmatpush.msra.mxu0 0.0
    %2532 = vmatpush.msra.mxu0 0.0
    %2533 = vmatpush.msra.mxu0 0.0
    %2534 = vmatpush.msra.mxu0 0.0
    %2535 = vmatpush.msra.mxu0 0.0
    %2536 = vmatpush.msra.mxu0 0.0
    %2537 = vmatpush.msra.mxu0 0.0
    %2538 = vmatpush.msra.mxu0 0.0
    %2539 = vmatpush.msra.mxu0 0.0
    %2540 = vmatpush.msra.mxu0 0.0
    %2541 = vmatpush.msra.mxu0 0.0
    %2542 = vmatpush.msra.mxu0 0.0
    %2543 = vmatpush.msra.mxu0 0.0
    %2544 = vmatpush.msra.mxu0 0.0
    %2545 = vmatpush.msra.mxu0 0.0
    %2546 = vmatpush.msra.mxu0 %v2526
    %2547 = vmatmul.f32.gmra.mxu0 %v2529
    %v2548 = vpop.f32.mrf.mxu0
    %v2549 = vadd.f32 0.0, %v2548
    %2550 = vdwg.mxu0
    %v2551 = vmul.f32 %v2549, 0.001506024
    %2553 = vset.pattern.permute.xlu0 0
    %2554 = vperm.xlu0 %2553, %v2551
    %v2555 = vpop.permute.xlu0 %2554
    %v2557 = vsub.f32 %v2199, %v2555
    %v2558 = vsub.f32 %v2359, %v2555
    %v2559 = vsub.f32 %v2519, %v2555
    %v2560 = vmul.f32 %v2557, %v2557
    %v2561 = vmul.f32 %v2558, %v2558
    %v2562 = vmul.f32 %v2559, %v2559
    %v2563 = vadd.f32 %v2560, %v2561
    %v2564 = vsel %vm2522, %v2562, 0.0
    %v2565 = vadd.f32 %v2563, %v2564
    %2566 = vadd.xlane.f32.xlu0 %v2565
    %v2567 = vpop.xlane.xlu0 %2566
    %2568 = vmatpush.msra.mxu0 0.0
    %2569 = vmatpush.msra.mxu0 0.0
    %2570 = vmatpush.msra.mxu0 0.0
    %2571 = vmatpush.msra.mxu0 0.0
    %2572 = vmatpush.msra.mxu0 0.0
    %2573 = vmatpush.msra.mxu0 0.0
    %2574 = vmatpush.msra.mxu0 0.0
    %2575 = vmatpush.msra.mxu0 0.0
    %2576 = vmatpush.msra.mxu0 0.0
    %2577 = vmatpush.msra.mxu0 0.0
    %2578 = vmatpush.msra.mxu0 0.0
    %2579 = vmatpush.msra.mxu0 0.0
    %2580 = vmatpush.msra.mxu0 0.0
    %2581 = vmatpush.msra.mxu0 0.0
    %2582 = vmatpush.msra.mxu0 0.0
    %2583 = vmatpush.msra.mxu0 %v2567
    %2584 = vmatmul.f32.gmra.mxu0 %v2529
    %v2585 = vpop.f32.mrf.mxu0
    %v2586 = vadd.f32 0.0, %v2585
    %2587 = vdwg.mxu0
    %v2588 = vmul.f32 %v2586, 0.001506024
    %2589 = vset.pattern.permute.xlu0 1
    %2590 = vperm.xlu0 %2589, %v503
    %v2591 = vpop.permute.xlu0 %2590
    %v2593 = vmul.f32 %v2591, %v2557
    %v2594 = vmul.f32 %v2591, %v2558
    %v2595 = vmul.f32 %v2591, %v2559
    %v2596 = vadd.f32 %v2588, 1e-05
    %v2597 = vrsqrt.pop %v2596
    %v2598 = vmul.f32 %v2597, %v2596
    %v2599 = vmul.f32 %v2598, %v2597
    %v2600 = vmul.f32 0.5, %v2599
    %v2601 = vsub.f32 1.5, %v2600
    %v2602 = vmul.f32 %v2597, %v2601
    %vm2603 = vweird.f32 %v2596
    %vm2604 = vweird.f32 %v2597
    %vm2605 = vmor %vm2603, %vm2604
    %v2606 = vsel %vm2605, %v2597, %v2602
    %2608 = vset.pattern.permute.xlu0 0
    %2609 = vperm.xlu0 %2608, %v2606
    %v2610 = vpop.permute.xlu0 %2609
    %v2612 = vmul.f32 %v2593, %v2610
    %v2613 = vmul.f32 %v2594, %v2610
    %v2614 = vmul.f32 %v2595, %v2610
    %2615 = vset.pattern.permute.xlu0 2
    %2616 = vperm.xlu0 %2615, %v503
    %v2617 = vpop.permute.xlu0 %2616
    %v2619 = vadd.f32 %v2612, %v2617
    %v2620 = vadd.f32 %v2613, %v2617
    %v2621 = vadd.f32 %v2614, %v2617
    %v2622 = vmax.f32 %v2619, 0.0
    %v2623 = vmax.f32 %v2620, 0.0
    %v2624 = vmax.f32 %v2621, 0.0
    %v2625 = vld [vmem:[#allocation2] sm:$0xff]
    %v2626 = vld [vmem:[#allocation2 + $0x8] sm:$0xff]
    %v2627 = vld [vmem:[#allocation2 + $0x10] sm:$0xff]
    %v2628 = vld [vmem:[#allocation2 + $0x18] sm:$0xff]
    %v2629 = vld [vmem:[#allocation2 + $0x20] sm:$0xff]
    %v2630 = vld [vmem:[#allocation2 + $0x28] sm:$0xff]
    %v2631 = vld [vmem:[#allocation2 + $0x30] sm:$0xff]
    %v2632 = vld [vmem:[#allocation2 + $0x38] sm:$0xff]
    %v2633 = vld [vmem:[#allocation2 + $0x40] sm:$0xff]
    %v2634 = vld [vmem:[#allocation2 + $0x48] sm:$0xff]
    %v2635 = vld [vmem:[#allocation2 + $0x50] sm:$0xff]
    %v2636 = vld [vmem:[#allocation2 + $0x58] sm:$0xff]
    %v2637 = vld [vmem:[#allocation2 + $0x60] sm:$0xff]
    %v2638 = vld [vmem:[#allocation2 + $0x68] sm:$0xff]
    %v2639 = vld [vmem:[#allocation2 + $0x70] sm:$0xff]
    %v2640 = vld [vmem:[#allocation2 + $0x78] sm:$0xff]
    %v2641 = vld [vmem:[#allocation2 + $0x80] sm:$0xff]
    %v2642 = vld [vmem:[#allocation2 + $0x88] sm:$0xff]
    %v2643 = vld [vmem:[#allocation2 + $0x90] sm:$0xff]
    %v2644 = vld [vmem:[#allocation2 + $0x98] sm:$0xff]
    %v2645 = vld [vmem:[#allocation2 + $0xa0] sm:$0xff]
    %v2646 = vld [vmem:[#allocation2 + $0xa8] sm:$0xff]
    %v2647 = vld [vmem:[#allocation2 + $0xb0] sm:$0xff]
    %v2648 = vld [vmem:[#allocation2 + $0xb8] sm:$0xff]
    %v2649 = vld [vmem:[#allocation2 + $0xc0] sm:$0xff]
    %v2650 = vld [vmem:[#allocation2 + $0xc8] sm:$0xff]
    %v2651 = vld [vmem:[#allocation2 + $0xd0] sm:$0xff]
    %v2652 = vld [vmem:[#allocation2 + $0xd8] sm:$0xff]
    %v2653 = vld [vmem:[#allocation2 + $0xe0] sm:$0xff]
    %v2654 = vld [vmem:[#allocation2 + $0xe8] sm:$0xff]
    %v2655 = vld [vmem:[#allocation2 + $0xf0] sm:$0xff]
    %v2656 = vld [vmem:[#allocation2 + $0xf8] sm:$0xff]
    %v2657 = vld [vmem:[#allocation2 + $0x100] sm:$0xff]
    %v2658 = vld [vmem:[#allocation2 + $0x108] sm:$0xff]
    %v2659 = vld [vmem:[#allocation2 + $0x110] sm:$0xff]
    %v2660 = vld [vmem:[#allocation2 + $0x118] sm:$0xff]
    %v2661 = vld [vmem:[#allocation2 + $0x120] sm:$0xff]
    %v2662 = vld [vmem:[#allocation2 + $0x128] sm:$0xff]
    %v2663 = vld [vmem:[#allocation2 + $0x130] sm:$0xff]
    %v2664 = vld [vmem:[#allocation2 + $0x138] sm:$0xff]
    %v2665 = vld [vmem:[#allocation2 + $0x140] sm:$0x1f]
    %v2666 = vld [vmem:[%s6] sm:$0xff]
    %v2667 = vld [vmem:[%s6 + $0x8] sm:$0xff]
    %v2668 = vld [vmem:[%s6 + $0x10] sm:$0xff]
    %v2669 = vld [vmem:[%s6 + $0x18] sm:$0xff]
    %v2670 = vld [vmem:[%s6 + $0x20] sm:$0xff]
    %v2671 = vld [vmem:[%s6 + $0x28] sm:$0xff]
    %v2672 = vld [vmem:[%s6 + $0x30] sm:$0xff]
    %v2673 = vld [vmem:[%s6 + $0x38] sm:$0xff]
    %v2674 = vld [vmem:[%s6 + $0x40] sm:$0xff]
    %v2675 = vld [vmem:[%s6 + $0x48] sm:$0xff]
    %v2676 = vld [vmem:[%s6 + $0x50] sm:$0xff]
    %v2677 = vld [vmem:[%s6 + $0x58] sm:$0xff]
    %v2678 = vld [vmem:[%s6 + $0x60] sm:$0xff]
    %v2679 = vld [vmem:[%s6 + $0x68] sm:$0xff]
    %v2680 = vld [vmem:[%s7] sm:$0xff]
    %v2681 = vld [vmem:[%s7 + $0x8] sm:$0xff]
    %v2682 = vld [vmem:[#allocation4] sm:$0xff]
    %v2683 = vld [vmem:[#allocation4 + $0x8] sm:$0xff]
    %2687 = vrot.lane.b32.xlu0 %v2622, 127
    %v2688 = vpop.permute.xlu0 %2687
    %2689 = vrot.lane.b32.xlu0 %v2623, 127
    %v2690 = vpop.permute.xlu0 %2689
    %2691 = vrot.lane.b32.xlu0 %v2624, 127
    %v2692 = vpop.permute.xlu0 %2691
    %v2693 = vsel %vm534, %v2688, %v2690
    %v2694 = vsel %vm534, %v2690, %v2692
    %v2699 = vsel %vm2527, %v2668, 0
    %v2702 = vsel %vm2527, %v2669, 0
    %2704 = vmatpush.msra.mxu0 0.0
    %2705 = vmatpush.msra.mxu0 0.0
    %2706 = vmatpush.msra.mxu0 0.0
    %2707 = vmatpush.msra.mxu0 0.0
    %2708 = vmatpush.msra.mxu0 0.0
    %2709 = vmatpush.msra.mxu0 0.0
    %2710 = vmatpush.msra.mxu0 0.0
    %2711 = vmatpush.msra.mxu0 0.0
    %2712 = vmatpush.msra.mxu0 0.0
    %2713 = vmatpush.msra.mxu0 0.0
    %2714 = vmatpush.msra.mxu0 0.0
    %2715 = vmatpush.msra.mxu0 0.0
    %2716 = vmatpush.msra.mxu0 0.0
    %2717 = vmatpush.msra.mxu0 0.0
    %2718 = vmatpush.msra.mxu0 0.0
    %2719 = vmatpush.msra.mxu0 %v2693
    %2720 = vmatmul.f32.gmra.mxu0 %v2699
    %v2721 = vpop.f32.mrf.mxu0
    %v2722 = vadd.f32 0.0, %v2721
    %2723 = vmatmul.f32.gmra.mxu0 %v2702
    %v2724 = vpop.f32.mrf.mxu0
    %v2725 = vadd.f32 0.0, %v2724
    %2726 = vdwg.mxu0
    %2727 = vmatpush.msra.mxu0 0.0
    %2728 = vmatpush.msra.mxu0 0.0
    %2729 = vmatpush.msra.mxu0 0.0
    %2730 = vmatpush.msra.mxu0 0.0
    %2731 = vmatpush.msra.mxu0 0.0
    %2732 = vmatpush.msra.mxu0 0.0
    %2733 = vmatpush.msra.mxu0 0.0
    %2734 = vmatpush.msra.mxu0 0.0
    %2735 = vmatpush.msra.mxu0 0.0
    %2736 = vmatpush.msra.mxu0 0.0
    %2737 = vmatpush.msra.mxu0 0.0
    %2738 = vmatpush.msra.mxu0 0.0
    %2739 = vmatpush.msra.mxu0 0.0
    %2740 = vmatpush.msra.mxu0 0.0
    %2741 = vmatpush.msra.mxu0 0.0
    %2742 = vmatpush.msra.mxu0 %v2694
    %2743 = vmatmul.f32.gmra.mxu0 %v2699
    %v2744 = vpop.f32.mrf.mxu0
    %v2745 = vadd.f32 0.0, %v2744
    %2746 = vmatmul.f32.gmra.mxu0 %v2702
    %v2747 = vpop.f32.mrf.mxu0
    %v2748 = vadd.f32 0.0, %v2747
    %2749 = vdwg.mxu0
    %2750 = vmatpush.msra.mxu0 0.0
    %2751 = vmatpush.msra.mxu0 0.0
    %2752 = vmatpush.msra.mxu0 0.0
    %2753 = vmatpush.msra.mxu0 0.0
    %2754 = vmatpush.msra.mxu0 0.0
    %2755 = vmatpush.msra.mxu0 0.0
    %2756 = vmatpush.msra.mxu0 0.0
    %2757 = vmatpush.msra.mxu0 0.0
    %2758 = vmatpush.msra.mxu0 0.0
    %2759 = vmatpush.msra.mxu0 0.0
    %2760 = vmatpush.msra.mxu0 0.0
    %2761 = vmatpush.msra.mxu0 0.0
    %2762 = vmatpush.msra.mxu0 0.0
    %2763 = vmatpush.msra.mxu0 0.0
    %2764 = vmatpush.msra.mxu0 0.0
    %2765 = vmatpush.msra.mxu0 %v2692
    %2766 = vmatmul.f32.gmra.mxu0 %v2699
    %v2767 = vpop.f32.mrf.mxu0
    %v2768 = vadd.f32 0.0, %v2767
    %2769 = vmatmul.f32.gmra.mxu0 %v2702
    %v2770 = vpop.f32.mrf.mxu0
    %v2771 = vadd.f32 0.0, %v2770
    %2772 = vdwg.mxu0
    %v2774 = vsel %vm2527, %v2666, 0
    %v2777 = vsel %vm2527, %v2667, 0
    %2779 = vmatpush.msra.mxu0 0.0
    %2780 = vmatpush.msra.mxu0 0.0
    %2781 = vmatpush.msra.mxu0 0.0
    %2782 = vmatpush.msra.mxu0 0.0
    %2783 = vmatpush.msra.mxu0 0.0
    %2784 = vmatpush.msra.mxu0 0.0
    %2785 = vmatpush.msra.mxu0 0.0
    %2786 = vmatpush.msra.mxu0 0.0
    %2787 = vmatpush.msra.mxu0 0.0
    %2788 = vmatpush.msra.mxu0 0.0
    %2789 = vmatpush.msra.mxu0 0.0
    %2790 = vmatpush.msra.mxu0 0.0
    %2791 = vmatpush.msra.mxu0 0.0
    %2792 = vmatpush.msra.mxu0 0.0
    %2793 = vmatpush.msra.mxu0 0.0
    %2794 = vmatpush.msra.mxu0 %v2622
    %2795 = vmatmul.f32.gmra.mxu0 %v2774
    %v2796 = vpop.f32.mrf.mxu0
    %v2797 = vadd.f32 %v2722, %v2796
    %2798 = vmatmul.f32.gmra.mxu0 %v2777
    %v2799 = vpop.f32.mrf.mxu0
    %v2800 = vadd.f32 %v2725, %v2799
    %2801 = vdwg.mxu0
    %2802 = vmatpush.msra.mxu0 0.0
    %2803 = vmatpush.msra.mxu0 0.0
    %2804 = vmatpush.msra.mxu0 0.0
    %2805 = vmatpush.msra.mxu0 0.0
    %2806 = vmatpush.msra.mxu0 0.0
    %2807 = vmatpush.msra.mxu0 0.0
    %2808 = vmatpush.msra.mxu0 0.0
    %2809 = vmatpush.msra.mxu0 0.0
    %2810 = vmatpush.msra.mxu0 0.0
    %2811 = vmatpush.msra.mxu0 0.0
    %2812 = vmatpush.msra.mxu0 0.0
    %2813 = vmatpush.msra.mxu0 0.0
    %2814 = vmatpush.msra.mxu0 0.0
    %2815 = vmatpush.msra.mxu0 0.0
    %2816 = vmatpush.msra.mxu0 0.0
    %2817 = vmatpush.msra.mxu0 %v2623
    %2818 = vmatmul.f32.gmra.mxu0 %v2774
    %v2819 = vpop.f32.mrf.mxu0
    %v2820 = vadd.f32 %v2745, %v2819
    %2821 = vmatmul.f32.gmra.mxu0 %v2777
    %v2822 = vpop.f32.mrf.mxu0
    %v2823 = vadd.f32 %v2748, %v2822
    %2824 = vdwg.mxu0
    %2825 = vmatpush.msra.mxu0 0.0
    %2826 = vmatpush.msra.mxu0 0.0
    %2827 = vmatpush.msra.mxu0 0.0
    %2828 = vmatpush.msra.mxu0 0.0
    %2829 = vmatpush.msra.mxu0 0.0
    %2830 = vmatpush.msra.mxu0 0.0
    %2831 = vmatpush.msra.mxu0 0.0
    %2832 = vmatpush.msra.mxu0 0.0
    %2833 = vmatpush.msra.mxu0 0.0
    %2834 = vmatpush.msra.mxu0 0.0
    %2835 = vmatpush.msra.mxu0 0.0
    %2836 = vmatpush.msra.mxu0 0.0
    %2837 = vmatpush.msra.mxu0 0.0
    %2838 = vmatpush.msra.mxu0 0.0
    %2839 = vmatpush.msra.mxu0 0.0
    %2840 = vmatpush.msra.mxu0 %v2624
    %2841 = vmatmul.f32.gmra.mxu0 %v2774
    %v2842 = vpop.f32.mrf.mxu0
    %v2843 = vadd.f32 %v2768, %v2842
    %2844 = vmatmul.f32.gmra.mxu0 %v2777
    %v2845 = vpop.f32.mrf.mxu0
    %v2846 = vadd.f32 %v2771, %v2845
    %2847 = vdwg.mxu0
    %2848 = vrot.lane.b32.xlu0 %v2622, 126
    %v2849 = vpop.permute.xlu0 %2848
    %2850 = vrot.lane.b32.xlu0 %v2623, 126
    %v2851 = vpop.permute.xlu0 %2850
    %2852 = vrot.lane.b32.xlu0 %v2624, 126
    %v2853 = vpop.permute.xlu0 %2852
    %v2854 = vsel %vm940, %v2849, %v2851
    %v2855 = vsel %vm940, %v2851, %v2853
    %v2860 = vsel %vm2527, %v2670, 0
    %v2863 = vsel %vm2527, %v2671, 0
    %2865 = vmatpush.msra.mxu0 0.0
    %2866 = vmatpush.msra.mxu0 0.0
    %2867 = vmatpush.msra.mxu0 0.0
    %2868 = vmatpush.msra.mxu0 0.0
    %2869 = vmatpush.msra.mxu0 0.0
    %2870 = vmatpush.msra.mxu0 0.0
    %2871 = vmatpush.msra.mxu0 0.0
    %2872 = vmatpush.msra.mxu0 0.0
    %2873 = vmatpush.msra.mxu0 0.0
    %2874 = vmatpush.msra.mxu0 0.0
    %2875 = vmatpush.msra.mxu0 0.0
    %2876 = vmatpush.msra.mxu0 0.0
    %2877 = vmatpush.msra.mxu0 0.0
    %2878 = vmatpush.msra.mxu0 0.0
    %2879 = vmatpush.msra.mxu0 0.0
    %2880 = vmatpush.msra.mxu0 %v2854
    %2881 = vmatmul.f32.gmra.mxu0 %v2860
    %v2882 = vpop.f32.mrf.mxu0
    %v2883 = vadd.f32 0.0, %v2882
    %2884 = vmatmul.f32.gmra.mxu0 %v2863
    %v2885 = vpop.f32.mrf.mxu0
    %v2886 = vadd.f32 0.0, %v2885
    %2887 = vdwg.mxu0
    %2888 = vmatpush.msra.mxu0 0.0
    %2889 = vmatpush.msra.mxu0 0.0
    %2890 = vmatpush.msra.mxu0 0.0
    %2891 = vmatpush.msra.mxu0 0.0
    %2892 = vmatpush.msra.mxu0 0.0
    %2893 = vmatpush.msra.mxu0 0.0
    %2894 = vmatpush.msra.mxu0 0.0
    %2895 = vmatpush.msra.mxu0 0.0
    %2896 = vmatpush.msra.mxu0 0.0
    %2897 = vmatpush.msra.mxu0 0.0
    %2898 = vmatpush.msra.mxu0 0.0
    %2899 = vmatpush.msra.mxu0 0.0
    %2900 = vmatpush.msra.mxu0 0.0
    %2901 = vmatpush.msra.mxu0 0.0
    %2902 = vmatpush.msra.mxu0 0.0
    %2903 = vmatpush.msra.mxu0 %v2855
    %2904 = vmatmul.f32.gmra.mxu0 %v2860
    %v2905 = vpop.f32.mrf.mxu0
    %v2906 = vadd.f32 0.0, %v2905
    %2907 = vmatmul.f32.gmra.mxu0 %v2863
    %v2908 = vpop.f32.mrf.mxu0
    %v2909 = vadd.f32 0.0, %v2908
    %2910 = vdwg.mxu0
    %2911 = vmatpush.msra.mxu0 0.0
    %2912 = vmatpush.msra.mxu0 0.0
    %2913 = vmatpush.msra.mxu0 0.0
    %2914 = vmatpush.msra.mxu0 0.0
    %2915 = vmatpush.msra.mxu0 0.0
    %2916 = vmatpush.msra.mxu0 0.0
    %2917 = vmatpush.msra.mxu0 0.0
    %2918 = vmatpush.msra.mxu0 0.0
    %2919 = vmatpush.msra.mxu0 0.0
    %2920 = vmatpush.msra.mxu0 0.0
    %2921 = vmatpush.msra.mxu0 0.0
    %2922 = vmatpush.msra.mxu0 0.0
    %2923 = vmatpush.msra.mxu0 0.0
    %2924 = vmatpush.msra.mxu0 0.0
    %2925 = vmatpush.msra.mxu0 0.0
    %2926 = vmatpush.msra.mxu0 %v2853
    %2927 = vmatmul.f32.gmra.mxu0 %v2860
    %v2928 = vpop.f32.mrf.mxu0
    %v2929 = vadd.f32 0.0, %v2928
    %2930 = vmatmul.f32.gmra.mxu0 %v2863
    %v2931 = vpop.f32.mrf.mxu0
    %v2932 = vadd.f32 0.0, %v2931
    %2933 = vdwg.mxu0
    %v2934 = vadd.f32 %v2797, %v2883
    %v2935 = vadd.f32 %v2820, %v2906
    %v2936 = vadd.f32 %v2843, %v2929
    %v2937 = vadd.f32 %v2800, %v2886
    %v2938 = vadd.f32 %v2823, %v2909
    %v2939 = vadd.f32 %v2846, %v2932
    %2940 = vrot.lane.b32.xlu0 %v2622, 125
    %v2941 = vpop.permute.xlu0 %2940
    %2942 = vrot.lane.b32.xlu0 %v2623, 125
    %v2943 = vpop.permute.xlu0 %2942
    %2944 = vrot.lane.b32.xlu0 %v2624, 125
    %v2945 = vpop.permute.xlu0 %2944
    %v2946 = vsel %vm1162, %v2941, %v2943
    %v2947 = vsel %vm1162, %v2943, %v2945
    %v2952 = vsel %vm2527, %v2672, 0
    %v2955 = vsel %vm2527, %v2673, 0
    %2957 = vmatpush.msra.mxu0 0.0
    %2958 = vmatpush.msra.mxu0 0.0
    %2959 = vmatpush.msra.mxu0 0.0
    %2960 = vmatpush.msra.mxu0 0.0
    %2961 = vmatpush.msra.mxu0 0.0
    %2962 = vmatpush.msra.mxu0 0.0
    %2963 = vmatpush.msra.mxu0 0.0
    %2964 = vmatpush.msra.mxu0 0.0
    %2965 = vmatpush.msra.mxu0 0.0
    %2966 = vmatpush.msra.mxu0 0.0
    %2967 = vmatpush.msra.mxu0 0.0
    %2968 = vmatpush.msra.mxu0 0.0
    %2969 = vmatpush.msra.mxu0 0.0
    %2970 = vmatpush.msra.mxu0 0.0
    %2971 = vmatpush.msra.mxu0 0.0
    %2972 = vmatpush.msra.mxu0 %v2946
    %2973 = vmatmul.f32.gmra.mxu0 %v2952
    %v2974 = vpop.f32.mrf.mxu0
    %v2975 = vadd.f32 0.0, %v2974
    %2976 = vmatmul.f32.gmra.mxu0 %v2955
    %v2977 = vpop.f32.mrf.mxu0
    %v2978 = vadd.f32 0.0, %v2977
    %2979 = vdwg.mxu0
    %2980 = vmatpush.msra.mxu0 0.0
    %2981 = vmatpush.msra.mxu0 0.0
    %2982 = vmatpush.msra.mxu0 0.0
    %2983 = vmatpush.msra.mxu0 0.0
    %2984 = vmatpush.msra.mxu0 0.0
    %2985 = vmatpush.msra.mxu0 0.0
    %2986 = vmatpush.msra.mxu0 0.0
    %2987 = vmatpush.msra.mxu0 0.0
    %2988 = vmatpush.msra.mxu0 0.0
    %2989 = vmatpush.msra.mxu0 0.0
    %2990 = vmatpush.msra.mxu0 0.0
    %2991 = vmatpush.msra.mxu0 0.0
    %2992 = vmatpush.msra.mxu0 0.0
    %2993 = vmatpush.msra.mxu0 0.0
    %2994 = vmatpush.msra.mxu0 0.0
    %2995 = vmatpush.msra.mxu0 %v2947
    %2996 = vmatmul.f32.gmra.mxu0 %v2952
    %v2997 = vpop.f32.mrf.mxu0
    %v2998 = vadd.f32 0.0, %v2997
    %2999 = vmatmul.f32.gmra.mxu0 %v2955
    %v3000 = vpop.f32.mrf.mxu0
    %v3001 = vadd.f32 0.0, %v3000
    %3002 = vdwg.mxu0
    %3003 = vmatpush.msra.mxu0 0.0
    %3004 = vmatpush.msra.mxu0 0.0
    %3005 = vmatpush.msra.mxu0 0.0
    %3006 = vmatpush.msra.mxu0 0.0
    %3007 = vmatpush.msra.mxu0 0.0
    %3008 = vmatpush.msra.mxu0 0.0
    %3009 = vmatpush.msra.mxu0 0.0
    %3010 = vmatpush.msra.mxu0 0.0
    %3011 = vmatpush.msra.mxu0 0.0
    %3012 = vmatpush.msra.mxu0 0.0
    %3013 = vmatpush.msra.mxu0 0.0
    %3014 = vmatpush.msra.mxu0 0.0
    %3015 = vmatpush.msra.mxu0 0.0
    %3016 = vmatpush.msra.mxu0 0.0
    %3017 = vmatpush.msra.mxu0 0.0
    %3018 = vmatpush.msra.mxu0 %v2945
    %3019 = vmatmul.f32.gmra.mxu0 %v2952
    %v3020 = vpop.f32.mrf.mxu0
    %v3021 = vadd.f32 0.0, %v3020
    %3022 = vmatmul.f32.gmra.mxu0 %v2955
    %v3023 = vpop.f32.mrf.mxu0
    %v3024 = vadd.f32 0.0, %v3023
    %3025 = vdwg.mxu0
    %v3026 = vadd.f32 %v2934, %v2975
    %v3027 = vadd.f32 %v2935, %v2998
    %v3028 = vadd.f32 %v2936, %v3021
    %v3029 = vadd.f32 %v2937, %v2978
    %v3030 = vadd.f32 %v2938, %v3001
    %v3031 = vadd.f32 %v2939, %v3024
    %3032 = vrot.lane.b32.xlu0 %v2622, 124
    %v3033 = vpop.permute.xlu0 %3032
    %3034 = vrot.lane.b32.xlu0 %v2623, 124
    %v3035 = vpop.permute.xlu0 %3034
    %3036 = vrot.lane.b32.xlu0 %v2624, 124
    %v3037 = vpop.permute.xlu0 %3036
    %v3038 = vsel %vm1384, %v3033, %v3035
    %v3039 = vsel %vm1384, %v3035, %v3037
    %v3044 = vsel %vm2527, %v2674, 0
    %v3047 = vsel %vm2527, %v2675, 0
    %3049 = vmatpush.msra.mxu0 0.0
    %3050 = vmatpush.msra.mxu0 0.0
    %3051 = vmatpush.msra.mxu0 0.0
    %3052 = vmatpush.msra.mxu0 0.0
    %3053 = vmatpush.msra.mxu0 0.0
    %3054 = vmatpush.msra.mxu0 0.0
    %3055 = vmatpush.msra.mxu0 0.0
    %3056 = vmatpush.msra.mxu0 0.0
    %3057 = vmatpush.msra.mxu0 0.0
    %3058 = vmatpush.msra.mxu0 0.0
    %3059 = vmatpush.msra.mxu0 0.0
    %3060 = vmatpush.msra.mxu0 0.0
    %3061 = vmatpush.msra.mxu0 0.0
    %3062 = vmatpush.msra.mxu0 0.0
    %3063 = vmatpush.msra.mxu0 0.0
    %3064 = vmatpush.msra.mxu0 %v3038
    %3065 = vmatmul.f32.gmra.mxu0 %v3044
    %v3066 = vpop.f32.mrf.mxu0
    %v3067 = vadd.f32 0.0, %v3066
    %3068 = vmatmul.f32.gmra.mxu0 %v3047
    %v3069 = vpop.f32.mrf.mxu0
    %v3070 = vadd.f32 0.0, %v3069
    %3071 = vdwg.mxu0
    %3072 = vmatpush.msra.mxu0 0.0
    %3073 = vmatpush.msra.mxu0 0.0
    %3074 = vmatpush.msra.mxu0 0.0
    %3075 = vmatpush.msra.mxu0 0.0
    %3076 = vmatpush.msra.mxu0 0.0
    %3077 = vmatpush.msra.mxu0 0.0
    %3078 = vmatpush.msra.mxu0 0.0
    %3079 = vmatpush.msra.mxu0 0.0
    %3080 = vmatpush.msra.mxu0 0.0
    %3081 = vmatpush.msra.mxu0 0.0
    %3082 = vmatpush.msra.mxu0 0.0
    %3083 = vmatpush.msra.mxu0 0.0
    %3084 = vmatpush.msra.mxu0 0.0
    %3085 = vmatpush.msra.mxu0 0.0
    %3086 = vmatpush.msra.mxu0 0.0
    %3087 = vmatpush.msra.mxu0 %v3039
    %3088 = vmatmul.f32.gmra.mxu0 %v3044
    %v3089 = vpop.f32.mrf.mxu0
    %v3090 = vadd.f32 0.0, %v3089
    %3091 = vmatmul.f32.gmra.mxu0 %v3047
    %v3092 = vpop.f32.mrf.mxu0
    %v3093 = vadd.f32 0.0, %v3092
    %3094 = vdwg.mxu0
    %3095 = vmatpush.msra.mxu0 0.0
    %3096 = vmatpush.msra.mxu0 0.0
    %3097 = vmatpush.msra.mxu0 0.0
    %3098 = vmatpush.msra.mxu0 0.0
    %3099 = vmatpush.msra.mxu0 0.0
    %3100 = vmatpush.msra.mxu0 0.0
    %3101 = vmatpush.msra.mxu0 0.0
    %3102 = vmatpush.msra.mxu0 0.0
    %3103 = vmatpush.msra.mxu0 0.0
    %3104 = vmatpush.msra.mxu0 0.0
    %3105 = vmatpush.msra.mxu0 0.0
    %3106 = vmatpush.msra.mxu0 0.0
    %3107 = vmatpush.msra.mxu0 0.0
    %3108 = vmatpush.msra.mxu0 0.0
    %3109 = vmatpush.msra.mxu0 0.0
    %3110 = vmatpush.msra.mxu0 %v3037
    %3111 = vmatmul.f32.gmra.mxu0 %v3044
    %v3112 = vpop.f32.mrf.mxu0
    %v3113 = vadd.f32 0.0, %v3112
    %3114 = vmatmul.f32.gmra.mxu0 %v3047
    %v3115 = vpop.f32.mrf.mxu0
    %v3116 = vadd.f32 0.0, %v3115
    %3117 = vdwg.mxu0
    %v3118 = vadd.f32 %v3026, %v3067
    %v3119 = vadd.f32 %v3027, %v3090
    %v3120 = vadd.f32 %v3028, %v3113
    %v3121 = vadd.f32 %v3029, %v3070
    %v3122 = vadd.f32 %v3030, %v3093
    %v3123 = vadd.f32 %v3031, %v3116
    %3124 = vrot.lane.b32.xlu0 %v2622, 123
    %v3125 = vpop.permute.xlu0 %3124
    %3126 = vrot.lane.b32.xlu0 %v2623, 123
    %v3127 = vpop.permute.xlu0 %3126
    %3128 = vrot.lane.b32.xlu0 %v2624, 123
    %v3129 = vpop.permute.xlu0 %3128
    %v3130 = vsel %vm1606, %v3125, %v3127
    %v3131 = vsel %vm1606, %v3127, %v3129
    %v3136 = vsel %vm2527, %v2676, 0
    %v3139 = vsel %vm2527, %v2677, 0
    %3141 = vmatpush.msra.mxu0 0.0
    %3142 = vmatpush.msra.mxu0 0.0
    %3143 = vmatpush.msra.mxu0 0.0
    %3144 = vmatpush.msra.mxu0 0.0
    %3145 = vmatpush.msra.mxu0 0.0
    %3146 = vmatpush.msra.mxu0 0.0
    %3147 = vmatpush.msra.mxu0 0.0
    %3148 = vmatpush.msra.mxu0 0.0
    %3149 = vmatpush.msra.mxu0 0.0
    %3150 = vmatpush.msra.mxu0 0.0
    %3151 = vmatpush.msra.mxu0 0.0
    %3152 = vmatpush.msra.mxu0 0.0
    %3153 = vmatpush.msra.mxu0 0.0
    %3154 = vmatpush.msra.mxu0 0.0
    %3155 = vmatpush.msra.mxu0 0.0
    %3156 = vmatpush.msra.mxu0 %v3130
    %3157 = vmatmul.f32.gmra.mxu0 %v3136
    %v3158 = vpop.f32.mrf.mxu0
    %v3159 = vadd.f32 0.0, %v3158
    %3160 = vmatmul.f32.gmra.mxu0 %v3139
    %v3161 = vpop.f32.mrf.mxu0
    %v3162 = vadd.f32 0.0, %v3161
    %3163 = vdwg.mxu0
    %3164 = vmatpush.msra.mxu0 0.0
    %3165 = vmatpush.msra.mxu0 0.0
    %3166 = vmatpush.msra.mxu0 0.0
    %3167 = vmatpush.msra.mxu0 0.0
    %3168 = vmatpush.msra.mxu0 0.0
    %3169 = vmatpush.msra.mxu0 0.0
    %3170 = vmatpush.msra.mxu0 0.0
    %3171 = vmatpush.msra.mxu0 0.0
    %3172 = vmatpush.msra.mxu0 0.0
    %3173 = vmatpush.msra.mxu0 0.0
    %3174 = vmatpush.msra.mxu0 0.0
    %3175 = vmatpush.msra.mxu0 0.0
    %3176 = vmatpush.msra.mxu0 0.0
    %3177 = vmatpush.msra.mxu0 0.0
    %3178 = vmatpush.msra.mxu0 0.0
    %3179 = vmatpush.msra.mxu0 %v3131
    %3180 = vmatmul.f32.gmra.mxu0 %v3136
    %v3181 = vpop.f32.mrf.mxu0
    %v3182 = vadd.f32 0.0, %v3181
    %3183 = vmatmul.f32.gmra.mxu0 %v3139
    %v3184 = vpop.f32.mrf.mxu0
    %v3185 = vadd.f32 0.0, %v3184
    %3186 = vdwg.mxu0
    %3187 = vmatpush.msra.mxu0 0.0
    %3188 = vmatpush.msra.mxu0 0.0
    %3189 = vmatpush.msra.mxu0 0.0
    %3190 = vmatpush.msra.mxu0 0.0
    %3191 = vmatpush.msra.mxu0 0.0
    %3192 = vmatpush.msra.mxu0 0.0
    %3193 = vmatpush.msra.mxu0 0.0
    %3194 = vmatpush.msra.mxu0 0.0
    %3195 = vmatpush.msra.mxu0 0.0
    %3196 = vmatpush.msra.mxu0 0.0
    %3197 = vmatpush.msra.mxu0 0.0
    %3198 = vmatpush.msra.mxu0 0.0
    %3199 = vmatpush.msra.mxu0 0.0
    %3200 = vmatpush.msra.mxu0 0.0
    %3201 = vmatpush.msra.mxu0 0.0
    %3202 = vmatpush.msra.mxu0 %v3129
    %3203 = vmatmul.f32.gmra.mxu0 %v3136
    %v3204 = vpop.f32.mrf.mxu0
    %v3205 = vadd.f32 0.0, %v3204
    %3206 = vmatmul.f32.gmra.mxu0 %v3139
    %v3207 = vpop.f32.mrf.mxu0
    %v3208 = vadd.f32 0.0, %v3207
    %3209 = vdwg.mxu0
    %v3210 = vadd.f32 %v3118, %v3159
    %v3211 = vadd.f32 %v3119, %v3182
    %v3212 = vadd.f32 %v3120, %v3205
    %v3213 = vadd.f32 %v3121, %v3162
    %v3214 = vadd.f32 %v3122, %v3185
    %v3215 = vadd.f32 %v3123, %v3208
    %3216 = vrot.lane.b32.xlu0 %v2622, 122
    %v3217 = vpop.permute.xlu0 %3216
    %3218 = vrot.lane.b32.xlu0 %v2623, 122
    %v3219 = vpop.permute.xlu0 %3218
    %3220 = vrot.lane.b32.xlu0 %v2624, 122
    %v3221 = vpop.permute.xlu0 %3220
    %v3222 = vsel %vm1828, %v3217, %v3219
    %v3223 = vsel %vm1828, %v3219, %v3221
    %v3228 = vsel %vm2527, %v2678, 0
    %v3231 = vsel %vm2527, %v2679, 0
    %3233 = vmatpush.msra.mxu0 0.0
    %3234 = vmatpush.msra.mxu0 0.0
    %3235 = vmatpush.msra.mxu0 0.0
    %3236 = vmatpush.msra.mxu0 0.0
    %3237 = vmatpush.msra.mxu0 0.0
    %3238 = vmatpush.msra.mxu0 0.0
    %3239 = vmatpush.msra.mxu0 0.0
    %3240 = vmatpush.msra.mxu0 0.0
    %3241 = vmatpush.msra.mxu0 0.0
    %3242 = vmatpush.msra.mxu0 0.0
    %3243 = vmatpush.msra.mxu0 0.0
    %3244 = vmatpush.msra.mxu0 0.0
    %3245 = vmatpush.msra.mxu0 0.0
    %3246 = vmatpush.msra.mxu0 0.0
    %3247 = vmatpush.msra.mxu0 0.0
    %3248 = vmatpush.msra.mxu0 %v3222
    %3249 = vmatmul.f32.gmra.mxu0 %v3228
    %v3250 = vpop.f32.mrf.mxu0
    %v3251 = vadd.f32 0.0, %v3250
    %3252 = vmatmul.f32.gmra.mxu0 %v3231
    %v3253 = vpop.f32.mrf.mxu0
    %v3254 = vadd.f32 0.0, %v3253
    %3255 = vdwg.mxu0
    %3256 = vmatpush.msra.mxu0 0.0
    %3257 = vmatpush.msra.mxu0 0.0
    %3258 = vmatpush.msra.mxu0 0.0
    %3259 = vmatpush.msra.mxu0 0.0
    %3260 = vmatpush.msra.mxu0 0.0
    %3261 = vmatpush.msra.mxu0 0.0
    %3262 = vmatpush.msra.mxu0 0.0
    %3263 = vmatpush.msra.mxu0 0.0
    %3264 = vmatpush.msra.mxu0 0.0
    %3265 = vmatpush.msra.mxu0 0.0
    %3266 = vmatpush.msra.mxu0 0.0
    %3267 = vmatpush.msra.mxu0 0.0
    %3268 = vmatpush.msra.mxu0 0.0
    %3269 = vmatpush.msra.mxu0 0.0
    %3270 = vmatpush.msra.mxu0 0.0
    %3271 = vmatpush.msra.mxu0 %v3223
    %3272 = vmatmul.f32.gmra.mxu0 %v3228
    %v3273 = vpop.f32.mrf.mxu0
    %v3274 = vadd.f32 0.0, %v3273
    %3275 = vmatmul.f32.gmra.mxu0 %v3231
    %v3276 = vpop.f32.mrf.mxu0
    %v3277 = vadd.f32 0.0, %v3276
    %3278 = vdwg.mxu0
    %3279 = vmatpush.msra.mxu0 0.0
    %3280 = vmatpush.msra.mxu0 0.0
    %3281 = vmatpush.msra.mxu0 0.0
    %3282 = vmatpush.msra.mxu0 0.0
    %3283 = vmatpush.msra.mxu0 0.0
    %3284 = vmatpush.msra.mxu0 0.0
    %3285 = vmatpush.msra.mxu0 0.0
    %3286 = vmatpush.msra.mxu0 0.0
    %3287 = vmatpush.msra.mxu0 0.0
    %3288 = vmatpush.msra.mxu0 0.0
    %3289 = vmatpush.msra.mxu0 0.0
    %3290 = vmatpush.msra.mxu0 0.0
    %3291 = vmatpush.msra.mxu0 0.0
    %3292 = vmatpush.msra.mxu0 0.0
    %3293 = vmatpush.msra.mxu0 0.0
    %3294 = vmatpush.msra.mxu0 %v3221
    %3295 = vmatmul.f32.gmra.mxu0 %v3228
    %v3296 = vpop.f32.mrf.mxu0
    %v3297 = vadd.f32 0.0, %v3296
    %3298 = vmatmul.f32.gmra.mxu0 %v3231
    %v3299 = vpop.f32.mrf.mxu0
    %v3300 = vadd.f32 0.0, %v3299
    %3301 = vdwg.mxu0
    %v3302 = vadd.f32 %v3210, %v3251
    %v3303 = vadd.f32 %v3211, %v3274
    %v3304 = vadd.f32 %v3212, %v3297
    %v3305 = vadd.f32 %v3213, %v3254
    %v3306 = vadd.f32 %v3214, %v3277
    %v3307 = vadd.f32 %v3215, %v3300
    %3309 = vset.pattern.permute.xlu0 0
    %3310 = vperm.xlu0 %3309, %v2680
    %v3311 = vpop.permute.xlu0 %3310
    %3314 = vset.pattern.permute.xlu0 0
    %3315 = vperm.xlu0 %3314, %v2681
    %v3316 = vpop.permute.xlu0 %3315
    %vm3318 = vcmask 564224
    %v3320 = vsel %vm3318, %v3304, 0
    %v3323 = vsel %vm3318, %v3307, 0
    %vm3325 = vcmask 1044480
    %v3327 = vsel %vm3325, %v2665, 0
    %3329 = vmatpush.msra.mxu0 %v2640
    %3330 = vmatpush.msra.mxu0 %v2639
    %3331 = vmatpush.msra.mxu0 %v2638
    %3332 = vmatpush.msra.mxu0 %v2637
    %3333 = vmatpush.msra.mxu0 %v2636
    %3334 = vmatpush.msra.mxu0 %v2635
    %3335 = vmatpush.msra.mxu0 %v2634
    %3336 = vmatpush.msra.mxu0 %v2633
    %3337 = vmatpush.msra.mxu0 %v2632
    %3338 = vmatpush.msra.mxu0 %v2631
    %3339 = vmatpush.msra.mxu0 %v2630
    %3340 = vmatpush.msra.mxu0 %v2629
    %3341 = vmatpush.msra.mxu0 %v2628
    %3342 = vmatpush.msra.mxu0 %v2627
    %3343 = vmatpush.msra.mxu0 %v2626
    %3344 = vmatpush.msra.mxu0 %v2625
    %3345 = vmatmul.f32.gmra.mxu0 %v3302
    %v3346 = vpop.f32.mrf.mxu0
    %v3347 = vadd.f32 %v3311, %v3346
    %3348 = vmatmul.f32.gmra.mxu0 %v3305
    %v3349 = vpop.f32.mrf.mxu0
    %v3350 = vadd.f32 %v3316, %v3349
    %3351 = vdwg.mxu0
    %3352 = vmatpush.msra.mxu0 %v2656
    %3353 = vmatpush.msra.mxu0 %v2655
    %3354 = vmatpush.msra.mxu0 %v2654
    %3355 = vmatpush.msra.mxu0 %v2653
    %3356 = vmatpush.msra.mxu0 %v2652
    %3357 = vmatpush.msra.mxu0 %v2651
    %3358 = vmatpush.msra.mxu0 %v2650
    %3359 = vmatpush.msra.mxu0 %v2649
    %3360 = vmatpush.msra.mxu0 %v2648
    %3361 = vmatpush.msra.mxu0 %v2647
    %3362 = vmatpush.msra.mxu0 %v2646
    %3363 = vmatpush.msra.mxu0 %v2645
    %3364 = vmatpush.msra.mxu0 %v2644
    %3365 = vmatpush.msra.mxu0 %v2643
    %3366 = vmatpush.msra.mxu0 %v2642
    %3367 = vmatpush.msra.mxu0 %v2641
    %3368 = vmatmul.f32.gmra.mxu0 %v3303
    %v3369 = vpop.f32.mrf.mxu0
    %v3370 = vadd.f32 %v3347, %v3369
    %3371 = vmatmul.f32.gmra.mxu0 %v3306
    %v3372 = vpop.f32.mrf.mxu0
    %v3373 = vadd.f32 %v3350, %v3372
    %3374 = vdwg.mxu0
    %3375 = vmatpush.msra.mxu0 0.0
    %3376 = vmatpush.msra.mxu0 0.0
    %3377 = vmatpush.msra.mxu0 0.0
    %3378 = vmatpush.msra.mxu0 0.0
    %3379 = vmatpush.msra.mxu0 0.0
    %3380 = vmatpush.msra.mxu0 0.0
    %3381 = vmatpush.msra.mxu0 0.0
    %3382 = vmatpush.msra.mxu0 %v3327
    %3383 = vmatpush.msra.mxu0 %v2664
    %3384 = vmatpush.msra.mxu0 %v2663
    %3385 = vmatpush.msra.mxu0 %v2662
    %3386 = vmatpush.msra.mxu0 %v2661
    %3387 = vmatpush.msra.mxu0 %v2660
    %3388 = vmatpush.msra.mxu0 %v2659
    %3389 = vmatpush.msra.mxu0 %v2658
    %3390 = vmatpush.msra.mxu0 %v2657
    %3391 = vmatmul.f32.gmra.mxu0 %v3320
    %v3392 = vpop.f32.mrf.mxu0
    %v3393 = vadd.f32 %v3370, %v3392
    %3394 = vmatmul.f32.gmra.mxu0 %v3323
    %v3395 = vpop.f32.mrf.mxu0
    %v3396 = vadd.f32 %v3373, %v3395
    %3397 = vdwg.mxu0
    %vm3398 = vcmask 891904
    %v3399 = vsel %vm3398, %v3393, 0.0
    %3400 = vadd.xlane.f32.xlu0 %v3399
    %v3401 = vpop.xlane.xlu0 %3400
    %v3402 = vsel %vm3398, %v3396, 0.0
    %3403 = vadd.xlane.f32.xlu0 %v3402
    %v3404 = vpop.xlane.xlu0 %3403
    %vm3405 = vcmask 130048
    %v3407 = vsel %vm3405, %v2682, 0
    %v3410 = vsel %vm3405, %v2683, 0
    %3412 = vmatpush.msra.mxu0 0.0
    %3413 = vmatpush.msra.mxu0 0.0
    %3414 = vmatpush.msra.mxu0 0.0
    %3415 = vmatpush.msra.mxu0 0.0
    %3416 = vmatpush.msra.mxu0 0.0
    %3417 = vmatpush.msra.mxu0 0.0
    %3418 = vmatpush.msra.mxu0 0.0
    %3419 = vmatpush.msra.mxu0 0.0
    %3420 = vmatpush.msra.mxu0 0.0
    %3421 = vmatpush.msra.mxu0 0.0
    %3422 = vmatpush.msra.mxu0 0.0
    %3423 = vmatpush.msra.mxu0 0.0
    %3424 = vmatpush.msra.mxu0 0.0
    %3425 = vmatpush.msra.mxu0 0.0
    %3426 = vmatpush.msra.mxu0 %v3404
    %3427 = vmatpush.msra.mxu0 %v3401
    %3428 = vmatmul.f32.gmra.mxu0 %v3407
    %v3429 = vpop.f32.mrf.mxu0
    %v3430 = vadd.f32 0.0, %v3429
    %3431 = vmatmul.f32.gmra.mxu0 %v3410
    %v3432 = vpop.f32.mrf.mxu0
    %v3433 = vadd.f32 0.0, %v3432
    %3434 = vdwg.mxu0
    %v3435 = vmul.f32 %v3430, 0.0045871558
    %v3436 = vmul.f32 %v3433, 0.0045871558
    %3438 = vset.pattern.permute.xlu0 0
    %3439 = vperm.xlu0 %3438, %v3435
    %v3440 = vpop.permute.xlu0 %3439
    %3443 = vset.pattern.permute.xlu0 0
    %3444 = vperm.xlu0 %3443, %v3436
    %v3445 = vpop.permute.xlu0 %3444
    %v3447 = vsub.f32 %v3393, %v3440
    %v3448 = vsub.f32 %v3396, %v3445
    %v3449 = vmul.f32 %v3447, %v3447
    %v3450 = vmul.f32 %v3448, %v3448
    %v3451 = vsel %vm3398, %v3449, 0.0
    %3452 = vadd.xlane.f32.xlu0 %v3451
    %v3453 = vpop.xlane.xlu0 %3452
    %v3454 = vsel %vm3398, %v3450, 0.0
    %3455 = vadd.xlane.f32.xlu0 %v3454
    %v3456 = vpop.xlane.xlu0 %3455
    %3457 = vmatpush.msra.mxu0 0.0
    %3458 = vmatpush.msra.mxu0 0.0
    %3459 = vmatpush.msra.mxu0 0.0
    %3460 = vmatpush.msra.mxu0 0.0
    %3461 = vmatpush.msra.mxu0 0.0
    %3462 = vmatpush.msra.mxu0 0.0
    %3463 = vmatpush.msra.mxu0 0.0
    %3464 = vmatpush.msra.mxu0 0.0
    %3465 = vmatpush.msra.mxu0 0.0
    %3466 = vmatpush.msra.mxu0 0.0
    %3467 = vmatpush.msra.mxu0 0.0
    %3468 = vmatpush.msra.mxu0 0.0
    %3469 = vmatpush.msra.mxu0 0.0
    %3470 = vmatpush.msra.mxu0 0.0
    %3471 = vmatpush.msra.mxu0 %v3456
    %3472 = vmatpush.msra.mxu0 %v3453
    %3473 = vmatmul.f32.gmra.mxu0 %v3407
    %v3474 = vpop.f32.mrf.mxu0
    %v3475 = vadd.f32 0.0, %v3474
    %3476 = vmatmul.f32.gmra.mxu0 %v3410
    %v3477 = vpop.f32.mrf.mxu0
    %v3478 = vadd.f32 0.0, %v3477
    %3479 = vdwg.mxu0
    %v3480 = vmul.f32 %v3475, 0.0045871558
    %v3481 = vmul.f32 %v3478, 0.0045871558
    %3482 = vset.pattern.permute.xlu0 1
    %3483 = vperm.xlu0 %3482, %v2680
    %v3484 = vpop.permute.xlu0 %3483
    %3486 = vset.pattern.permute.xlu0 1
    %3487 = vperm.xlu0 %3486, %v2681
    %v3488 = vpop.permute.xlu0 %3487
    %v3490 = vmul.f32 %v3484, %v3447
    %v3491 = vmul.f32 %v3488, %v3448
    %v3492 = vadd.f32 %v3480, 1e-05
    %v3493 = vadd.f32 %v3481, 1e-05
    %v3494 = vrsqrt.pop %v3492
    %v3495 = vmul.f32 %v3494, %v3492
    %v3496 = vmul.f32 %v3495, %v3494
    %v3497 = vmul.f32 0.5, %v3496
    %v3498 = vsub.f32 1.5, %v3497
    %v3499 = vmul.f32 %v3494, %v3498
    %vm3500 = vweird.f32 %v3492
    %vm3501 = vweird.f32 %v3494
    %vm3502 = vmor %vm3500, %vm3501
    %v3503 = vsel %vm3502, %v3494, %v3499
    %v3504 = vrsqrt.pop %v3493
    %v3505 = vmul.f32 %v3504, %v3493
    %v3506 = vmul.f32 %v3505, %v3504
    %v3507 = vmul.f32 0.5, %v3506
    %v3508 = vsub.f32 1.5, %v3507
    %v3509 = vmul.f32 %v3504, %v3508
    %vm3510 = vweird.f32 %v3493
    %vm3511 = vweird.f32 %v3504
    %vm3512 = vmor %vm3510, %vm3511
    %v3513 = vsel %vm3512, %v3504, %v3509
    %3515 = vset.pattern.permute.xlu0 0
    %3516 = vperm.xlu0 %3515, %v3503
    %v3517 = vpop.permute.xlu0 %3516
    %3520 = vset.pattern.permute.xlu0 0
    %3521 = vperm.xlu0 %3520, %v3513
    %v3522 = vpop.permute.xlu0 %3521
    %v3524 = vmul.f32 %v3490, %v3517
    %v3525 = vmul.f32 %v3491, %v3522
    %3526 = vset.pattern.permute.xlu0 2
    %3527 = vperm.xlu0 %3526, %v2680
    %v3528 = vpop.permute.xlu0 %3527
    %3530 = vset.pattern.permute.xlu0 2
    %3531 = vperm.xlu0 %3530, %v2681
    %v3532 = vpop.permute.xlu0 %3531
    %v3534 = vadd.f32 %v3524, %v3528
    %v3535 = vadd.f32 %v3525, %v3532
    %v3536 = vmax.f32 %v3534, 0.0
    %v3537 = vmax.f32 %v3535, 0.0
    %v3538 = vld [vmem:[#allocation6] sm:$0xff]
    %v3539 = vld [vmem:[#allocation6 + $0x8] sm:$0xff]
    %v3540 = vld [vmem:[#allocation6 + $0x10] sm:$0xff]
    %v3541 = vld [vmem:[#allocation6 + $0x18] sm:$0xff]
    %v3542 = vld [vmem:[#allocation6 + $0x20] sm:$0xff]
    %v3543 = vld [vmem:[#allocation6 + $0x28] sm:$0xff]
    %v3544 = vld [vmem:[#allocation6 + $0x30] sm:$0xff]
    %v3545 = vld [vmem:[#allocation6 + $0x38] sm:$0xff]
    %v3546 = vld [vmem:[#allocation6 + $0x40] sm:$0xff]
    %v3547 = vld [vmem:[#allocation6 + $0x48] sm:$0xff]
    %v3548 = vld [vmem:[#allocation6 + $0x50] sm:$0xff]
    %v3549 = vld [vmem:[#allocation6 + $0x58] sm:$0xff]
    %v3550 = vld [vmem:[#allocation6 + $0x60] sm:$0x7f]
    %v3551 = vld [vmem:[%s10] sm:$0xff]
    %v3552 = vld [vmem:[%s10 + $0x8] sm:$0xff]
    %v3553 = vld [vmem:[%s10 + $0x10] sm:$0xff]
    %v3554 = vld [vmem:[%s10 + $0x18] sm:$0xff]
    %v3555 = vld [vmem:[%s10 + $0x20] sm:$0xff]
    %v3556 = vld [vmem:[%s10 + $0x28] sm:$0xff]
    %v3557 = vld [vmem:[%s10 + $0x30] sm:$0xff]
    %v3558 = vld [vmem:[%s10 + $0x38] sm:$0xff]
    %v3559 = vld [vmem:[%s10 + $0x40] sm:$0xff]
    %v3560 = vld [vmem:[%s10 + $0x48] sm:$0xff]
    %v3561 = vld [vmem:[%s10 + $0x50] sm:$0xff]
    %v3562 = vld [vmem:[%s10 + $0x58] sm:$0xff]
    %v3563 = vld [vmem:[%s10 + $0x60] sm:$0xff]
    %v3564 = vld [vmem:[%s10 + $0x68] sm:$0xff]
    %v3565 = vld [vmem:[%s10 + $0x70] sm:$0xff]
    %v3566 = vld [vmem:[%s10 + $0x78] sm:$0xff]
    %v3567 = vld [vmem:[%s10 + $0x80] sm:$0xff]
    %v3568 = vld [vmem:[%s10 + $0x88] sm:$0xff]
    %v3569 = vld [vmem:[%s10 + $0x90] sm:$0xff]
    %v3570 = vld [vmem:[%s10 + $0x98] sm:$0xff]
    %v3571 = vld [vmem:[%s10 + $0xa0] sm:$0xff]
    %v3572 = vld [vmem:[%s10 + $0xa8] sm:$0xff]
    %v3573 = vld [vmem:[%s10 + $0xb0] sm:$0xff]
    %v3574 = vld [vmem:[%s10 + $0xb8] sm:$0xff]
    %v3575 = vld [vmem:[%s10 + $0xc0] sm:$0xff]
    %v3576 = vld [vmem:[%s10 + $0xc8] sm:$0xff]
    %v3577 = vld [vmem:[%s10 + $0xd0] sm:$0xff]
    %v3578 = vld [vmem:[%s10 + $0xd8] sm:$0xff]
    %v3579 = vld [vmem:[%s11] sm:$0xff]
    %v3580 = vld [vmem:[%s11 + $0x8] sm:$0xff]
    %v3581 = vld [vmem:[%s11 + $0x10] sm:$0xff]
    %v3582 = vld [vmem:[%s11 + $0x18] sm:$0xff]
    %v3583 = vld [vmem:[%s12] sm:$0xff]
    %v3584 = vld [vmem:[%s12 + $0x8] sm:$0xff]
    %v3585 = vld [vmem:[%s12 + $0x10] sm:$0xff]
    %v3586 = vld [vmem:[%s12 + $0x18] sm:$0xff]
    %3589 = vrot.lane.b32.xlu0 %v3536, 127
    %v3590 = vpop.permute.xlu0 %3589
    %3591 = vrot.lane.b32.xlu0 %v3537, 127
    %v3592 = vpop.permute.xlu0 %3591
    %v3596 = vsel %vm3405, %v3555, 0
    %v3599 = vsel %vm3405, %v3556, 0
    %v3602 = vsel %vm3405, %v3557, 0
    %v3605 = vsel %vm3405, %v3558, 0
    %3607 = vmatpush.msra.mxu0 0.0
    %3608 = vmatpush.msra.mxu0 0.0
    %3609 = vmatpush.msra.mxu0 0.0
    %3610 = vmatpush.msra.mxu0 0.0
    %3611 = vmatpush.msra.mxu0 0.0
    %3612 = vmatpush.msra.mxu0 0.0
    %3613 = vmatpush.msra.mxu0 0.0
    %3614 = vmatpush.msra.mxu0 0.0
    %3615 = vmatpush.msra.mxu0 0.0
    %3616 = vmatpush.msra.mxu0 0.0
    %3617 = vmatpush.msra.mxu0 0.0
    %3618 = vmatpush.msra.mxu0 0.0
    %3619 = vmatpush.msra.mxu0 0.0
    %3620 = vmatpush.msra.mxu0 0.0
    %3621 = vmatpush.msra.mxu0 %v3592
    %3622 = vmatpush.msra.mxu0 %v3590
    %3623 = vmatmul.f32.gmra.mxu0 %v3596
    %v3624 = vpop.f32.mrf.mxu0
    %v3625 = vadd.f32 0.0, %v3624
    %3626 = vmatmul.f32.gmra.mxu0 %v3599
    %v3627 = vpop.f32.mrf.mxu0
    %v3628 = vadd.f32 0.0, %v3627
    %3629 = vmatmul.f32.gmra.mxu0 %v3602
    %v3630 = vpop.f32.mrf.mxu0
    %v3631 = vadd.f32 0.0, %v3630
    %3632 = vmatmul.f32.gmra.mxu0 %v3605
    %v3633 = vpop.f32.mrf.mxu0
    %v3634 = vadd.f32 0.0, %v3633
    %3635 = vdwg.mxu0
    %v3637 = vsel %vm3405, %v3551, 0
    %v3640 = vsel %vm3405, %v3552, 0
    %v3643 = vsel %vm3405, %v3553, 0
    %v3646 = vsel %vm3405, %v3554, 0
    %3648 = vmatpush.msra.mxu0 0.0
    %3649 = vmatpush.msra.mxu0 0.0
    %3650 = vmatpush.msra.mxu0 0.0
    %3651 = vmatpush.msra.mxu0 0.0
    %3652 = vmatpush.msra.mxu0 0.0
    %3653 = vmatpush.msra.mxu0 0.0
    %3654 = vmatpush.msra.mxu0 0.0
    %3655 = vmatpush.msra.mxu0 0.0
    %3656 = vmatpush.msra.mxu0 0.0
    %3657 = vmatpush.msra.mxu0 0.0
    %3658 = vmatpush.msra.mxu0 0.0
    %3659 = vmatpush.msra.mxu0 0.0
    %3660 = vmatpush.msra.mxu0 0.0
    %3661 = vmatpush.msra.mxu0 0.0
    %3662 = vmatpush.msra.mxu0 %v3537
    %3663 = vmatpush.msra.mxu0 %v3536
    %3664 = vmatmul.f32.gmra.mxu0 %v3637
    %v3665 = vpop.f32.mrf.mxu0
    %v3666 = vadd.f32 %v3625, %v3665
    %3667 = vmatmul.f32.gmra.mxu0 %v3640
    %v3668 = vpop.f32.mrf.mxu0
    %v3669 = vadd.f32 %v3628, %v3668
    %3670 = vmatmul.f32.gmra.mxu0 %v3643
    %v3671 = vpop.f32.mrf.mxu0
    %v3672 = vadd.f32 %v3631, %v3671
    %3673 = vmatmul.f32.gmra.mxu0 %v3646
    %v3674 = vpop.f32.mrf.mxu0
    %v3675 = vadd.f32 %v3634, %v3674
    %3676 = vdwg.mxu0
    %3677 = vrot.lane.b32.xlu0 %v3536, 126
    %v3678 = vpop.permute.xlu0 %3677
    %3679 = vrot.lane.b32.xlu0 %v3537, 126
    %v3680 = vpop.permute.xlu0 %3679
    %v3684 = vsel %vm3405, %v3559, 0
    %v3687 = vsel %vm3405, %v3560, 0
    %v3690 = vsel %vm3405, %v3561, 0
    %v3693 = vsel %vm3405, %v3562, 0
    %3695 = vmatpush.msra.mxu0 0.0
    %3696 = vmatpush.msra.mxu0 0.0
    %3697 = vmatpush.msra.mxu0 0.0
    %3698 = vmatpush.msra.mxu0 0.0
    %3699 = vmatpush.msra.mxu0 0.0
    %3700 = vmatpush.msra.mxu0 0.0
    %3701 = vmatpush.msra.mxu0 0.0
    %3702 = vmatpush.msra.mxu0 0.0
    %3703 = vmatpush.msra.mxu0 0.0
    %3704 = vmatpush.msra.mxu0 0.0
    %3705 = vmatpush.msra.mxu0 0.0
    %3706 = vmatpush.msra.mxu0 0.0
    %3707 = vmatpush.msra.mxu0 0.0
    %3708 = vmatpush.msra.mxu0 0.0
    %3709 = vmatpush.msra.mxu0 %v3680
    %3710 = vmatpush.msra.mxu0 %v3678
    %3711 = vmatmul.f32.gmra.mxu0 %v3684
    %v3712 = vpop.f32.mrf.mxu0
    %v3713 = vadd.f32 0.0, %v3712
    %3714 = vmatmul.f32.gmra.mxu0 %v3687
    %v3715 = vpop.f32.mrf.mxu0
    %v3716 = vadd.f32 0.0, %v3715
    %3717 = vmatmul.f32.gmra.mxu0 %v3690
    %v3718 = vpop.f32.mrf.mxu0
    %v3719 = vadd.f32 0.0, %v3718
    %3720 = vmatmul.f32.gmra.mxu0 %v3693
    %v3721 = vpop.f32.mrf.mxu0
    %v3722 = vadd.f32 0.0, %v3721
    %3723 = vdwg.mxu0
    %v3724 = vadd.f32 %v3666, %v3713
    %v3725 = vadd.f32 %v3669, %v3716
    %v3726 = vadd.f32 %v3672, %v3719
    %v3727 = vadd.f32 %v3675, %v3722
    %3728 = vrot.lane.b32.xlu0 %v3536, 125
    %v3729 = vpop.permute.xlu0 %3728
    %3730 = vrot.lane.b32.xlu0 %v3537, 125
    %v3731 = vpop.permute.xlu0 %3730
    %v3735 = vsel %vm3405, %v3563, 0
    %v3738 = vsel %vm3405, %v3564, 0
    %v3741 = vsel %vm3405, %v3565, 0
    %v3744 = vsel %vm3405, %v3566, 0
    %3746 = vmatpush.msra.mxu0 0.0
    %3747 = vmatpush.msra.mxu0 0.0
    %3748 = vmatpush.msra.mxu0 0.0
    %3749 = vmatpush.msra.mxu0 0.0
    %3750 = vmatpush.msra.mxu0 0.0
    %3751 = vmatpush.msra.mxu0 0.0
    %3752 = vmatpush.msra.mxu0 0.0
    %3753 = vmatpush.msra.mxu0 0.0
    %3754 = vmatpush.msra.mxu0 0.0
    %3755 = vmatpush.msra.mxu0 0.0
    %3756 = vmatpush.msra.mxu0 0.0
    %3757 = vmatpush.msra.mxu0 0.0
    %3758 = vmatpush.msra.mxu0 0.0
    %3759 = vmatpush.msra.mxu0 0.0
    %3760 = vmatpush.msra.mxu0 %v3731
    %3761 = vmatpush.msra.mxu0 %v3729
    %3762 = vmatmul.f32.gmra.mxu0 %v3735
    %v3763 = vpop.f32.mrf.mxu0
    %v3764 = vadd.f32 0.0, %v3763
    %3765 = vmatmul.f32.gmra.mxu0 %v3738
    %v3766 = vpop.f32.mrf.mxu0
    %v3767 = vadd.f32 0.0, %v3766
    %3768 = vmatmul.f32.gmra.mxu0 %v3741
    %v3769 = vpop.f32.mrf.mxu0
    %v3770 = vadd.f32 0.0, %v3769
    %3771 = vmatmul.f32.gmra.mxu0 %v3744
    %v3772 = vpop.f32.mrf.mxu0
    %v3773 = vadd.f32 0.0, %v3772
    %3774 = vdwg.mxu0
    %v3775 = vadd.f32 %v3724, %v3764
    %v3776 = vadd.f32 %v3725, %v3767
    %v3777 = vadd.f32 %v3726, %v3770
    %v3778 = vadd.f32 %v3727, %v3773
    %3779 = vrot.lane.b32.xlu0 %v3536, 124
    %v3780 = vpop.permute.xlu0 %3779
    %3781 = vrot.lane.b32.xlu0 %v3537, 124
    %v3782 = vpop.permute.xlu0 %3781
    %v3786 = vsel %vm3405, %v3567, 0
    %v3789 = vsel %vm3405, %v3568, 0
    %v3792 = vsel %vm3405, %v3569, 0
    %v3795 = vsel %vm3405, %v3570, 0
    %3797 = vmatpush.msra.mxu0 0.0
    %3798 = vmatpush.msra.mxu0 0.0
    %3799 = vmatpush.msra.mxu0 0.0
    %3800 = vmatpush.msra.mxu0 0.0
    %3801 = vmatpush.msra.mxu0 0.0
    %3802 = vmatpush.msra.mxu0 0.0
    %3803 = vmatpush.msra.mxu0 0.0
    %3804 = vmatpush.msra.mxu0 0.0
    %3805 = vmatpush.msra.mxu0 0.0
    %3806 = vmatpush.msra.mxu0 0.0
    %3807 = vmatpush.msra.mxu0 0.0
    %3808 = vmatpush.msra.mxu0 0.0
    %3809 = vmatpush.msra.mxu0 0.0
    %3810 = vmatpush.msra.mxu0 0.0
    %3811 = vmatpush.msra.mxu0 %v3782
    %3812 = vmatpush.msra.mxu0 %v3780
    %3813 = vmatmul.f32.gmra.mxu0 %v3786
    %v3814 = vpop.f32.mrf.mxu0
    %v3815 = vadd.f32 0.0, %v3814
    %3816 = vmatmul.f32.gmra.mxu0 %v3789
    %v3817 = vpop.f32.mrf.mxu0
    %v3818 = vadd.f32 0.0, %v3817
    %3819 = vmatmul.f32.gmra.mxu0 %v3792
    %v3820 = vpop.f32.mrf.mxu0
    %v3821 = vadd.f32 0.0, %v3820
    %3822 = vmatmul.f32.gmra.mxu0 %v3795
    %v3823 = vpop.f32.mrf.mxu0
    %v3824 = vadd.f32 0.0, %v3823
    %3825 = vdwg.mxu0
    %v3826 = vadd.f32 %v3775, %v3815
    %v3827 = vadd.f32 %v3776, %v3818
    %v3828 = vadd.f32 %v3777, %v3821
    %v3829 = vadd.f32 %v3778, %v3824
    %3830 = vrot.lane.b32.xlu0 %v3536, 123
    %v3831 = vpop.permute.xlu0 %3830
    %3832 = vrot.lane.b32.xlu0 %v3537, 123
    %v3833 = vpop.permute.xlu0 %3832
    %v3837 = vsel %vm3405, %v3571, 0
    %v3840 = vsel %vm3405, %v3572, 0
    %v3843 = vsel %vm3405, %v3573, 0
    %v3846 = vsel %vm3405, %v3574, 0
    %3848 = vmatpush.msra.mxu0 0.0
    %3849 = vmatpush.msra.mxu0 0.0
    %3850 = vmatpush.msra.mxu0 0.0
    %3851 = vmatpush.msra.mxu0 0.0
    %3852 = vmatpush.msra.mxu0 0.0
    %3853 = vmatpush.msra.mxu0 0.0
    %3854 = vmatpush.msra.mxu0 0.0
    %3855 = vmatpush.msra.mxu0 0.0
    %3856 = vmatpush.msra.mxu0 0.0
    %3857 = vmatpush.msra.mxu0 0.0
    %3858 = vmatpush.msra.mxu0 0.0
    %3859 = vmatpush.msra.mxu0 0.0
    %3860 = vmatpush.msra.mxu0 0.0
    %3861 = vmatpush.msra.mxu0 0.0
    %3862 = vmatpush.msra.mxu0 %v3833
    %3863 = vmatpush.msra.mxu0 %v3831
    %3864 = vmatmul.f32.gmra.mxu0 %v3837
    %v3865 = vpop.f32.mrf.mxu0
    %v3866 = vadd.f32 0.0, %v3865
    %3867 = vmatmul.f32.gmra.mxu0 %v3840
    %v3868 = vpop.f32.mrf.mxu0
    %v3869 = vadd.f32 0.0, %v3868
    %3870 = vmatmul.f32.gmra.mxu0 %v3843
    %v3871 = vpop.f32.mrf.mxu0
    %v3872 = vadd.f32 0.0, %v3871
    %3873 = vmatmul.f32.gmra.mxu0 %v3846
    %v3874 = vpop.f32.mrf.mxu0
    %v3875 = vadd.f32 0.0, %v3874
    %3876 = vdwg.mxu0
    %v3877 = vadd.f32 %v3826, %v3866
    %v3878 = vadd.f32 %v3827, %v3869
    %v3879 = vadd.f32 %v3828, %v3872
    %v3880 = vadd.f32 %v3829, %v3875
    %3881 = vrot.lane.b32.xlu0 %v3536, 122
    %v3882 = vpop.permute.xlu0 %3881
    %3883 = vrot.lane.b32.xlu0 %v3537, 122
    %v3884 = vpop.permute.xlu0 %3883
    %v3888 = vsel %vm3405, %v3575, 0
    %v3891 = vsel %vm3405, %v3576, 0
    %v3894 = vsel %vm3405, %v3577, 0
    %v3897 = vsel %vm3405, %v3578, 0
    %3899 = vmatpush.msra.mxu0 0.0
    %3900 = vmatpush.msra.mxu0 0.0
    %3901 = vmatpush.msra.mxu0 0.0
    %3902 = vmatpush.msra.mxu0 0.0
    %3903 = vmatpush.msra.mxu0 0.0
    %3904 = vmatpush.msra.mxu0 0.0
    %3905 = vmatpush.msra.mxu0 0.0
    %3906 = vmatpush.msra.mxu0 0.0
    %3907 = vmatpush.msra.mxu0 0.0
    %3908 = vmatpush.msra.mxu0 0.0
    %3909 = vmatpush.msra.mxu0 0.0
    %3910 = vmatpush.msra.mxu0 0.0
    %3911 = vmatpush.msra.mxu0 0.0
    %3912 = vmatpush.msra.mxu0 0.0
    %3913 = vmatpush.msra.mxu0 %v3884
    %3914 = vmatpush.msra.mxu0 %v3882
    %3915 = vmatmul.f32.gmra.mxu0 %v3888
    %v3916 = vpop.f32.mrf.mxu0
    %v3917 = vadd.f32 0.0, %v3916
    %3918 = vmatmul.f32.gmra.mxu0 %v3891
    %v3919 = vpop.f32.mrf.mxu0
    %v3920 = vadd.f32 0.0, %v3919
    %3921 = vmatmul.f32.gmra.mxu0 %v3894
    %v3922 = vpop.f32.mrf.mxu0
    %v3923 = vadd.f32 0.0, %v3922
    %3924 = vmatmul.f32.gmra.mxu0 %v3897
    %v3925 = vpop.f32.mrf.mxu0
    %v3926 = vadd.f32 0.0, %v3925
    %3927 = vdwg.mxu0
    %v3928 = vadd.f32 %v3877, %v3917
    %v3929 = vadd.f32 %v3878, %v3920
    %v3930 = vadd.f32 %v3879, %v3923
    %v3931 = vadd.f32 %v3880, %v3926
    %3933 = vset.pattern.permute.xlu0 0
    %3934 = vperm.xlu0 %3933, %v3579
    %v3935 = vpop.permute.xlu0 %3934
    %3938 = vset.pattern.permute.xlu0 0
    %3939 = vperm.xlu0 %3938, %v3580
    %v3940 = vpop.permute.xlu0 %3939
    %3943 = vset.pattern.permute.xlu0 0
    %3944 = vperm.xlu0 %3943, %v3581
    %v3945 = vpop.permute.xlu0 %3944
    %3948 = vset.pattern.permute.xlu0 0
    %3949 = vperm.xlu0 %3948, %v3582
    %v3950 = vpop.permute.xlu0 %3949
    %vm3952 = vcmask 842752
    %v3954 = vsel %vm3952, %v3928, 0
    %v3957 = vsel %vm3952, %v3929, 0
    %v3960 = vsel %vm3952, %v3930, 0
    %v3963 = vsel %vm3952, %v3931, 0
    %vm3965 = vcmask 1046528
    %v3967 = vsel %vm3965, %v3550, 0
    %3969 = vmatpush.msra.mxu0 0.0
    %3970 = vmatpush.msra.mxu0 0.0
    %3971 = vmatpush.msra.mxu0 0.0
    %3972 = vmatpush.msra.mxu0 %v3967
    %3973 = vmatpush.msra.mxu0 %v3549
    %3974 = vmatpush.msra.mxu0 %v3548
    %3975 = vmatpush.msra.mxu0 %v3547
    %3976 = vmatpush.msra.mxu0 %v3546
    %3977 = vmatpush.msra.mxu0 %v3545
    %3978 = vmatpush.msra.mxu0 %v3544
    %3979 = vmatpush.msra.mxu0 %v3543
    %3980 = vmatpush.msra.mxu0 %v3542
    %3981 = vmatpush.msra.mxu0 %v3541
    %3982 = vmatpush.msra.mxu0 %v3540
    %3983 = vmatpush.msra.mxu0 %v3539
    %3984 = vmatpush.msra.mxu0 %v3538
    %3985 = vmatmul.f32.gmra.mxu0 %v3954
    %v3986 = vpop.f32.mrf.mxu0
    %v3987 = vadd.f32 %v3935, %v3986
    %3988 = vmatmul.f32.gmra.mxu0 %v3957
    %v3989 = vpop.f32.mrf.mxu0
    %v3990 = vadd.f32 %v3940, %v3989
    %3991 = vmatmul.f32.gmra.mxu0 %v3960
    %v3992 = vpop.f32.mrf.mxu0
    %v3993 = vadd.f32 %v3945, %v3992
    %3994 = vmatmul.f32.gmra.mxu0 %v3963
    %v3995 = vpop.f32.mrf.mxu0
    %v3996 = vadd.f32 %v3950, %v3995
    %3997 = vdwg.mxu0
    %vm3998 = vcmask 285696
    %v3999 = vsel %vm3998, %v3987, 0.0
    %4000 = vadd.xlane.f32.xlu0 %v3999
    %v4001 = vpop.xlane.xlu0 %4000
    %v4002 = vsel %vm3998, %v3990, 0.0
    %4003 = vadd.xlane.f32.xlu0 %v4002
    %v4004 = vpop.xlane.xlu0 %4003
    %v4005 = vsel %vm3998, %v3993, 0.0
    %4006 = vadd.xlane.f32.xlu0 %v4005
    %v4007 = vpop.xlane.xlu0 %4006
    %v4008 = vsel %vm3998, %v3996, 0.0
    %4009 = vadd.xlane.f32.xlu0 %v4008
    %v4010 = vpop.xlane.xlu0 %4009
    %vm4011 = vcmask 261120
    %v4013 = vsel %vm4011, %v3583, 0
    %v4016 = vsel %vm4011, %v3584, 0
    %v4019 = vsel %vm4011, %v3585, 0
    %v4022 = vsel %vm4011, %v3586, 0
    %4024 = vmatpush.msra.mxu0 0.0
    %4025 = vmatpush.msra.mxu0 0.0
    %4026 = vmatpush.msra.mxu0 0.0
    %4027 = vmatpush.msra.mxu0 0.0
    %4028 = vmatpush.msra.mxu0 0.0
    %4029 = vmatpush.msra.mxu0 0.0
    %4030 = vmatpush.msra.mxu0 0.0
    %4031 = vmatpush.msra.mxu0 0.0
    %4032 = vmatpush.msra.mxu0 0.0
    %4033 = vmatpush.msra.mxu0 0.0
    %4034 = vmatpush.msra.mxu0 0.0
    %4035 = vmatpush.msra.mxu0 0.0
    %4036 = vmatpush.msra.mxu0 %v4010
    %4037 = vmatpush.msra.mxu0 %v4007
    %4038 = vmatpush.msra.mxu0 %v4004
    %4039 = vmatpush.msra.mxu0 %v4001
    %4040 = vmatmul.f32.gmra.mxu0 %v4013
    %v4041 = vpop.f32.mrf.mxu0
    %v4042 = vadd.f32 0.0, %v4041
    %4043 = vmatmul.f32.gmra.mxu0 %v4016
    %v4044 = vpop.f32.mrf.mxu0
    %v4045 = vadd.f32 0.0, %v4044
    %4046 = vmatmul.f32.gmra.mxu0 %v4019
    %v4047 = vpop.f32.mrf.mxu0
    %v4048 = vadd.f32 0.0, %v4047
    %4049 = vmatmul.f32.gmra.mxu0 %v4022
    %v4050 = vpop.f32.mrf.mxu0
    %v4051 = vadd.f32 0.0, %v4050
    %4052 = vdwg.mxu0
    %v4053 = vmul.f32 %v4042, 0.014285714
    %v4054 = vmul.f32 %v4045, 0.014285714
    %v4055 = vmul.f32 %v4048, 0.014285714
    %v4056 = vmul.f32 %v4051, 0.014285714
    %4058 = vset.pattern.permute.xlu0 0
    %4059 = vperm.xlu0 %4058, %v4053
    %v4060 = vpop.permute.xlu0 %4059
    %4063 = vset.pattern.permute.xlu0 0
    %4064 = vperm.xlu0 %4063, %v4054
    %v4065 = vpop.permute.xlu0 %4064
    %4068 = vset.pattern.permute.xlu0 0
    %4069 = vperm.xlu0 %4068, %v4055
    %v4070 = vpop.permute.xlu0 %4069
    %4073 = vset.pattern.permute.xlu0 0
    %4074 = vperm.xlu0 %4073, %v4056
    %v4075 = vpop.permute.xlu0 %4074
    %v4077 = vsub.f32 %v3987, %v4060
    %v4078 = vsub.f32 %v3990, %v4065
    %v4079 = vsub.f32 %v3993, %v4070
    %v4080 = vsub.f32 %v3996, %v4075
    %v4081 = vmul.f32 %v4077, %v4077
    %v4082 = vmul.f32 %v4078, %v4078
    %v4083 = vmul.f32 %v4079, %v4079
    %v4084 = vmul.f32 %v4080, %v4080
    %v4085 = vsel %vm3998, %v4081, 0.0
    %4086 = vadd.xlane.f32.xlu0 %v4085
    %v4087 = vpop.xlane.xlu0 %4086
    %v4088 = vsel %vm3998, %v4082, 0.0
    %4089 = vadd.xlane.f32.xlu0 %v4088
    %v4090 = vpop.xlane.xlu0 %4089
    %v4091 = vsel %vm3998, %v4083, 0.0
    %4092 = vadd.xlane.f32.xlu0 %v4091
    %v4093 = vpop.xlane.xlu0 %4092
    %v4094 = vsel %vm3998, %v4084, 0.0
    %4095 = vadd.xlane.f32.xlu0 %v4094
    %v4096 = vpop.xlane.xlu0 %4095
    %4097 = vmatpush.msra.mxu0 0.0
    %4098 = vmatpush.msra.mxu0 0.0
    %4099 = vmatpush.msra.mxu0 0.0
    %4100 = vmatpush.msra.mxu0 0.0
    %4101 = vmatpush.msra.mxu0 0.0
    %4102 = vmatpush.msra.mxu0 0.0
    %4103 = vmatpush.msra.mxu0 0.0
    %4104 = vmatpush.msra.mxu0 0.0
    %4105 = vmatpush.msra.mxu0 0.0
    %4106 = vmatpush.msra.mxu0 0.0
    %4107 = vmatpush.msra.mxu0 0.0
    %4108 = vmatpush.msra.mxu0 0.0
    %4109 = vmatpush.msra.mxu0 %v4096
    %4110 = vmatpush.msra.mxu0 %v4093
    %4111 = vmatpush.msra.mxu0 %v4090
    %4112 = vmatpush.msra.mxu0 %v4087
    %4113 = vmatmul.f32.gmra.mxu0 %v4013
    %v4114 = vpop.f32.mrf.mxu0
    %v4115 = vadd.f32 0.0, %v4114
    %4116 = vmatmul.f32.gmra.mxu0 %v4016
    %v4117 = vpop.f32.mrf.mxu0
    %v4118 = vadd.f32 0.0, %v4117
    %4119 = vmatmul.f32.gmra.mxu0 %v4019
    %v4120 = vpop.f32.mrf.mxu0
    %v4121 = vadd.f32 0.0, %v4120
    %4122 = vmatmul.f32.gmra.mxu0 %v4022
    %v4123 = vpop.f32.mrf.mxu0
    %v4124 = vadd.f32 0.0, %v4123
    %4125 = vdwg.mxu0
    %v4126 = vmul.f32 %v4115, 0.014285714
    %v4127 = vmul.f32 %v4118, 0.014285714
    %v4128 = vmul.f32 %v4121, 0.014285714
    %v4129 = vmul.f32 %v4124, 0.014285714
    %4130 = vset.pattern.permute.xlu0 1
    %4131 = vperm.xlu0 %4130, %v3579
    %v4132 = vpop.permute.xlu0 %4131
    %4134 = vset.pattern.permute.xlu0 1
    %4135 = vperm.xlu0 %4134, %v3580
    %v4136 = vpop.permute.xlu0 %4135
    %4138 = vset.pattern.permute.xlu0 1
    %4139 = vperm.xlu0 %4138, %v3581
    %v4140 = vpop.permute.xlu0 %4139
    %4142 = vset.pattern.permute.xlu0 1
    %4143 = vperm.xlu0 %4142, %v3582
    %v4144 = vpop.permute.xlu0 %4143
    %v4146 = vmul.f32 %v4132, %v4077
    %v4147 = vmul.f32 %v4136, %v4078
    %v4148 = vmul.f32 %v4140, %v4079
    %v4149 = vmul.f32 %v4144, %v4080
    %v4150 = vadd.f32 %v4126, 1e-05
    %v4151 = vadd.f32 %v4127, 1e-05
    %v4152 = vadd.f32 %v4128, 1e-05
    %v4153 = vadd.f32 %v4129, 1e-05
    %v4154 = vrsqrt.pop %v4150
    %v4155 = vmul.f32 %v4154, %v4150
    %v4156 = vmul.f32 %v4155, %v4154
    %v4157 = vmul.f32 0.5, %v4156
    %v4158 = vsub.f32 1.5, %v4157
    %v4159 = vmul.f32 %v4154, %v4158
    %vm4160 = vweird.f32 %v4150
    %vm4161 = vweird.f32 %v4154
    %vm4162 = vmor %vm4160, %vm4161
    %v4163 = vsel %vm4162, %v4154, %v4159
    %v4164 = vrsqrt.pop %v4151
    %v4165 = vmul.f32 %v4164, %v4151
    %v4166 = vmul.f32 %v4165, %v4164
    %v4167 = vmul.f32 0.5, %v4166
    %v4168 = vsub.f32 1.5, %v4167
    %v4169 = vmul.f32 %v4164, %v4168
    %vm4170 = vweird.f32 %v4151
    %vm4171 = vweird.f32 %v4164
    %vm4172 = vmor %vm4170, %vm4171
    %v4173 = vsel %vm4172, %v4164, %v4169
    %v4174 = vrsqrt.pop %v4152
    %v4175 = vmul.f32 %v4174, %v4152
    %v4176 = vmul.f32 %v4175, %v4174
    %v4177 = vmul.f32 0.5, %v4176
    %v4178 = vsub.f32 1.5, %v4177
    %v4179 = vmul.f32 %v4174, %v4178
    %vm4180 = vweird.f32 %v4152
    %vm4181 = vweird.f32 %v4174
    %vm4182 = vmor %vm4180, %vm4181
    %v4183 = vsel %vm4182, %v4174, %v4179
    %v4184 = vrsqrt.pop %v4153
    %v4185 = vmul.f32 %v4184, %v4153
    %v4186 = vmul.f32 %v4185, %v4184
    %v4187 = vmul.f32 0.5, %v4186
    %v4188 = vsub.f32 1.5, %v4187
    %v4189 = vmul.f32 %v4184, %v4188
    %vm4190 = vweird.f32 %v4153
    %vm4191 = vweird.f32 %v4184
    %vm4192 = vmor %vm4190, %vm4191
    %v4193 = vsel %vm4192, %v4184, %v4189
    %4195 = vset.pattern.permute.xlu0 0
    %4196 = vperm.xlu0 %4195, %v4163
    %v4197 = vpop.permute.xlu0 %4196
    %4200 = vset.pattern.permute.xlu0 0
    %4201 = vperm.xlu0 %4200, %v4173
    %v4202 = vpop.permute.xlu0 %4201
    %4205 = vset.pattern.permute.xlu0 0
    %4206 = vperm.xlu0 %4205, %v4183
    %v4207 = vpop.permute.xlu0 %4206
    %4210 = vset.pattern.permute.xlu0 0
    %4211 = vperm.xlu0 %4210, %v4193
    %v4212 = vpop.permute.xlu0 %4211
    %v4214 = vmul.f32 %v4146, %v4197
    %v4215 = vmul.f32 %v4147, %v4202
    %v4216 = vmul.f32 %v4148, %v4207
    %v4217 = vmul.f32 %v4149, %v4212
    %4218 = vset.pattern.permute.xlu0 2
    %4219 = vperm.xlu0 %4218, %v3579
    %v4220 = vpop.permute.xlu0 %4219
    %4222 = vset.pattern.permute.xlu0 2
    %4223 = vperm.xlu0 %4222, %v3580
    %v4224 = vpop.permute.xlu0 %4223
    %4226 = vset.pattern.permute.xlu0 2
    %4227 = vperm.xlu0 %4226, %v3581
    %v4228 = vpop.permute.xlu0 %4227
    %4230 = vset.pattern.permute.xlu0 2
    %4231 = vperm.xlu0 %4230, %v3582
    %v4232 = vpop.permute.xlu0 %4231
    %v4234 = vadd.f32 %v4214, %v4220
    %v4235 = vadd.f32 %v4215, %v4224
    %v4236 = vadd.f32 %v4216, %v4228
    %v4237 = vadd.f32 %v4217, %v4232
    %v4238 = vmax.f32 %v4234, 0.0
    %v4239 = vmax.f32 %v4235, 0.0
    %v4240 = vmax.f32 %v4236, 0.0
    %v4241 = vmax.f32 %v4237, 0.0
    %v4242 = vld [vmem:[#allocation7] sm:$0xff]
    %v4243 = vld [vmem:[#allocation7 + $0x8] sm:$0xff]
    %v4244 = vld [vmem:[#allocation7 + $0x10] sm:$0xff]
    %v4245 = vld [vmem:[#allocation7 + $0x18] sm:$0xf]
    %v4246 = vld [vmem:[%s14] sm:$0xff]
    %v4247 = vld [vmem:[%s14 + $0x8] sm:$0xff]
    %v4248 = vld [vmem:[%s14 + $0x10] sm:$0xff]
    %v4249 = vld [vmem:[%s14 + $0x18] sm:$0xff]
    %v4250 = vld [vmem:[%s14 + $0x20] sm:$0xff]
    %v4251 = vld [vmem:[%s14 + $0x28] sm:$0xff]
    %v4252 = vld [vmem:[%s14 + $0x30] sm:$0xff]
    %v4253 = vld [vmem:[%s14 + $0x38] sm:$0xff]
    %v4254 = vld [vmem:[%s14 + $0x40] sm:$0xff]
    %v4255 = vld [vmem:[%s14 + $0x48] sm:$0xff]
    %v4256 = vld [vmem:[%s14 + $0x50] sm:$0xff]
    %v4257 = vld [vmem:[%s14 + $0x58] sm:$0xff]
    %v4258 = vld [vmem:[%s14 + $0x60] sm:$0xff]
    %v4259 = vld [vmem:[%s14 + $0x68] sm:$0xff]
    %v4260 = vld [vmem:[%s14 + $0x70] sm:$0xff]
    %v4261 = vld [vmem:[%s14 + $0x78] sm:$0xff]
    %v4262 = vld [vmem:[%s14 + $0x80] sm:$0xff]
    %v4263 = vld [vmem:[%s14 + $0x88] sm:$0xff]
    %v4264 = vld [vmem:[%s14 + $0x90] sm:$0xff]
    %v4265 = vld [vmem:[%s14 + $0x98] sm:$0xff]
    %v4266 = vld [vmem:[%s14 + $0xa0] sm:$0xff]
    %v4267 = vld [vmem:[%s14 + $0xa8] sm:$0xff]
    %v4268 = vld [vmem:[%s14 + $0xb0] sm:$0xff]
    %v4269 = vld [vmem:[%s14 + $0xb8] sm:$0xff]
    %v4270 = vld [vmem:[%s14 + $0xc0] sm:$0xff]
    %v4271 = vld [vmem:[%s14 + $0xc8] sm:$0xff]
    %v4272 = vld [vmem:[%s14 + $0xd0] sm:$0xff]
    %v4273 = vld [vmem:[%s14 + $0xd8] sm:$0xff]
    %v4274 = vld [vmem:[%s15] sm:$0xff]
    %v4275 = vld [vmem:[%s15 + $0x8] sm:$0xff]
    %v4276 = vld [vmem:[%s15 + $0x10] sm:$0xff]
    %v4277 = vld [vmem:[%s15 + $0x18] sm:$0xff]
    %v4278 = vld [vmem:[%s16] sm:$0xff]
    %v4279 = vld [vmem:[%s16 + $0x8] sm:$0xff]
    %v4280 = vld [vmem:[%s16 + $0x10] sm:$0xff]
    %v4281 = vld [vmem:[%s16 + $0x18] sm:$0xff]
    %4286 = vrot.lane.b32.xlu0 %v4238, 127
    %v4287 = vpop.permute.xlu0 %4286
    %4288 = vrot.lane.b32.xlu0 %v4239, 127
    %v4289 = vpop.permute.xlu0 %4288
    %4290 = vrot.lane.b32.xlu0 %v4240, 127
    %v4291 = vpop.permute.xlu0 %4290
    %4292 = vrot.lane.b32.xlu0 %v4241, 127
    %v4293 = vpop.permute.xlu0 %4292
    %v4299 = vsel %vm4011, %v4250, 0
    %v4302 = vsel %vm4011, %v4251, 0
    %v4305 = vsel %vm4011, %v4252, 0
    %v4308 = vsel %vm4011, %v4253, 0
    %4310 = vmatpush.msra.mxu0 0.0
    %4311 = vmatpush.msra.mxu0 0.0
    %4312 = vmatpush.msra.mxu0 0.0
    %4313 = vmatpush.msra.mxu0 0.0
    %4314 = vmatpush.msra.mxu0 0.0
    %4315 = vmatpush.msra.mxu0 0.0
    %4316 = vmatpush.msra.mxu0 0.0
    %4317 = vmatpush.msra.mxu0 0.0
    %4318 = vmatpush.msra.mxu0 0.0
    %4319 = vmatpush.msra.mxu0 0.0
    %4320 = vmatpush.msra.mxu0 0.0
    %4321 = vmatpush.msra.mxu0 0.0
    %4322 = vmatpush.msra.mxu0 %v4293
    %4323 = vmatpush.msra.mxu0 %v4291
    %4324 = vmatpush.msra.mxu0 %v4289
    %4325 = vmatpush.msra.mxu0 %v4287
    %4326 = vmatmul.f32.gmra.mxu0 %v4299
    %v4327 = vpop.f32.mrf.mxu0
    %v4328 = vadd.f32 0.0, %v4327
    %4329 = vmatmul.f32.gmra.mxu0 %v4302
    %v4330 = vpop.f32.mrf.mxu0
    %v4331 = vadd.f32 0.0, %v4330
    %4332 = vmatmul.f32.gmra.mxu0 %v4305
    %v4333 = vpop.f32.mrf.mxu0
    %v4334 = vadd.f32 0.0, %v4333
    %4335 = vmatmul.f32.gmra.mxu0 %v4308
    %v4336 = vpop.f32.mrf.mxu0
    %v4337 = vadd.f32 0.0, %v4336
    %4338 = vdwg.mxu0
    %v4340 = vsel %vm4011, %v4246, 0
    %v4343 = vsel %vm4011, %v4247, 0
    %v4346 = vsel %vm4011, %v4248, 0
    %v4349 = vsel %vm4011, %v4249, 0
    %4351 = vmatpush.msra.mxu0 0.0
    %4352 = vmatpush.msra.mxu0 0.0
    %4353 = vmatpush.msra.mxu0 0.0
    %4354 = vmatpush.msra.mxu0 0.0
    %4355 = vmatpush.msra.mxu0 0.0
    %4356 = vmatpush.msra.mxu0 0.0
    %4357 = vmatpush.msra.mxu0 0.0
    %4358 = vmatpush.msra.mxu0 0.0
    %4359 = vmatpush.msra.mxu0 0.0
    %4360 = vmatpush.msra.mxu0 0.0
    %4361 = vmatpush.msra.mxu0 0.0
    %4362 = vmatpush.msra.mxu0 0.0
    %4363 = vmatpush.msra.mxu0 %v4241
    %4364 = vmatpush.msra.mxu0 %v4240
    %4365 = vmatpush.msra.mxu0 %v4239
    %4366 = vmatpush.msra.mxu0 %v4238
    %4367 = vmatmul.f32.gmra.mxu0 %v4340
    %v4368 = vpop.f32.mrf.mxu0
    %v4369 = vadd.f32 %v4328, %v4368
    %4370 = vmatmul.f32.gmra.mxu0 %v4343
    %v4371 = vpop.f32.mrf.mxu0
    %v4372 = vadd.f32 %v4331, %v4371
    %4373 = vmatmul.f32.gmra.mxu0 %v4346
    %v4374 = vpop.f32.mrf.mxu0
    %v4375 = vadd.f32 %v4334, %v4374
    %4376 = vmatmul.f32.gmra.mxu0 %v4349
    %v4377 = vpop.f32.mrf.mxu0
    %v4378 = vadd.f32 %v4337, %v4377
    %4379 = vdwg.mxu0
    %4380 = vrot.lane.b32.xlu0 %v4238, 126
    %v4381 = vpop.permute.xlu0 %4380
    %4382 = vrot.lane.b32.xlu0 %v4239, 126
    %v4383 = vpop.permute.xlu0 %4382
    %4384 = vrot.lane.b32.xlu0 %v4240, 126
    %v4385 = vpop.permute.xlu0 %4384
    %4386 = vrot.lane.b32.xlu0 %v4241, 126
    %v4387 = vpop.permute.xlu0 %4386
    %v4393 = vsel %vm4011, %v4254, 0
    %v4396 = vsel %vm4011, %v4255, 0
    %v4399 = vsel %vm4011, %v4256, 0
    %v4402 = vsel %vm4011, %v4257, 0
    %4404 = vmatpush.msra.mxu0 0.0
    %4405 = vmatpush.msra.mxu0 0.0
    %4406 = vmatpush.msra.mxu0 0.0
    %4407 = vmatpush.msra.mxu0 0.0
    %4408 = vmatpush.msra.mxu0 0.0
    %4409 = vmatpush.msra.mxu0 0.0
    %4410 = vmatpush.msra.mxu0 0.0
    %4411 = vmatpush.msra.mxu0 0.0
    %4412 = vmatpush.msra.mxu0 0.0
    %4413 = vmatpush.msra.mxu0 0.0
    %4414 = vmatpush.msra.mxu0 0.0
    %4415 = vmatpush.msra.mxu0 0.0
    %4416 = vmatpush.msra.mxu0 %v4387
    %4417 = vmatpush.msra.mxu0 %v4385
    %4418 = vmatpush.msra.mxu0 %v4383
    %4419 = vmatpush.msra.mxu0 %v4381
    %4420 = vmatmul.f32.gmra.mxu0 %v4393
    %v4421 = vpop.f32.mrf.mxu0
    %v4422 = vadd.f32 0.0, %v4421
    %4423 = vmatmul.f32.gmra.mxu0 %v4396
    %v4424 = vpop.f32.mrf.mxu0
    %v4425 = vadd.f32 0.0, %v4424
    %4426 = vmatmul.f32.gmra.mxu0 %v4399
    %v4427 = vpop.f32.mrf.mxu0
    %v4428 = vadd.f32 0.0, %v4427
    %4429 = vmatmul.f32.gmra.mxu0 %v4402
    %v4430 = vpop.f32.mrf.mxu0
    %v4431 = vadd.f32 0.0, %v4430
    %4432 = vdwg.mxu0
    %v4433 = vadd.f32 %v4369, %v4422
    %v4434 = vadd.f32 %v4372, %v4425
    %v4435 = vadd.f32 %v4375, %v4428
    %v4436 = vadd.f32 %v4378, %v4431
    %4437 = vrot.lane.b32.xlu0 %v4238, 125
    %v4438 = vpop.permute.xlu0 %4437
    %4439 = vrot.lane.b32.xlu0 %v4239, 125
    %v4440 = vpop.permute.xlu0 %4439
    %4441 = vrot.lane.b32.xlu0 %v4240, 125
    %v4442 = vpop.permute.xlu0 %4441
    %4443 = vrot.lane.b32.xlu0 %v4241, 125
    %v4444 = vpop.permute.xlu0 %4443
    %v4450 = vsel %vm4011, %v4258, 0
    %v4453 = vsel %vm4011, %v4259, 0
    %v4456 = vsel %vm4011, %v4260, 0
    %v4459 = vsel %vm4011, %v4261, 0
    %4461 = vmatpush.msra.mxu0 0.0
    %4462 = vmatpush.msra.mxu0 0.0
    %4463 = vmatpush.msra.mxu0 0.0
    %4464 = vmatpush.msra.mxu0 0.0
    %4465 = vmatpush.msra.mxu0 0.0
    %4466 = vmatpush.msra.mxu0 0.0
    %4467 = vmatpush.msra.mxu0 0.0
    %4468 = vmatpush.msra.mxu0 0.0
    %4469 = vmatpush.msra.mxu0 0.0
    %4470 = vmatpush.msra.mxu0 0.0
    %4471 = vmatpush.msra.mxu0 0.0
    %4472 = vmatpush.msra.mxu0 0.0
    %4473 = vmatpush.msra.mxu0 %v4444
    %4474 = vmatpush.msra.mxu0 %v4442
    %4475 = vmatpush.msra.mxu0 %v4440
    %4476 = vmatpush.msra.mxu0 %v4438
    %4477 = vmatmul.f32.gmra.mxu0 %v4450
    %v4478 = vpop.f32.mrf.mxu0
    %v4479 = vadd.f32 0.0, %v4478
    %4480 = vmatmul.f32.gmra.mxu0 %v4453
    %v4481 = vpop.f32.mrf.mxu0
    %v4482 = vadd.f32 0.0, %v4481
    %4483 = vmatmul.f32.gmra.mxu0 %v4456
    %v4484 = vpop.f32.mrf.mxu0
    %v4485 = vadd.f32 0.0, %v4484
    %4486 = vmatmul.f32.gmra.mxu0 %v4459
    %v4487 = vpop.f32.mrf.mxu0
    %v4488 = vadd.f32 0.0, %v4487
    %4489 = vdwg.mxu0
    %v4490 = vadd.f32 %v4433, %v4479
    %v4491 = vadd.f32 %v4434, %v4482
    %v4492 = vadd.f32 %v4435, %v4485
    %v4493 = vadd.f32 %v4436, %v4488
    %4494 = vrot.lane.b32.xlu0 %v4238, 124
    %v4495 = vpop.permute.xlu0 %4494
    %4496 = vrot.lane.b32.xlu0 %v4239, 124
    %v4497 = vpop.permute.xlu0 %4496
    %4498 = vrot.lane.b32.xlu0 %v4240, 124
    %v4499 = vpop.permute.xlu0 %4498
    %4500 = vrot.lane.b32.xlu0 %v4241, 124
    %v4501 = vpop.permute.xlu0 %4500
    %v4507 = vsel %vm4011, %v4262, 0
    %v4510 = vsel %vm4011, %v4263, 0
    %v4513 = vsel %vm4011, %v4264, 0
    %v4516 = vsel %vm4011, %v4265, 0
    %4518 = vmatpush.msra.mxu0 0.0
    %4519 = vmatpush.msra.mxu0 0.0
    %4520 = vmatpush.msra.mxu0 0.0
    %4521 = vmatpush.msra.mxu0 0.0
    %4522 = vmatpush.msra.mxu0 0.0
    %4523 = vmatpush.msra.mxu0 0.0
    %4524 = vmatpush.msra.mxu0 0.0
    %4525 = vmatpush.msra.mxu0 0.0
    %4526 = vmatpush.msra.mxu0 0.0
    %4527 = vmatpush.msra.mxu0 0.0
    %4528 = vmatpush.msra.mxu0 0.0
    %4529 = vmatpush.msra.mxu0 0.0
    %4530 = vmatpush.msra.mxu0 %v4501
    %4531 = vmatpush.msra.mxu0 %v4499
    %4532 = vmatpush.msra.mxu0 %v4497
    %4533 = vmatpush.msra.mxu0 %v4495
    %4534 = vmatmul.f32.gmra.mxu0 %v4507
    %v4535 = vpop.f32.mrf.mxu0
    %v4536 = vadd.f32 0.0, %v4535
    %4537 = vmatmul.f32.gmra.mxu0 %v4510
    %v4538 = vpop.f32.mrf.mxu0
    %v4539 = vadd.f32 0.0, %v4538
    %4540 = vmatmul.f32.gmra.mxu0 %v4513
    %v4541 = vpop.f32.mrf.mxu0
    %v4542 = vadd.f32 0.0, %v4541
    %4543 = vmatmul.f32.gmra.mxu0 %v4516
    %v4544 = vpop.f32.mrf.mxu0
    %v4545 = vadd.f32 0.0, %v4544
    %4546 = vdwg.mxu0
    %v4547 = vadd.f32 %v4490, %v4536
    %v4548 = vadd.f32 %v4491, %v4539
    %v4549 = vadd.f32 %v4492, %v4542
    %v4550 = vadd.f32 %v4493, %v4545
    %4551 = vrot.lane.b32.xlu0 %v4238, 123
    %v4552 = vpop.permute.xlu0 %4551
    %4553 = vrot.lane.b32.xlu0 %v4239, 123
    %v4554 = vpop.permute.xlu0 %4553
    %4555 = vrot.lane.b32.xlu0 %v4240, 123
    %v4556 = vpop.permute.xlu0 %4555
    %4557 = vrot.lane.b32.xlu0 %v4241, 123
    %v4558 = vpop.permute.xlu0 %4557
    %v4564 = vsel %vm4011, %v4266, 0
    %v4567 = vsel %vm4011, %v4267, 0
    %v4570 = vsel %vm4011, %v4268, 0
    %v4573 = vsel %vm4011, %v4269, 0
    %4575 = vmatpush.msra.mxu0 0.0
    %4576 = vmatpush.msra.mxu0 0.0
    %4577 = vmatpush.msra.mxu0 0.0
    %4578 = vmatpush.msra.mxu0 0.0
    %4579 = vmatpush.msra.mxu0 0.0
    %4580 = vmatpush.msra.mxu0 0.0
    %4581 = vmatpush.msra.mxu0 0.0
    %4582 = vmatpush.msra.mxu0 0.0
    %4583 = vmatpush.msra.mxu0 0.0
    %4584 = vmatpush.msra.mxu0 0.0
    %4585 = vmatpush.msra.mxu0 0.0
    %4586 = vmatpush.msra.mxu0 0.0
    %4587 = vmatpush.msra.mxu0 %v4558
    %4588 = vmatpush.msra.mxu0 %v4556
    %4589 = vmatpush.msra.mxu0 %v4554
    %4590 = vmatpush.msra.mxu0 %v4552
    %4591 = vmatmul.f32.gmra.mxu0 %v4564
    %v4592 = vpop.f32.mrf.mxu0
    %v4593 = vadd.f32 0.0, %v4592
    %4594 = vmatmul.f32.gmra.mxu0 %v4567
    %v4595 = vpop.f32.mrf.mxu0
    %v4596 = vadd.f32 0.0, %v4595
    %4597 = vmatmul.f32.gmra.mxu0 %v4570
    %v4598 = vpop.f32.mrf.mxu0
    %v4599 = vadd.f32 0.0, %v4598
    %4600 = vmatmul.f32.gmra.mxu0 %v4573
    %v4601 = vpop.f32.mrf.mxu0
    %v4602 = vadd.f32 0.0, %v4601
    %4603 = vdwg.mxu0
    %v4604 = vadd.f32 %v4547, %v4593
    %v4605 = vadd.f32 %v4548, %v4596
    %v4606 = vadd.f32 %v4549, %v4599
    %v4607 = vadd.f32 %v4550, %v4602
    %4608 = vrot.lane.b32.xlu0 %v4238, 122
    %v4609 = vpop.permute.xlu0 %4608
    %4610 = vrot.lane.b32.xlu0 %v4239, 122
    %v4611 = vpop.permute.xlu0 %4610
    %4612 = vrot.lane.b32.xlu0 %v4240, 122
    %v4613 = vpop.permute.xlu0 %4612
    %4614 = vrot.lane.b32.xlu0 %v4241, 122
    %v4615 = vpop.permute.xlu0 %4614
    %v4621 = vsel %vm4011, %v4270, 0
    %v4624 = vsel %vm4011, %v4271, 0
    %v4627 = vsel %vm4011, %v4272, 0
    %v4630 = vsel %vm4011, %v4273, 0
    %4632 = vmatpush.msra.mxu0 0.0
    %4633 = vmatpush.msra.mxu0 0.0
    %4634 = vmatpush.msra.mxu0 0.0
    %4635 = vmatpush.msra.mxu0 0.0
    %4636 = vmatpush.msra.mxu0 0.0
    %4637 = vmatpush.msra.mxu0 0.0
    %4638 = vmatpush.msra.mxu0 0.0
    %4639 = vmatpush.msra.mxu0 0.0
    %4640 = vmatpush.msra.mxu0 0.0
    %4641 = vmatpush.msra.mxu0 0.0
    %4642 = vmatpush.msra.mxu0 0.0
    %4643 = vmatpush.msra.mxu0 0.0
    %4644 = vmatpush.msra.mxu0 %v4615
    %4645 = vmatpush.msra.mxu0 %v4613
    %4646 = vmatpush.msra.mxu0 %v4611
    %4647 = vmatpush.msra.mxu0 %v4609
    %4648 = vmatmul.f32.gmra.mxu0 %v4621
    %v4649 = vpop.f32.mrf.mxu0
    %v4650 = vadd.f32 0.0, %v4649
    %4651 = vmatmul.f32.gmra.mxu0 %v4624
    %v4652 = vpop.f32.mrf.mxu0
    %v4653 = vadd.f32 0.0, %v4652
    %4654 = vmatmul.f32.gmra.mxu0 %v4627
    %v4655 = vpop.f32.mrf.mxu0
    %v4656 = vadd.f32 0.0, %v4655
    %4657 = vmatmul.f32.gmra.mxu0 %v4630
    %v4658 = vpop.f32.mrf.mxu0
    %v4659 = vadd.f32 0.0, %v4658
    %4660 = vdwg.mxu0
    %v4661 = vadd.f32 %v4604, %v4650
    %v4662 = vadd.f32 %v4605, %v4653
    %v4663 = vadd.f32 %v4606, %v4656
    %v4664 = vadd.f32 %v4607, %v4659
    %4666 = vset.pattern.permute.xlu0 0
    %4667 = vperm.xlu0 %4666, %v4274
    %v4668 = vpop.permute.xlu0 %4667
    %4671 = vset.pattern.permute.xlu0 0
    %4672 = vperm.xlu0 %4671, %v4275
    %v4673 = vpop.permute.xlu0 %4672
    %4676 = vset.pattern.permute.xlu0 0
    %4677 = vperm.xlu0 %4676, %v4276
    %v4678 = vpop.permute.xlu0 %4677
    %4681 = vset.pattern.permute.xlu0 0
    %4682 = vperm.xlu0 %4681, %v4277
    %v4683 = vpop.permute.xlu0 %4682
    %vm4685 = vcmask 228352
    %v4687 = vsel %vm4685, %v4661, 0
    %v4690 = vsel %vm4685, %v4662, 0
    %v4693 = vsel %vm4685, %v4663, 0
    %v4696 = vsel %vm4685, %v4664, 0
    %vm4698 = vcmask 1043456
    %v4700 = vsel %vm4698, %v4245, 0
    %4702 = vmatpush.msra.mxu0 0.0
    %4703 = vmatpush.msra.mxu0 0.0
    %4704 = vmatpush.msra.mxu0 0.0
    %4705 = vmatpush.msra.mxu0 0.0
    %4706 = vmatpush.msra.mxu0 0.0
    %4707 = vmatpush.msra.mxu0 0.0
    %4708 = vmatpush.msra.mxu0 0.0
    %4709 = vmatpush.msra.mxu0 0.0
    %4710 = vmatpush.msra.mxu0 0.0
    %4711 = vmatpush.msra.mxu0 0.0
    %4712 = vmatpush.msra.mxu0 0.0
    %4713 = vmatpush.msra.mxu0 0.0
    %4714 = vmatpush.msra.mxu0 %v4700
    %4715 = vmatpush.msra.mxu0 %v4244
    %4716 = vmatpush.msra.mxu0 %v4243
    %4717 = vmatpush.msra.mxu0 %v4242
    %4718 = vmatmul.f32.gmra.mxu0 %v4687
    %v4719 = vpop.f32.mrf.mxu0
    %v4720 = vadd.f32 %v4668, %v4719
    %4721 = vmatmul.f32.gmra.mxu0 %v4690
    %v4722 = vpop.f32.mrf.mxu0
    %v4723 = vadd.f32 %v4673, %v4722
    %4724 = vmatmul.f32.gmra.mxu0 %v4693
    %v4725 = vpop.f32.mrf.mxu0
    %v4726 = vadd.f32 %v4678, %v4725
    %4727 = vmatmul.f32.gmra.mxu0 %v4696
    %v4728 = vpop.f32.mrf.mxu0
    %v4729 = vadd.f32 %v4683, %v4728
    %4730 = vdwg.mxu0
    %vm4731 = vcmask 80896
    %v4732 = vsel %vm4731, %v4720, 0.0
    %4733 = vadd.xlane.f32.xlu0 %v4732
    %v4734 = vpop.xlane.xlu0 %4733
    %v4735 = vsel %vm4731, %v4723, 0.0
    %4736 = vadd.xlane.f32.xlu0 %v4735
    %v4737 = vpop.xlane.xlu0 %4736
    %v4738 = vsel %vm4731, %v4726, 0.0
    %4739 = vadd.xlane.f32.xlu0 %v4738
    %v4740 = vpop.xlane.xlu0 %4739
    %v4741 = vsel %vm4731, %v4729, 0.0
    %4742 = vadd.xlane.f32.xlu0 %v4741
    %v4743 = vpop.xlane.xlu0 %4742
    %v4745 = vsel %vm4011, %v4278, 0
    %v4748 = vsel %vm4011, %v4279, 0
    %v4751 = vsel %vm4011, %v4280, 0
    %v4754 = vsel %vm4011, %v4281, 0
    %4756 = vmatpush.msra.mxu0 0.0
    %4757 = vmatpush.msra.mxu0 0.0
    %4758 = vmatpush.msra.mxu0 0.0
    %4759 = vmatpush.msra.mxu0 0.0
    %4760 = vmatpush.msra.mxu0 0.0
    %4761 = vmatpush.msra.mxu0 0.0
    %4762 = vmatpush.msra.mxu0 0.0
    %4763 = vmatpush.msra.mxu0 0.0
    %4764 = vmatpush.msra.mxu0 0.0
    %4765 = vmatpush.msra.mxu0 0.0
    %4766 = vmatpush.msra.mxu0 0.0
    %4767 = vmatpush.msra.mxu0 0.0
    %4768 = vmatpush.msra.mxu0 %v4743
    %4769 = vmatpush.msra.mxu0 %v4740
    %4770 = vmatpush.msra.mxu0 %v4737
    %4771 = vmatpush.msra.mxu0 %v4734
    %4772 = vmatmul.f32.gmra.mxu0 %v4745
    %v4773 = vpop.f32.mrf.mxu0
    %v4774 = vadd.f32 0.0, %v4773
    %4775 = vmatmul.f32.gmra.mxu0 %v4748
    %v4776 = vpop.f32.mrf.mxu0
    %v4777 = vadd.f32 0.0, %v4776
    %4778 = vmatmul.f32.gmra.mxu0 %v4751
    %v4779 = vpop.f32.mrf.mxu0
    %v4780 = vadd.f32 0.0, %v4779
    %4781 = vmatmul.f32.gmra.mxu0 %v4754
    %v4782 = vpop.f32.mrf.mxu0
    %v4783 = vadd.f32 0.0, %v4782
    %4784 = vdwg.mxu0
    %v4785 = vmul.f32 %v4774, 0.05
    %v4786 = vmul.f32 %v4777, 0.05
    %v4787 = vmul.f32 %v4780, 0.05
    %v4788 = vmul.f32 %v4783, 0.05
    %4790 = vset.pattern.permute.xlu0 0
    %4791 = vperm.xlu0 %4790, %v4785
    %v4792 = vpop.permute.xlu0 %4791
    %4795 = vset.pattern.permute.xlu0 0
    %4796 = vperm.xlu0 %4795, %v4786
    %v4797 = vpop.permute.xlu0 %4796
    %4800 = vset.pattern.permute.xlu0 0
    %4801 = vperm.xlu0 %4800, %v4787
    %v4802 = vpop.permute.xlu0 %4801
    %4805 = vset.pattern.permute.xlu0 0
    %4806 = vperm.xlu0 %4805, %v4788
    %v4807 = vpop.permute.xlu0 %4806
    %v4809 = vsub.f32 %v4720, %v4792
    %v4810 = vsub.f32 %v4723, %v4797
    %v4811 = vsub.f32 %v4726, %v4802
    %v4812 = vsub.f32 %v4729, %v4807
    %v4813 = vmul.f32 %v4809, %v4809
    %v4814 = vmul.f32 %v4810, %v4810
    %v4815 = vmul.f32 %v4811, %v4811
    %v4816 = vmul.f32 %v4812, %v4812
    %v4817 = vsel %vm4731, %v4813, 0.0
    %4818 = vadd.xlane.f32.xlu0 %v4817
    %v4819 = vpop.xlane.xlu0 %4818
    %v4820 = vsel %vm4731, %v4814, 0.0
    %4821 = vadd.xlane.f32.xlu0 %v4820
    %v4822 = vpop.xlane.xlu0 %4821
    %v4823 = vsel %vm4731, %v4815, 0.0
    %4824 = vadd.xlane.f32.xlu0 %v4823
    %v4825 = vpop.xlane.xlu0 %4824
    %v4826 = vsel %vm4731, %v4816, 0.0
    %4827 = vadd.xlane.f32.xlu0 %v4826
    %v4828 = vpop.xlane.xlu0 %4827
    %4829 = vmatpush.msra.mxu0 0.0
    %4830 = vmatpush.msra.mxu0 0.0
    %4831 = vmatpush.msra.mxu0 0.0
    %4832 = vmatpush.msra.mxu0 0.0
    %4833 = vmatpush.msra.mxu0 0.0
    %4834 = vmatpush.msra.mxu0 0.0
    %4835 = vmatpush.msra.mxu0 0.0
    %4836 = vmatpush.msra.mxu0 0.0
    %4837 = vmatpush.msra.mxu0 0.0
    %4838 = vmatpush.msra.mxu0 0.0
    %4839 = vmatpush.msra.mxu0 0.0
    %4840 = vmatpush.msra.mxu0 0.0
    %4841 = vmatpush.msra.mxu0 %v4828
    %4842 = vmatpush.msra.mxu0 %v4825
    %4843 = vmatpush.msra.mxu0 %v4822
    %4844 = vmatpush.msra.mxu0 %v4819
    %4845 = vmatmul.f32.gmra.mxu0 %v4745
    %v4846 = vpop.f32.mrf.mxu0
    %v4847 = vadd.f32 0.0, %v4846
    %4848 = vmatmul.f32.gmra.mxu0 %v4748
    %v4849 = vpop.f32.mrf.mxu0
    %v4850 = vadd.f32 0.0, %v4849
    %4851 = vmatmul.f32.gmra.mxu0 %v4751
    %v4852 = vpop.f32.mrf.mxu0
    %v4853 = vadd.f32 0.0, %v4852
    %4854 = vmatmul.f32.gmra.mxu0 %v4754
    %v4855 = vpop.f32.mrf.mxu0
    %v4856 = vadd.f32 0.0, %v4855
    %4857 = vdwg.mxu0
    %v4858 = vmul.f32 %v4847, 0.05
    %v4859 = vmul.f32 %v4850, 0.05
    %v4860 = vmul.f32 %v4853, 0.05
    %v4861 = vmul.f32 %v4856, 0.05
    %4862 = vset.pattern.permute.xlu0 1
    %4863 = vperm.xlu0 %4862, %v4274
    %v4864 = vpop.permute.xlu0 %4863
    %4866 = vset.pattern.permute.xlu0 1
    %4867 = vperm.xlu0 %4866, %v4275
    %v4868 = vpop.permute.xlu0 %4867
    %4870 = vset.pattern.permute.xlu0 1
    %4871 = vperm.xlu0 %4870, %v4276
    %v4872 = vpop.permute.xlu0 %4871
    %4874 = vset.pattern.permute.xlu0 1
    %4875 = vperm.xlu0 %4874, %v4277
    %v4876 = vpop.permute.xlu0 %4875
    %v4878 = vmul.f32 %v4864, %v4809
    %v4879 = vmul.f32 %v4868, %v4810
    %v4880 = vmul.f32 %v4872, %v4811
    %v4881 = vmul.f32 %v4876, %v4812
    %v4882 = vadd.f32 %v4858, 1e-05
    %v4883 = vadd.f32 %v4859, 1e-05
    %v4884 = vadd.f32 %v4860, 1e-05
    %v4885 = vadd.f32 %v4861, 1e-05
    %v4886 = vrsqrt.pop %v4882
    %v4887 = vmul.f32 %v4886, %v4882
    %v4888 = vmul.f32 %v4887, %v4886
    %v4889 = vmul.f32 0.5, %v4888
    %v4890 = vsub.f32 1.5, %v4889
    %v4891 = vmul.f32 %v4886, %v4890
    %vm4892 = vweird.f32 %v4882
    %vm4893 = vweird.f32 %v4886
    %vm4894 = vmor %vm4892, %vm4893
    %v4895 = vsel %vm4894, %v4886, %v4891
    %v4896 = vrsqrt.pop %v4883
    %v4897 = vmul.f32 %v4896, %v4883
    %v4898 = vmul.f32 %v4897, %v4896
    %v4899 = vmul.f32 0.5, %v4898
    %v4900 = vsub.f32 1.5, %v4899
    %v4901 = vmul.f32 %v4896, %v4900
    %vm4902 = vweird.f32 %v4883
    %vm4903 = vweird.f32 %v4896
    %vm4904 = vmor %vm4902, %vm4903
    %v4905 = vsel %vm4904, %v4896, %v4901
    %v4906 = vrsqrt.pop %v4884
    %v4907 = vmul.f32 %v4906, %v4884
    %v4908 = vmul.f32 %v4907, %v4906
    %v4909 = vmul.f32 0.5, %v4908
    %v4910 = vsub.f32 1.5, %v4909
    %v4911 = vmul.f32 %v4906, %v4910
    %vm4912 = vweird.f32 %v4884
    %vm4913 = vweird.f32 %v4906
    %vm4914 = vmor %vm4912, %vm4913
    %v4915 = vsel %vm4914, %v4906, %v4911
    %v4916 = vrsqrt.pop %v4885
    %v4917 = vmul.f32 %v4916, %v4885
    %v4918 = vmul.f32 %v4917, %v4916
    %v4919 = vmul.f32 0.5, %v4918
    %v4920 = vsub.f32 1.5, %v4919
    %v4921 = vmul.f32 %v4916, %v4920
    %vm4922 = vweird.f32 %v4885
    %vm4923 = vweird.f32 %v4916
    %vm4924 = vmor %vm4922, %vm4923
    %v4925 = vsel %vm4924, %v4916, %v4921
    %4927 = vset.pattern.permute.xlu0 0
    %4928 = vperm.xlu0 %4927, %v4895
    %v4929 = vpop.permute.xlu0 %4928
    %4932 = vset.pattern.permute.xlu0 0
    %4933 = vperm.xlu0 %4932, %v4905
    %v4934 = vpop.permute.xlu0 %4933
    %4937 = vset.pattern.permute.xlu0 0
    %4938 = vperm.xlu0 %4937, %v4915
    %v4939 = vpop.permute.xlu0 %4938
    %4942 = vset.pattern.permute.xlu0 0
    %4943 = vperm.xlu0 %4942, %v4925
    %v4944 = vpop.permute.xlu0 %4943
    %v4946 = vmul.f32 %v4878, %v4929
    %v4947 = vmul.f32 %v4879, %v4934
    %v4948 = vmul.f32 %v4880, %v4939
    %v4949 = vmul.f32 %v4881, %v4944
    %4950 = vset.pattern.permute.xlu0 2
    %4951 = vperm.xlu0 %4950, %v4274
    %v4952 = vpop.permute.xlu0 %4951
    %4954 = vset.pattern.permute.xlu0 2
    %4955 = vperm.xlu0 %4954, %v4275
    %v4956 = vpop.permute.xlu0 %4955
    %4958 = vset.pattern.permute.xlu0 2
    %4959 = vperm.xlu0 %4958, %v4276
    %v4960 = vpop.permute.xlu0 %4959
    %4962 = vset.pattern.permute.xlu0 2
    %4963 = vperm.xlu0 %4962, %v4277
    %v4964 = vpop.permute.xlu0 %4963
    %v4966 = vadd.f32 %v4946, %v4952
    %v4967 = vadd.f32 %v4947, %v4956
    %v4968 = vadd.f32 %v4948, %v4960
    %v4969 = vadd.f32 %v4949, %v4964
    %v4970 = vmax.f32 %v4966, 0.0
    %v4971 = vmax.f32 %v4967, 0.0
    %v4972 = vmax.f32 %v4968, 0.0
    %v4973 = vmax.f32 %v4969, 0.0
    %v4974 = vsel %vm4731, %v4970, 0.0
    %4975 = vadd.xlane.f32.xlu0 %v4974
    %v4976 = vpop.xlane.xlu0 %4975
    %v4977 = vsel %vm4731, %v4971, 0.0
    %4978 = vadd.xlane.f32.xlu0 %v4977
    %v4979 = vpop.xlane.xlu0 %4978
    %v4980 = vsel %vm4731, %v4972, 0.0
    %4981 = vadd.xlane.f32.xlu0 %v4980
    %v4982 = vpop.xlane.xlu0 %4981
    %v4983 = vsel %vm4731, %v4973, 0.0
    %4984 = vadd.xlane.f32.xlu0 %v4983
    %v4985 = vpop.xlane.xlu0 %4984
    %v4986 = vrcp.pop 10.0
    %v4987 = vmul.f32 10.0, %v4986
    %v4988 = vsub.f32 1.0, %v4987
    %v4989 = vmul.f32 %v4986, %v4988
    %v4990 = vadd.f32 %v4986, %v4989
    %vm4991 = vweird.f32 %v4986
    %v4992 = vsel %vm4991, %v4986, %v4990
    %v4993 = vmul.f32 %v4976, %v4992
    %v4994 = vmul.f32 %v4979, %v4992
    %v4995 = vmul.f32 %v4982, %v4992
    %v4996 = vmul.f32 %v4985, %v4992
    %vm4997 = vcmask 7168
    %4998 = vst.msk [vmem:[%s17] sm:$0xff] %vm4997, %v4993
    %4999 = vst.msk [vmem:[%s17 + $0x8] sm:$0xff] %vm4997, %v4994
    %5000 = vst.msk [vmem:[%s17 + $0x10] sm:$0xff] %vm4997, %v4995
    %5001 = vst.msk [vmem:[%s17 + $0x18] sm:$0xff] %vm4997, %v4996
    // Predicated region
    $region86: #{pcconvnet_forward.1} parent=1 // pred_check
      _
    $region87: #{pcconvnet_forward.1} parent=1 // pred_check_branch
      %5003 = sbr.rel (0) target = $region89
    $region88: #{pcconvnet_forward.1} parent=1 // pred_region
      _
    $region89: #{pcconvnet_forward.1} parent=1 // pred_fallthru
      _
    // Predicated region
    $region90: #{pcconvnet_forward.1} parent=1 // pred_check
      _
    $region91: #{pcconvnet_forward.1} parent=1 // pred_check_branch
      %5005 = sbr.rel (0) target = $region93
    $region92: #{pcconvnet_forward.1} parent=1 // pred_region
      _
    $region93: #{pcconvnet_forward.1} parent=1 // pred_fallthru
      _
    %5006 = vsyncpa [#allocation3], 1
    %5007 = vsyncpa [#allocation5], 1
    %5008 = vsyncpa [#allocation8], 1

</llo_original>
